<compile_context>
chip_gen: v5e
topology: v5e:2x2
jax: 0.10.0
libtpu: 0.0.40
codegen_flags: <defaults>
</compile_context>

<pallas_src>
import functools

import jax
import jax.numpy as jnp
from jax import lax
from jax.experimental import pallas as pl
from jax.experimental.pallas import tpu as pltpu


def _round_up(x, m):
    return ((x + m - 1) // m) * m


# ----------------------------------------------------------------------------
# Pallas kernel 1: out^T = leaky_relu(W @ X + b)
#   W: (Cout, Kp) bf16, X: (Kp, tm) bf16, b: (Cout, 1) f32, out: (Cout, tm) f32
#   Single K block -> direct write, no accumulator scratch.
# ----------------------------------------------------------------------------
def _gemm_t_bias_lrelu_kernel(w_ref, x_ref, b_ref, o_ref, *, negative_slope):
    r = jnp.dot(w_ref[...], x_ref[...], preferred_element_type=jnp.float32)
    r = r + b_ref[...]                                   # (Cout, tm) + (Cout, 1)
    r = jnp.where(r > 0, r, negative_slope * r)
    o_ref[...] = r.astype(o_ref.dtype)


def gemm_t_bias_lrelu(w_t, x_t, bias, *, negative_slope=0.01, max_tm=512):
    """leaky_relu(w_t @ x_t + bias[:, None]).

    w_t: (Cout, K)   x_t: (K, M)   bias: (Cout,)   ->   (Cout, M) float32
    The lane (last) axis of the output is the big M axis (lane-dense stores).
    """
    Cout, K = w_t.shape
    K2, M = x_t.shape
    assert K == K2

    # Pad the contraction K up to a multiple of 128 with zeros (exact result).
    Kp = _round_up(K, 128)
    if Kp != K:
        w_t = jnp.pad(w_t, ((0, 0), (0, Kp - K)))
        x_t = jnp.pad(x_t, ((0, Kp - K), (0, 0)))

    # Tile over M only; prefer wide lane tiles (512/256) to amortize grid-step
    # overhead and fill the MXU, fall back to 128 (padding M only if ragged).
    tm = 128
    for t in (512, 256):
        if t <= max_tm and M % t == 0:
            tm = t
            break
    Mp = _round_up(M, tm)
    if Mp != M:
        x_t = jnp.pad(x_t, ((0, 0), (0, Mp - M)))

    out = pl.pallas_call(
        functools.partial(_gemm_t_bias_lrelu_kernel,
                          negative_slope=negative_slope),
        out_shape=jax.ShapeDtypeStruct((Cout, Mp), jnp.float32),
        grid_spec=pltpu.PrefetchScalarGridSpec(
            num_scalar_prefetch=0,
            grid=(Mp // tm,),
            in_specs=[
                pl.BlockSpec((Cout, Kp), lambda i: (0, 0)),
                pl.BlockSpec((Kp, tm), lambda i: (0, i)),
                pl.BlockSpec((Cout, 1), lambda i: (0, 0)),
            ],
            out_specs=pl.BlockSpec((Cout, tm), lambda i: (0, i)),
        ),
        compiler_params=pltpu.CompilerParams(
            dimension_semantics=("parallel",)),
    )(w_t.astype(jnp.bfloat16), x_t.astype(jnp.bfloat16),
      bias.astype(jnp.float32).reshape(Cout, 1))
    return out[:, :M]


# ----------------------------------------------------------------------------
# Pallas kernel 2: fused PatchGAN heads (conv1 and conv2 in one launch)
# ----------------------------------------------------------------------------
def _heads_kernel(w1_ref, p1_ref, hf_ref, w2_ref, src_ref, cls_ref):
    # out_src^T = conv1_w_flat @ im2col(h)^T       (8, K1p) x (K1p, M1p)
    src_ref[...] = jnp.dot(w1_ref[...], p1_ref[...],
                           preferred_element_type=jnp.float32
                           ).astype(src_ref.dtype)
    # out_cls    = h_flat @ conv2_w_flat^T         (Bp, K2p) x (K2p, Cp)
    cls_ref[...] = jnp.dot(hf_ref[...], w2_ref[...],
                           preferred_element_type=jnp.float32
                           ).astype(cls_ref.dtype)


def heads_pallas(h, conv1_w, conv2_w):
    """h: (N, D, H, W, C) channels-last feature map (output of `main`).
    conv1_w: (1, C, 3, 3, 3) torch layout (stride 1, pad 1, no bias)
    conv2_w: (c_dim, C, D, H, W) torch layout (kernel == full spatial, no bias)
    Returns out_src (N, D, H, W, 1), out_cls (N, c_dim)."""
    N, D, H, W, C = h.shape
    c_dim = conv2_w.shape[0]

    # conv1: im2col (k=3, s=1, p=1); K order (Cin, kd, kh, kw) == torch reshape.
    p1_t, (_, Do, Ho, Wo) = _im2col_3d_t(h, 3, 1, 1)      # (C*27, N*D*H*W)
    K1, M1 = p1_t.shape
    K1p, M1p = _round_up(K1, 128), _round_up(M1, 128)
    p1_t = jnp.pad(p1_t, ((0, K1p - K1), (0, M1p - M1)))
    w1_t = jnp.pad(conv1_w.reshape(1, K1), ((0, 7), (0, K1p - K1)))  # Cout 1->8

    # conv2: kernel covers full spatial extent -> plain (B, C*D*H*W) GEMM.
    K2 = C * D * H * W
    Bp, K2p, Cp = _round_up(N, 8), _round_up(K2, 128), _round_up(c_dim, 128)
    hf = jnp.transpose(h, (0, 4, 1, 2, 3)).reshape(N, K2)
    hf = jnp.pad(hf, ((0, Bp - N), (0, K2p - K2)))
    w2_t = jnp.pad(conv2_w.reshape(c_dim, K2).T,
                   ((0, K2p - K2), (0, Cp - c_dim)))

    src_t, cls = pl.pallas_call(
        _heads_kernel,
        out_shape=(jax.ShapeDtypeStruct((8, M1p), jnp.float32),
                   jax.ShapeDtypeStruct((Bp, Cp), jnp.float32)),
        grid_spec=pltpu.PrefetchScalarGridSpec(
            num_scalar_prefetch=0,
            grid=(1,),
            in_specs=[
                pl.BlockSpec((8, K1p), lambda i: (0, 0)),
                pl.BlockSpec((K1p, M1p), lambda i: (0, 0)),
                pl.BlockSpec((Bp, K2p), lambda i: (0, 0)),
                pl.BlockSpec((K2p, Cp), lambda i: (0, 0)),
            ],
            out_specs=[
                pl.BlockSpec((8, M1p), lambda i: (0, 0)),
                pl.BlockSpec((Bp, Cp), lambda i: (0, 0)),
            ],
        ),
        compiler_params=pltpu.CompilerParams(
            dimension_semantics=("arbitrary",)),
    )(w1_t.astype(jnp.bfloat16), p1_t.astype(jnp.bfloat16),
      hf.astype(jnp.bfloat16), w2_t.astype(jnp.bfloat16))

    out_src = src_t[:1, :M1].reshape(1, N, Do, Ho, Wo)
    out_src = jnp.moveaxis(out_src, 0, -1)                # (N, Do, Ho, Wo, 1)
    out_cls = cls[:N, :c_dim]
    return out_src, out_cls


# ----------------------------------------------------------------------------
# im2col glue (plain-JAX slicing/reshape) and conv wrapper for the main layers
# ----------------------------------------------------------------------------
def _im2col_3d_t(x, k, stride, pad):
    """x: (N, D, H, W, C) -> patches^T (C*k^3, N*Do*Ho*Wo); contraction ordered
    (Cin, kd, kh, kw) so torch's weight.reshape(Cout, -1) matches directly."""
    N, D, H, W, C = x.shape
    if pad:
        x = jnp.pad(x, ((0, 0), (pad, pad), (pad, pad), (pad, pad), (0, 0)))
    Do = (D + 2 * pad - k) // stride + 1
    Ho = (H + 2 * pad - k) // stride + 1
    Wo = (W + 2 * pad - k) // stride + 1
    slices = []
    for kd in range(k):
        for kh in range(k):
            for kw in range(k):
                slices.append(x[:, kd:kd + stride * Do:stride,
                                  kh:kh + stride * Ho:stride,
                                  kw:kw + stride * Wo:stride, :])
    p = jnp.stack(slices, axis=0)                         # (k^3, N, Do, Ho, Wo, C)
    p = jnp.transpose(p, (5, 0, 1, 2, 3, 4))              # (C, k^3, N, Do, Ho, Wo)
    return p.reshape(C * k * k * k, N * Do * Ho * Wo), (N, Do, Ho, Wo)


def conv3d_lrelu_pallas(x, w, b, *, stride, pad, negative_slope=0.01):
    """Conv3d + LeakyReLU.  x: (N,D,H,W,Cin) NDHWC.  w: torch (Cout,Cin,k,k,k)."""
    Cout, Cin, k, _, _ = w.shape
    patches_t, (N, Do, Ho, Wo) = _im2col_3d_t(x, k, stride, pad)
    w_t = w.reshape(Cout, Cin * k * k * k)     # torch-native flattening order
    out_t = gemm_t_bias_lrelu(w_t, patches_t, b, negative_slope=negative_slope)
    out = out_t.reshape(Cout, N, Do, Ho, Wo)
    return jnp.moveaxis(out, 0, -1)            # (N, Do, Ho, Wo, Cout)


# ----------------------------------------------------------------------------
# Discriminator: parameter init + forward
# ----------------------------------------------------------------------------
def init_discriminator_params(key, image_size=16, conv_dim=8, c_dim=5,
                              repeat_num=2, in_channels=15):
    params = {"main": []}
    curr, out = in_channels, conv_dim
    keys = jax.random.split(key, repeat_num + 2)
    for i in range(repeat_num):
        kw, kb = jax.random.split(keys[i])
        w = 0.05 * jax.random.normal(kw, (out, curr, 4, 4, 4), jnp.float32)
        b = 0.05 * jax.random.normal(kb, (out,), jnp.float32)
        params["main"].append((w, b))
        curr, out = out, out * 2
    ks = image_size // (2 ** repeat_num)
    params["conv1_w"] = 0.05 * jax.random.normal(
        keys[-2], (1, curr, 3, 3, 3), jnp.float32)
    params["conv2_w"] = 0.05 * jax.random.normal(
        keys[-1], (c_dim, curr, ks, ks, ks), jnp.float32)
    return params


def discriminator_forward(params, x_ncdhw):
    """x_ncdhw: (B, 15, D, H, W).  Returns (out_src NCDHW, out_cls (B, c_dim))."""
    h = jnp.transpose(x_ncdhw, (0, 2, 3, 4, 1))           # NCDHW -> NDHWC
    for (w, b) in params["main"]:
        h = conv3d_lrelu_pallas(h, w, b, stride=2, pad=1)
    # TODO(synk): layer-2 + both heads could be fused into a single VMEM-resident
    # kernel with in-kernel im2col (pl.ds gathers); kept as JAX glue between calls.
    out_src, out_cls = heads_pallas(h, params["conv1_w"], params["conv2_w"])
    out_src = jnp.transpose(out_src, (0, 4, 1, 2, 3))     # NDHWC -> NCDHW
    return out_src, out_cls


# ----------------------------------------------------------------------------
# Pure-JAX reference (lax.conv) for a correctness sanity check
# ----------------------------------------------------------------------------
def _ref_forward(params, x_ncdhw, slope=0.01):
    dn = ("NCDHW", "OIDHW", "NCDHW")

    def conv(x, w, b, stride, pad):
        y = lax.conv_general_dilated(x, w, (stride,) * 3, [(pad, pad)] * 3,
                                     dimension_numbers=dn)
        if b is not None:
            y = y + b.reshape(1, -1, 1, 1, 1)
        return y

    h = x_ncdhw
    for (w, b) in params["main"]:
        h = conv(h, w, b, 2, 1)
        h = jnp.where(h > 0, h, slope * h)
    out_src = conv(h, params["conv1_w"], None, 1, 1)
    out_cls = conv(h, params["conv2_w"], None, 1, 0)
    return out_src, out_cls.reshape(out_cls.shape[0], out_cls.shape[1])


if __name__ == "__main__":
    # Small, module-consistent configuration:
    #   image_size=16, conv_dim=8, c_dim=5, repeat_num=2 -> conv2 kernel = 16/4 = 4
    image_size, conv_dim, c_dim, repeat_num = 16, 8, 5, 2
    batch = 2

    key = jax.random.PRNGKey(0)
    kp, kx = jax.random.split(key)
    params = init_discriminator_params(kp, image_size, conv_dim, c_dim, repeat_num)
    x = jax.random.normal(kx, (batch, 15, image_size, image_size, image_size),
                          jnp.float32)

    fwd = jax.jit(discriminator_forward)
    out_src, out_cls = fwd(params, x)
    out_src = jax.block_until_ready(out_src)
    out_cls = jax.block_until_ready(out_cls)

    assert out_src.shape == (batch, 1, image_size // 4, image_size // 4,
                             image_size // 4)
    assert out_cls.shape == (batch, c_dim)

    ref_src, ref_cls = _ref_forward(params, x)
    # bf16 MXU operands with f32 accumulation -> mixed abs/rel tolerance.
    assert bool(jnp.allclose(out_src, ref_src, atol=5e-2, rtol=5e-2)), \
        float(jnp.max(jnp.abs(out_src - ref_src)))
    assert bool(jnp.allclose(out_cls, ref_cls, atol=5e-2, rtol=5e-2)), \
        float(jnp.max(jnp.abs(out_cls - ref_cls)))

    print("KERNEL_OK")
</pallas_src>

<mosaic_0001>
module attributes {stable_mosaic.version = 11 : i64} {
  func.func @_gemm_t_bias_lrelu_kernel(%arg0: i32, %arg1: memref<8x1024xbf16, #tpu.memory_space<vmem>>, %arg2: memref<1024x512xbf16, #tpu.memory_space<vmem>>, %arg3: memref<8x1xf32, #tpu.memory_space<vmem>>, %arg4: memref<8x512xf32, #tpu.memory_space<vmem>>) attributes {dimension_semantics = [#tpu.dimension_semantics<parallel>], iteration_bounds = array<i64: 2>, scalar_prefetch = 0 : i64, scratch_operands = 0 : i64, tpu.core_type = #tpu.core_type<tc>, window_params = [{pipeline_mode = #tpu.pipeline_mode<synchronous>, transform_indices = @transform_0, window_bounds = array<i64: 8, 1024>}, {transform_indices = @transform_1, window_bounds = array<i64: 1024, 512>}, {pipeline_mode = #tpu.pipeline_mode<synchronous>, transform_indices = @transform_2, window_bounds = array<i64: 8, 1>}, {transform_indices = @transform_3, window_bounds = array<i64: 8, 512>}]} {
    %c0 = arith.constant 0 : index
    %c0_0 = arith.constant 0 : index
    %0 = vector.load %arg1[%c0, %c0_0] : memref<8x1024xbf16, #tpu.memory_space<vmem>>, vector<8x1024xbf16>
    %c0_1 = arith.constant 0 : index
    %c0_2 = arith.constant 0 : index
    %1 = vector.load %arg2[%c0_1, %c0_2] : memref<1024x512xbf16, #tpu.memory_space<vmem>>, vector<1024x512xbf16>
    %cst = arith.constant dense<0.000000e+00> : vector<8x512xf32>
    %2 = tpu.matmul %0, %1, %cst {dimension_numbers = #tpu.dot_dimension_numbers<[1], [0], [0], [1], [0, 0, 1, 1], [], []>} : vector<8x1024xbf16>, vector<1024x512xbf16>, vector<8x512xf32> -> vector<8x512xf32>
    %c0_3 = arith.constant 0 : index
    %c0_4 = arith.constant 0 : index
    %3 = vector.load %arg3[%c0_3, %c0_4] : memref<8x1xf32, #tpu.memory_space<vmem>>, vector<8x1xf32>
    %4 = vector.broadcast %3 : vector<8x1xf32> to vector<8x512xf32>
    %5 = arith.addf %2, %4 : vector<8x512xf32>
    %cst_5 = arith.constant 0.000000e+00 : f32
    %6 = vector.broadcast %cst_5 : f32 to vector<8x512xf32>
    %7 = arith.cmpf ogt, %5, %6 : vector<8x512xf32>
    %cst_6 = arith.constant 0.00999999977 : f32
    %8 = vector.broadcast %cst_6 : f32 to vector<8x512xf32>
    %9 = arith.mulf %8, %5 : vector<8x512xf32>
    %10 = arith.select %7, %5, %9 : vector<8x512xi1>, vector<8x512xf32>
    %c0_7 = arith.constant 0 : index
    %c0_8 = arith.constant 0 : index
    %11 = vector.load %arg4[%c0_7, %c0_8] : memref<8x512xf32, #tpu.memory_space<vmem>>, vector<8x512xf32>
    tpu.vector_store %arg4[%c0_7, %c0_8], %10 {strides = array<i32>} : memref<8x512xf32, #tpu.memory_space<vmem>>, vector<8x512xf32>,
    return
  }
  func.func @transform_0(%arg0: i32) -> (i32, i32) {
    %c0_i32 = arith.constant 0 : i32
    %c0_i32_0 = arith.constant 0 : i32
    %c0_i32_1 = arith.constant 0 : i32
    return %c0_i32, %c0_i32_0 : i32, i32
  }
  func.func @transform_1(%arg0: i32) -> (i32, i32) {
    %c0_i32 = arith.constant 0 : i32
    %c0_i32_0 = arith.constant 0 : i32
    return %c0_i32, %arg0 : i32, i32
  }
  func.func @transform_2(%arg0: i32) -> (i32, i32) {
    %c0_i32 = arith.constant 0 : i32
    %c0_i32_0 = arith.constant 0 : i32
    %c0_i32_1 = arith.constant 0 : i32
    return %c0_i32, %c0_i32_0 : i32, i32
  }
  func.func @transform_3(%arg0: i32) -> (i32, i32) {
    %c0_i32 = arith.constant 0 : i32
    %c0_i32_0 = arith.constant 0 : i32
    return %c0_i32, %arg0 : i32, i32
  }
}

module attributes {stable_mosaic.version = 11 : i64} {
  func.func @_gemm_t_bias_lrelu_kernel(%arg0: i32, %arg1: memref<16x512xbf16, #tpu.memory_space<vmem>>, %arg2: memref<512x128xbf16, #tpu.memory_space<vmem>>, %arg3: memref<16x1xf32, #tpu.memory_space<vmem>>, %arg4: memref<16x128xf32, #tpu.memory_space<vmem>>) attributes {dimension_semantics = [#tpu.dimension_semantics<parallel>], iteration_bounds = array<i64: 1>, scalar_prefetch = 0 : i64, scratch_operands = 0 : i64, tpu.core_type = #tpu.core_type<tc>, window_params = [{pipeline_mode = #tpu.pipeline_mode<synchronous>, transform_indices = @transform_0, window_bounds = array<i64: 16, 512>}, {transform_indices = @transform_1, window_bounds = array<i64: 512, 128>}, {pipeline_mode = #tpu.pipeline_mode<synchronous>, transform_indices = @transform_2, window_bounds = array<i64: 16, 1>}, {transform_indices = @transform_3, window_bounds = array<i64: 16, 128>}]} {
    %c0 = arith.constant 0 : index
    %c0_0 = arith.constant 0 : index
    %0 = vector.load %arg1[%c0, %c0_0] : memref<16x512xbf16, #tpu.memory_space<vmem>>, vector<16x512xbf16>
    %c0_1 = arith.constant 0 : index
    %c0_2 = arith.constant 0 : index
    %1 = vector.load %arg2[%c0_1, %c0_2] : memref<512x128xbf16, #tpu.memory_space<vmem>>, vector<512x128xbf16>
    %cst = arith.constant dense<0.000000e+00> : vector<16x128xf32>
    %2 = tpu.matmul %0, %1, %cst {dimension_numbers = #tpu.dot_dimension_numbers<[1], [0], [0], [1], [0, 0, 1, 1], [], []>} : vector<16x512xbf16>, vector<512x128xbf16>, vector<16x128xf32> -> vector<16x128xf32>
    %c0_3 = arith.constant 0 : index
    %c0_4 = arith.constant 0 : index
    %3 = vector.load %arg3[%c0_3, %c0_4] : memref<16x1xf32, #tpu.memory_space<vmem>>, vector<16x1xf32>
    %4 = vector.broadcast %3 : vector<16x1xf32> to vector<16x128xf32>
    %5 = arith.addf %2, %4 : vector<16x128xf32>
    %cst_5 = arith.constant 0.000000e+00 : f32
    %6 = vector.broadcast %cst_5 : f32 to vector<16x128xf32>
    %7 = arith.cmpf ogt, %5, %6 : vector<16x128xf32>
    %cst_6 = arith.constant 0.00999999977 : f32
    %8 = vector.broadcast %cst_6 : f32 to vector<16x128xf32>
    %9 = arith.mulf %8, %5 : vector<16x128xf32>
    %10 = arith.select %7, %5, %9 : vector<16x128xi1>, vector<16x128xf32>
    %c0_7 = arith.constant 0 : index
    %c0_8 = arith.constant 0 : index
    %11 = vector.load %arg4[%c0_7, %c0_8] : memref<16x128xf32, #tpu.memory_space<vmem>>, vector<16x128xf32>
    tpu.vector_store %arg4[%c0_7, %c0_8], %10 {strides = array<i32>} : memref<16x128xf32, #tpu.memory_space<vmem>>, vector<16x128xf32>,
    return
  }
  func.func @transform_0(%arg0: i32) -> (i32, i32) {
    %c0_i32 = arith.constant 0 : i32
    %c0_i32_0 = arith.constant 0 : i32
    %c0_i32_1 = arith.constant 0 : i32
    return %c0_i32, %c0_i32_0 : i32, i32
  }
  func.func @transform_1(%arg0: i32) -> (i32, i32) {
    %c0_i32 = arith.constant 0 : i32
    %c0_i32_0 = arith.constant 0 : i32
    return %c0_i32, %arg0 : i32, i32
  }
  func.func @transform_2(%arg0: i32) -> (i32, i32) {
    %c0_i32 = arith.constant 0 : i32
    %c0_i32_0 = arith.constant 0 : i32
    %c0_i32_1 = arith.constant 0 : i32
    return %c0_i32, %c0_i32_0 : i32, i32
  }
  func.func @transform_3(%arg0: i32) -> (i32, i32) {
    %c0_i32 = arith.constant 0 : i32
    %c0_i32_0 = arith.constant 0 : i32
    return %c0_i32, %arg0 : i32, i32
  }
}

module attributes {stable_mosaic.version = 11 : i64} {
  func.func @_heads_kernel(%arg0: i32, %arg1: memref<8x512xbf16, #tpu.memory_space<vmem>>, %arg2: memref<512x128xbf16, #tpu.memory_space<vmem>>, %arg3: memref<8x1024xbf16, #tpu.memory_space<vmem>>, %arg4: memref<1024x128xbf16, #tpu.memory_space<vmem>>, %arg5: memref<8x128xf32, #tpu.memory_space<vmem>>, %arg6: memref<8x128xf32, #tpu.memory_space<vmem>>) attributes {dimension_semantics = [#tpu.dimension_semantics<arbitrary>], iteration_bounds = array<i64: 1>, scalar_prefetch = 0 : i64, scratch_operands = 0 : i64, tpu.core_type = #tpu.core_type<tc>, window_params = [{pipeline_mode = #tpu.pipeline_mode<synchronous>, transform_indices = @transform_0, window_bounds = array<i64: 8, 512>}, {pipeline_mode = #tpu.pipeline_mode<synchronous>, transform_indices = @transform_1, window_bounds = array<i64: 512, 128>}, {pipeline_mode = #tpu.pipeline_mode<synchronous>, transform_indices = @transform_2, window_bounds = array<i64: 8, 1024>}, {pipeline_mode = #tpu.pipeline_mode<synchronous>, transform_indices = @transform_3, window_bounds = array<i64: 1024, 128>}, {pipeline_mode = #tpu.pipeline_mode<synchronous>, transform_indices = @transform_4, window_bounds = array<i64: 8, 128>}, {pipeline_mode = #tpu.pipeline_mode<synchronous>, transform_indices = @transform_5, window_bounds = array<i64: 8, 128>}]} {
    %c0 = arith.constant 0 : index
    %c0_0 = arith.constant 0 : index
    %0 = vector.load %arg1[%c0, %c0_0] : memref<8x512xbf16, #tpu.memory_space<vmem>>, vector<8x512xbf16>
    %c0_1 = arith.constant 0 : index
    %c0_2 = arith.constant 0 : index
    %1 = vector.load %arg2[%c0_1, %c0_2] : memref<512x128xbf16, #tpu.memory_space<vmem>>, vector<512x128xbf16>
    %cst = arith.constant dense<0.000000e+00> : vector<8x128xf32>
    %2 = tpu.matmul %0, %1, %cst {dimension_numbers = #tpu.dot_dimension_numbers<[1], [0], [0], [1], [0, 0, 1, 1], [], []>} : vector<8x512xbf16>, vector<512x128xbf16>, vector<8x128xf32> -> vector<8x128xf32>
    %c0_3 = arith.constant 0 : index
    %c0_4 = arith.constant 0 : index
    %3 = vector.load %arg5[%c0_3, %c0_4] : memref<8x128xf32, #tpu.memory_space<vmem>>, vector<8x128xf32>
    tpu.vector_store %arg5[%c0_3, %c0_4], %2 {strides = array<i32>} : memref<8x128xf32, #tpu.memory_space<vmem>>, vector<8x128xf32>,
    %c0_5 = arith.constant 0 : index
    %c0_6 = arith.constant 0 : index
    %4 = vector.load %arg3[%c0_5, %c0_6] : memref<8x1024xbf16, #tpu.memory_space<vmem>>, vector<8x1024xbf16>
    %c0_7 = arith.constant 0 : index
    %c0_8 = arith.constant 0 : index
    %5 = vector.load %arg4[%c0_7, %c0_8] : memref<1024x128xbf16, #tpu.memory_space<vmem>>, vector<1024x128xbf16>
    %cst_9 = arith.constant dense<0.000000e+00> : vector<8x128xf32>
    %6 = tpu.matmul %4, %5, %cst_9 {dimension_numbers = #tpu.dot_dimension_numbers<[1], [0], [0], [1], [0, 0, 1, 1], [], []>} : vector<8x1024xbf16>, vector<1024x128xbf16>, vector<8x128xf32> -> vector<8x128xf32>
    %c0_10 = arith.constant 0 : index
    %c0_11 = arith.constant 0 : index
    %7 = vector.load %arg6[%c0_10, %c0_11] : memref<8x128xf32, #tpu.memory_space<vmem>>, vector<8x128xf32>
    tpu.vector_store %arg6[%c0_10, %c0_11], %6 {strides = array<i32>} : memref<8x128xf32, #tpu.memory_space<vmem>>, vector<8x128xf32>,
    return
  }
  func.func @transform_0(%arg0: i32) -> (i32, i32) {
    %c0_i32 = arith.constant 0 : i32
    %c0_i32_0 = arith.constant 0 : i32
    %c0_i32_1 = arith.constant 0 : i32
    return %c0_i32, %c0_i32_0 : i32, i32
  }
  func.func @transform_1(%arg0: i32) -> (i32, i32) {
    %c0_i32 = arith.constant 0 : i32
    %c0_i32_0 = arith.constant 0 : i32
    %c0_i32_1 = arith.constant 0 : i32
    return %c0_i32, %c0_i32_0 : i32, i32
  }
  func.func @transform_2(%arg0: i32) -> (i32, i32) {
    %c0_i32 = arith.constant 0 : i32
    %c0_i32_0 = arith.constant 0 : i32
    %c0_i32_1 = arith.constant 0 : i32
    return %c0_i32, %c0_i32_0 : i32, i32
  }
  func.func @transform_3(%arg0: i32) -> (i32, i32) {
    %c0_i32 = arith.constant 0 : i32
    %c0_i32_0 = arith.constant 0 : i32
    %c0_i32_1 = arith.constant 0 : i32
    return %c0_i32, %c0_i32_0 : i32, i32
  }
  func.func @transform_4(%arg0: i32) -> (i32, i32) {
    %c0_i32 = arith.constant 0 : i32
    %c0_i32_0 = arith.constant 0 : i32
    %c0_i32_1 = arith.constant 0 : i32
    return %c0_i32, %c0_i32_0 : i32, i32
  }
  func.func @transform_5(%arg0: i32) -> (i32, i32) {
    %c0_i32 = arith.constant 0 : i32
    %c0_i32_0 = arith.constant 0 : i32
    %c0_i32_1 = arith.constant 0 : i32
    return %c0_i32, %c0_i32_0 : i32, i32
  }
}

</mosaic_0001>

<llo_original>
// kernel: discriminator_forward.3
$region0: #{discriminator_forward.3}
  #allocation0 [shape = 'u32[]', space=smem, size = 0x4, offset = 0x4, fixed_abs, tag = 'smem constant byte address 0x4 - core index']
  #allocation1 [shape = 'u32[72,128]{1,0:T(1,128)}', space=vmem, size = 0x9000, scoped, tag = 'internal scratch']
  %s0 = inlined_call_operand.vmem [shape: bf16[8,1024], index: 0, kind: input, shape index: {}]
  %s1 = inlined_call_operand.vmem [shape: bf16[1024,1024], index: 1, kind: input, shape index: {}]
  %s2 = inlined_call_operand.vmem [shape: f32[8,1], index: 2, kind: input, shape index: {}]
  %s3 = inlined_call_operand.vmem [shape: f32[8,1024], index: 3, kind: output, shape index: {}]
  %s4 = sld [smem:[#allocation0]]
  $region68: #{discriminator_forward.3} parent=0
    _
  %s6 = ssub.s32 1, %s4
  %s7 = scalar_select 0, %s6, %s4
  $region1: #{discriminator_forward.3} parent=0
    #allocation2 [shape = 'u8[2097152]{0}', space=vmem, size = 0x200000, scoped, tag = 'input window, operand 1']
    loop: start=0, step=1, limit=4
    $region2: #{discriminator_forward.3} parent=1 // loop_pre_header
      _
    $region3: #{discriminator_forward.3} parent=1 // loop_header
      %s9 = sphi 0, %s13
      %p10 = scmp.ge.s32.totalorder %s9, 4
      %s17 = sphi 0, %s17
      %s19 = sphi 0, %s17
      %s20 = sphi 0, %s19
      %s34 = sphi 0, %s20
      %s40 = sphi 0, %s42
      %s43 = sphi 0, %s40
      %s44 = sphi 0, %s43
      %s60 = sphi 0, %s44
      %s64 = sphi 0, %s64
      %s66 = sphi 0, %s64
      %s67 = sphi 0, %s66
      %s81 = sphi 0, %s67
      %s87 = sphi 0, %s89
      %s90 = sphi 0, %s87
      %s91 = sphi 0, %s90
      %s107 = sphi 0, %s91
    $region4: #{discriminator_forward.3} parent=1 // loop_header_branch
      %12 = sbr.rel (%p10) target = $region8
    $region5: #{discriminator_forward.3} parent=1 // loop_body
      %s14 = ssub.s32 %s9, 1
      %s15 = ssub.s32 %s9, 2
      %s16 = sadd.s32 %s9, 1
      %s18 = sadd.s32 %s17, 1
      %p21 = scmp.eq.s32.totalorder %s9, 1
      %p22 = scmp.ne.s32.totalorder %s17, %s19
      %p23 = scmp.eq.s32.totalorder %s9, 0
      %p24 = por %p22, %p23
      %p25 = scmp.ne.s32.totalorder %s17, %s19
      %p26 = scmp.eq.s32.totalorder %s14, 1
      %p27 = por %p25, %p26
      %p28 = scmp.ne.s32.totalorder %s19, %s20
      %p29 = scmp.eq.s32.totalorder %s14, 0
      %p30 = por %p28, %p29
      %p31 = scmp.ne.s32.totalorder %s19, %s20
      %p32 = scmp.eq.s32.totalorder %s15, 1
      %p33 = por %p31, %p32
      %p35 = scmp.ne.s32.totalorder %s20, %s34
      %p36 = scmp.eq.s32.totalorder %s15, 0
      %p37 = por %p35, %p36
      %s38 = ssub.s32 %s9, %s16
      %p39 = scmp.eq.s32.totalorder %s38, 0
      %s41 = sadd.s32 %s40, 1
      %s42 = scalar_select %p39, %s40, %s41
      %p45 = pneg %p39
      %p46 = scmp.eq.s32.totalorder %s9, 1
      %p47 = por %p45, %p46
      %p48 = scmp.ne.s32.totalorder %s40, %s43
      %p49 = scmp.eq.s32.totalorder %s9, 0
      %p50 = por %p48, %p49
      %p51 = scmp.ne.s32.totalorder %s40, %s43
      %p52 = scmp.eq.s32.totalorder %s14, 1
      %p53 = por %p51, %p52
      %p54 = scmp.ne.s32.totalorder %s43, %s44
      %p55 = scmp.eq.s32.totalorder %s14, 0
      %p56 = por %p54, %p55
      %p57 = scmp.ne.s32.totalorder %s43, %s44
      %p58 = scmp.eq.s32.totalorder %s15, 1
      %p59 = por %p57, %p58
      %p61 = scmp.ne.s32.totalorder %s44, %s60
      %p62 = scmp.eq.s32.totalorder %s15, 0
      %p63 = por %p61, %p62
      %s65 = sadd.s32 %s64, 1
      %p68 = scmp.eq.s32.totalorder %s9, 1
      %p69 = scmp.ne.s32.totalorder %s64, %s66
      %p70 = scmp.eq.s32.totalorder %s9, 0
      %p71 = por %p69, %p70
      %p72 = scmp.ne.s32.totalorder %s64, %s66
      %p73 = scmp.eq.s32.totalorder %s14, 1
      %p74 = por %p72, %p73
      %p75 = scmp.ne.s32.totalorder %s66, %s67
      %p76 = scmp.eq.s32.totalorder %s14, 0
      %p77 = por %p75, %p76
      %p78 = scmp.ne.s32.totalorder %s66, %s67
      %p79 = scmp.eq.s32.totalorder %s15, 1
      %p80 = por %p78, %p79
      %p82 = scmp.ne.s32.totalorder %s67, %s81
      %p83 = scmp.eq.s32.totalorder %s15, 0
      %p84 = por %p82, %p83
      %s85 = ssub.s32 %s9, %s16
      %p86 = scmp.eq.s32.totalorder %s85, 0
      %s88 = sadd.s32 %s87, 1
      %s89 = scalar_select %p86, %s87, %s88
      %p92 = pneg %p86
      %p93 = scmp.eq.s32.totalorder %s9, 1
      %p94 = por %p92, %p93
      %p95 = scmp.ne.s32.totalorder %s87, %s90
      %p96 = scmp.eq.s32.totalorder %s9, 0
      %p97 = por %p95, %p96
      %p98 = scmp.ne.s32.totalorder %s87, %s90
      %p99 = scmp.eq.s32.totalorder %s14, 1
      %p100 = por %p98, %p99
      %p101 = scmp.ne.s32.totalorder %s90, %s91
      %p102 = scmp.eq.s32.totalorder %s14, 0
      %p103 = por %p101, %p102
      %p104 = scmp.ne.s32.totalorder %s90, %s91
      %p105 = scmp.eq.s32.totalorder %s15, 1
      %p106 = por %p104, %p105
      %p108 = scmp.ne.s32.totalorder %s91, %s107
      %p109 = scmp.eq.s32.totalorder %s15, 0
      %p110 = por %p108, %p109
      %p111 = scmp.le.s32.totalorder 1, %s9
      %p112 = scmp.lt.s32.totalorder %s9, 3
      %p113 = pnand %p111, %p112
      %p114 = pneg %p113
      // Predicated region
      $region9: #{discriminator_forward.3} parent=5 // pred_check
        _
      $region10: #{discriminator_forward.3} parent=5 // pred_check_branch
        %116 = sbr.rel (%p113) target = $region12
      $region11: #{discriminator_forward.3} parent=5 // pred_region
        %s117 = ssub.s32 %s9, 1
        // Predicated region
        $region13: #{discriminator_forward.3} parent=11 // pred_check
          %p118 = pneg %p30
        $region14: #{discriminator_forward.3} parent=11 // pred_check_branch
          %120 = sbr.rel (%p118) target = $region16
        $region15: #{discriminator_forward.3} parent=11 // pred_region
          _
        $region16: #{discriminator_forward.3} parent=11 // pred_fallthru
          _
        // Predicated region
        $region17: #{discriminator_forward.3} parent=11 // pred_check
          %p121 = pneg %p77
        $region18: #{discriminator_forward.3} parent=11 // pred_check_branch
          %123 = sbr.rel (%p121) target = $region20
        $region19: #{discriminator_forward.3} parent=11 // pred_region
          _
        $region20: #{discriminator_forward.3} parent=11 // pred_fallthru
          _
      $region12: #{discriminator_forward.3} parent=5 // pred_fallthru
        _
      %p124 = scmp.lt.s32.totalorder %s9, 2
      // Predicated region
      $region21: #{discriminator_forward.3} parent=5 // pred_check
        %p125 = pneg %p124
      $region22: #{discriminator_forward.3} parent=5 // pred_check_branch
        %127 = sbr.rel (%p125) target = $region24
      $region23: #{discriminator_forward.3} parent=5 // pred_region
        // Predicated region
        $region25: #{discriminator_forward.3} parent=23 // pred_check
          %p128 = pneg %p50
        $region26: #{discriminator_forward.3} parent=23 // pred_check_branch
          %130 = sbr.rel (%p128) target = $region28
        $region27: #{discriminator_forward.3} parent=23 // pred_region
          %s131 = sand.u32 %s40, 1
          %s132 = sand.u32 %s40, 1
          %s133 = smul.addr %s132, 2048
          %s134 = scalar_lea.vmem [#allocation2], %s133
          %s135 = smul.u32 4, %s9
          %s136 = smul.addr %s135, 4
          %s137 = scalar_lea.vmem %s1, %s136
          // Predicated region
          $region29: #{discriminator_forward.3} parent=27 // pred_check
            _
          $region30: #{discriminator_forward.3} parent=27 // pred_check_branch
            %139 = sbr.rel (0) target = $region32
          $region31: #{discriminator_forward.3} parent=27 // pred_region
            // Predicated region
            $region33: #{discriminator_forward.3} parent=31 // pred_check
              _
            $region34: #{discriminator_forward.3} parent=31 // pred_check_branch
              %141 = sbr.rel (0) target = $region36
            $region35: #{discriminator_forward.3} parent=31 // pred_region
              loop: start=0, step=1, limit=1
              $region37: #{discriminator_forward.3} parent=35 // loop_pre_header
                _
              $region38: #{discriminator_forward.3} parent=35 // loop_header
                %s143 = sphi 0, %s147
                %p144 = scmp.ge.s32.totalorder %s143, 1
                %s148 = sphi %s137, %s137
                %s149 = sphi %s134, %s134
              $region39: #{discriminator_forward.3} parent=35 // loop_header_branch
                %146 = sbr.rel (%p144) target = $region43
              $region40: #{discriminator_forward.3} parent=35 // loop_body
                %v150 = vld [vmem:[%s148] sm:$0xff]
                %151 = vst [vmem:[%s149] sm:$0xff] %v150
                %v152 = vld [vmem:[%s148 + $0x8] sm:$0xff]
                %153 = vst [vmem:[%s149 + $0x8] sm:$0xff] %v152
                %v154 = vld [vmem:[%s148 + $0x20] sm:$0xff]
                %155 = vst [vmem:[%s149 + $0x10] sm:$0xff] %v154
                %v156 = vld [vmem:[%s148 + $0x28] sm:$0xff]
                %157 = vst [vmem:[%s149 + $0x18] sm:$0xff] %v156
                %v158 = vld [vmem:[%s148 + $0x40] sm:$0xff]
                %159 = vst [vmem:[%s149 + $0x20] sm:$0xff] %v158
                %v160 = vld [vmem:[%s148 + $0x48] sm:$0xff]
                %161 = vst [vmem:[%s149 + $0x28] sm:$0xff] %v160
                %v162 = vld [vmem:[%s148 + $0x60] sm:$0xff]
                %163 = vst [vmem:[%s149 + $0x30] sm:$0xff] %v162
                %v164 = vld [vmem:[%s148 + $0x68] sm:$0xff]
                %165 = vst [vmem:[%s149 + $0x38] sm:$0xff] %v164
                %v166 = vld [vmem:[%s148 + $0x80] sm:$0xff]
                %167 = vst [vmem:[%s149 + $0x40] sm:$0xff] %v166
                %v168 = vld [vmem:[%s148 + $0x88] sm:$0xff]
                %169 = vst [vmem:[%s149 + $0x48] sm:$0xff] %v168
                %v170 = vld [vmem:[%s148 + $0xa0] sm:$0xff]
                %171 = vst [vmem:[%s149 + $0x50] sm:$0xff] %v170
                %v172 = vld [vmem:[%s148 + $0xa8] sm:$0xff]
                %173 = vst [vmem:[%s149 + $0x58] sm:$0xff] %v172
                %v174 = vld [vmem:[%s148 + $0xc0] sm:$0xff]
                %175 = vst [vmem:[%s149 + $0x60] sm:$0xff] %v174
                %v176 = vld [vmem:[%s148 + $0xc8] sm:$0xff]
                %177 = vst [vmem:[%s149 + $0x68] sm:$0xff] %v176
                %v178 = vld [vmem:[%s148 + $0xe0] sm:$0xff]
                %179 = vst [vmem:[%s149 + $0x70] sm:$0xff] %v178
                %v180 = vld [vmem:[%s148 + $0xe8] sm:$0xff]
                %181 = vst [vmem:[%s149 + $0x78] sm:$0xff] %v180
                %v182 = vld [vmem:[%s148 + $0x100] sm:$0xff]
                %183 = vst [vmem:[%s149 + $0x80] sm:$0xff] %v182
                %v184 = vld [vmem:[%s148 + $0x108] sm:$0xff]
                %185 = vst [vmem:[%s149 + $0x88] sm:$0xff] %v184
                %v186 = vld [vmem:[%s148 + $0x120] sm:$0xff]
                %187 = vst [vmem:[%s149 + $0x90] sm:$0xff] %v186
                %v188 = vld [vmem:[%s148 + $0x128] sm:$0xff]
                %189 = vst [vmem:[%s149 + $0x98] sm:$0xff] %v188
                %v190 = vld [vmem:[%s148 + $0x140] sm:$0xff]
                %191 = vst [vmem:[%s149 + $0xa0] sm:$0xff] %v190
                %v192 = vld [vmem:[%s148 + $0x148] sm:$0xff]
                %193 = vst [vmem:[%s149 + $0xa8] sm:$0xff] %v192
                %v194 = vld [vmem:[%s148 + $0x160] sm:$0xff]
                %195 = vst [vmem:[%s149 + $0xb0] sm:$0xff] %v194
                %v196 = vld [vmem:[%s148 + $0x168] sm:$0xff]
                %197 = vst [vmem:[%s149 + $0xb8] sm:$0xff] %v196
                %v198 = vld [vmem:[%s148 + $0x180] sm:$0xff]
                %199 = vst [vmem:[%s149 + $0xc0] sm:$0xff] %v198
                %v200 = vld [vmem:[%s148 + $0x188] sm:$0xff]
                %201 = vst [vmem:[%s149 + $0xc8] sm:$0xff] %v200
                %v202 = vld [vmem:[%s148 + $0x1a0] sm:$0xff]
                %203 = vst [vmem:[%s149 + $0xd0] sm:$0xff] %v202
                %v204 = vld [vmem:[%s148 + $0x1a8] sm:$0xff]
                %205 = vst [vmem:[%s149 + $0xd8] sm:$0xff] %v204
                %v206 = vld [vmem:[%s148 + $0x1c0] sm:$0xff]
                %207 = vst [vmem:[%s149 + $0xe0] sm:$0xff] %v206
                %v208 = vld [vmem:[%s148 + $0x1c8] sm:$0xff]
                %209 = vst [vmem:[%s149 + $0xe8] sm:$0xff] %v208
                %v210 = vld [vmem:[%s148 + $0x1e0] sm:$0xff]
                %211 = vst [vmem:[%s149 + $0xf0] sm:$0xff] %v210
                %v212 = vld [vmem:[%s148 + $0x1e8] sm:$0xff]
                %213 = vst [vmem:[%s149 + $0xf8] sm:$0xff] %v212
                %v214 = vld [vmem:[%s148 + $0x200] sm:$0xff]
                %215 = vst [vmem:[%s149 + $0x100] sm:$0xff] %v214
                %v216 = vld [vmem:[%s148 + $0x208] sm:$0xff]
                %217 = vst [vmem:[%s149 + $0x108] sm:$0xff] %v216
                %v218 = vld [vmem:[%s148 + $0x220] sm:$0xff]
                %219 = vst [vmem:[%s149 + $0x110] sm:$0xff] %v218
                %v220 = vld [vmem:[%s148 + $0x228] sm:$0xff]
                %221 = vst [vmem:[%s149 + $0x118] sm:$0xff] %v220
                %v222 = vld [vmem:[%s148 + $0x240] sm:$0xff]
                %223 = vst [vmem:[%s149 + $0x120] sm:$0xff] %v222
                %v224 = vld [vmem:[%s148 + $0x248] sm:$0xff]
                %225 = vst [vmem:[%s149 + $0x128] sm:$0xff] %v224
                %v226 = vld [vmem:[%s148 + $0x260] sm:$0xff]
                %227 = vst [vmem:[%s149 + $0x130] sm:$0xff] %v226
                %v228 = vld [vmem:[%s148 + $0x268] sm:$0xff]
                %229 = vst [vmem:[%s149 + $0x138] sm:$0xff] %v228
                %v230 = vld [vmem:[%s148 + $0x280] sm:$0xff]
                %231 = vst [vmem:[%s149 + $0x140] sm:$0xff] %v230
                %v232 = vld [vmem:[%s148 + $0x288] sm:$0xff]
                %233 = vst [vmem:[%s149 + $0x148] sm:$0xff] %v232
                %v234 = vld [vmem:[%s148 + $0x2a0] sm:$0xff]
                %235 = vst [vmem:[%s149 + $0x150] sm:$0xff] %v234
                %v236 = vld [vmem:[%s148 + $0x2a8] sm:$0xff]
                %237 = vst [vmem:[%s149 + $0x158] sm:$0xff] %v236
                %v238 = vld [vmem:[%s148 + $0x2c0] sm:$0xff]
                %239 = vst [vmem:[%s149 + $0x160] sm:$0xff] %v238
                %v240 = vld [vmem:[%s148 + $0x2c8] sm:$0xff]
                %241 = vst [vmem:[%s149 + $0x168] sm:$0xff] %v240
                %v242 = vld [vmem:[%s148 + $0x2e0] sm:$0xff]
                %243 = vst [vmem:[%s149 + $0x170] sm:$0xff] %v242
                %v244 = vld [vmem:[%s148 + $0x2e8] sm:$0xff]
                %245 = vst [vmem:[%s149 + $0x178] sm:$0xff] %v244
                %v246 = vld [vmem:[%s148 + $0x300] sm:$0xff]
                %247 = vst [vmem:[%s149 + $0x180] sm:$0xff] %v246
                %v248 = vld [vmem:[%s148 + $0x308] sm:$0xff]
                %249 = vst [vmem:[%s149 + $0x188] sm:$0xff] %v248
                %v250 = vld [vmem:[%s148 + $0x320] sm:$0xff]
                %251 = vst [vmem:[%s149 + $0x190] sm:$0xff] %v250
                %v252 = vld [vmem:[%s148 + $0x328] sm:$0xff]
                %253 = vst [vmem:[%s149 + $0x198] sm:$0xff] %v252
                %v254 = vld [vmem:[%s148 + $0x340] sm:$0xff]
                %255 = vst [vmem:[%s149 + $0x1a0] sm:$0xff] %v254
                %v256 = vld [vmem:[%s148 + $0x348] sm:$0xff]
                %257 = vst [vmem:[%s149 + $0x1a8] sm:$0xff] %v256
                %v258 = vld [vmem:[%s148 + $0x360] sm:$0xff]
                %259 = vst [vmem:[%s149 + $0x1b0] sm:$0xff] %v258
                %v260 = vld [vmem:[%s148 + $0x368] sm:$0xff]
                %261 = vst [vmem:[%s149 + $0x1b8] sm:$0xff] %v260
                %v262 = vld [vmem:[%s148 + $0x380] sm:$0xff]
                %263 = vst [vmem:[%s149 + $0x1c0] sm:$0xff] %v262
                %v264 = vld [vmem:[%s148 + $0x388] sm:$0xff]
                %265 = vst [vmem:[%s149 + $0x1c8] sm:$0xff] %v264
                %v266 = vld [vmem:[%s148 + $0x3a0] sm:$0xff]
                %267 = vst [vmem:[%s149 + $0x1d0] sm:$0xff] %v266
                %v268 = vld [vmem:[%s148 + $0x3a8] sm:$0xff]
                %269 = vst [vmem:[%s149 + $0x1d8] sm:$0xff] %v268
                %v270 = vld [vmem:[%s148 + $0x3c0] sm:$0xff]
                %271 = vst [vmem:[%s149 + $0x1e0] sm:$0xff] %v270
                %v272 = vld [vmem:[%s148 + $0x3c8] sm:$0xff]
                %273 = vst [vmem:[%s149 + $0x1e8] sm:$0xff] %v272
                %v274 = vld [vmem:[%s148 + $0x3e0] sm:$0xff]
                %275 = vst [vmem:[%s149 + $0x1f0] sm:$0xff] %v274
                %v276 = vld [vmem:[%s148 + $0x3e8] sm:$0xff]
                %277 = vst [vmem:[%s149 + $0x1f8] sm:$0xff] %v276
                %v278 = vld [vmem:[%s148 + $0x400] sm:$0xff]
                %279 = vst [vmem:[%s149 + $0x200] sm:$0xff] %v278
                %v280 = vld [vmem:[%s148 + $0x408] sm:$0xff]
                %281 = vst [vmem:[%s149 + $0x208] sm:$0xff] %v280
                %v282 = vld [vmem:[%s148 + $0x420] sm:$0xff]
                %283 = vst [vmem:[%s149 + $0x210] sm:$0xff] %v282
                %v284 = vld [vmem:[%s148 + $0x428] sm:$0xff]
                %285 = vst [vmem:[%s149 + $0x218] sm:$0xff] %v284
                %v286 = vld [vmem:[%s148 + $0x440] sm:$0xff]
                %287 = vst [vmem:[%s149 + $0x220] sm:$0xff] %v286
                %v288 = vld [vmem:[%s148 + $0x448] sm:$0xff]
                %289 = vst [vmem:[%s149 + $0x228] sm:$0xff] %v288
                %v290 = vld [vmem:[%s148 + $0x460] sm:$0xff]
                %291 = vst [vmem:[%s149 + $0x230] sm:$0xff] %v290
                %v292 = vld [vmem:[%s148 + $0x468] sm:$0xff]
                %293 = vst [vmem:[%s149 + $0x238] sm:$0xff] %v292
                %v294 = vld [vmem:[%s148 + $0x480] sm:$0xff]
                %295 = vst [vmem:[%s149 + $0x240] sm:$0xff] %v294
                %v296 = vld [vmem:[%s148 + $0x488] sm:$0xff]
                %297 = vst [vmem:[%s149 + $0x248] sm:$0xff] %v296
                %v298 = vld [vmem:[%s148 + $0x4a0] sm:$0xff]
                %299 = vst [vmem:[%s149 + $0x250] sm:$0xff] %v298
                %v300 = vld [vmem:[%s148 + $0x4a8] sm:$0xff]
                %301 = vst [vmem:[%s149 + $0x258] sm:$0xff] %v300
                %v302 = vld [vmem:[%s148 + $0x4c0] sm:$0xff]
                %303 = vst [vmem:[%s149 + $0x260] sm:$0xff] %v302
                %v304 = vld [vmem:[%s148 + $0x4c8] sm:$0xff]
                %305 = vst [vmem:[%s149 + $0x268] sm:$0xff] %v304
                %v306 = vld [vmem:[%s148 + $0x4e0] sm:$0xff]
                %307 = vst [vmem:[%s149 + $0x270] sm:$0xff] %v306
                %v308 = vld [vmem:[%s148 + $0x4e8] sm:$0xff]
                %309 = vst [vmem:[%s149 + $0x278] sm:$0xff] %v308
                %v310 = vld [vmem:[%s148 + $0x500] sm:$0xff]
                %311 = vst [vmem:[%s149 + $0x280] sm:$0xff] %v310
                %v312 = vld [vmem:[%s148 + $0x508] sm:$0xff]
                %313 = vst [vmem:[%s149 + $0x288] sm:$0xff] %v312
                %v314 = vld [vmem:[%s148 + $0x520] sm:$0xff]
                %315 = vst [vmem:[%s149 + $0x290] sm:$0xff] %v314
                %v316 = vld [vmem:[%s148 + $0x528] sm:$0xff]
                %317 = vst [vmem:[%s149 + $0x298] sm:$0xff] %v316
                %v318 = vld [vmem:[%s148 + $0x540] sm:$0xff]
                %319 = vst [vmem:[%s149 + $0x2a0] sm:$0xff] %v318
                %v320 = vld [vmem:[%s148 + $0x548] sm:$0xff]
                %321 = vst [vmem:[%s149 + $0x2a8] sm:$0xff] %v320
                %v322 = vld [vmem:[%s148 + $0x560] sm:$0xff]
                %323 = vst [vmem:[%s149 + $0x2b0] sm:$0xff] %v322
                %v324 = vld [vmem:[%s148 + $0x568] sm:$0xff]
                %325 = vst [vmem:[%s149 + $0x2b8] sm:$0xff] %v324
                %v326 = vld [vmem:[%s148 + $0x580] sm:$0xff]
                %327 = vst [vmem:[%s149 + $0x2c0] sm:$0xff] %v326
                %v328 = vld [vmem:[%s148 + $0x588] sm:$0xff]
                %329 = vst [vmem:[%s149 + $0x2c8] sm:$0xff] %v328
                %v330 = vld [vmem:[%s148 + $0x5a0] sm:$0xff]
                %331 = vst [vmem:[%s149 + $0x2d0] sm:$0xff] %v330
                %v332 = vld [vmem:[%s148 + $0x5a8] sm:$0xff]
                %333 = vst [vmem:[%s149 + $0x2d8] sm:$0xff] %v332
                %v334 = vld [vmem:[%s148 + $0x5c0] sm:$0xff]
                %335 = vst [vmem:[%s149 + $0x2e0] sm:$0xff] %v334
                %v336 = vld [vmem:[%s148 + $0x5c8] sm:$0xff]
                %337 = vst [vmem:[%s149 + $0x2e8] sm:$0xff] %v336
                %v338 = vld [vmem:[%s148 + $0x5e0] sm:$0xff]
                %339 = vst [vmem:[%s149 + $0x2f0] sm:$0xff] %v338
                %v340 = vld [vmem:[%s148 + $0x5e8] sm:$0xff]
                %341 = vst [vmem:[%s149 + $0x2f8] sm:$0xff] %v340
                %v342 = vld [vmem:[%s148 + $0x600] sm:$0xff]
                %343 = vst [vmem:[%s149 + $0x300] sm:$0xff] %v342
                %v344 = vld [vmem:[%s148 + $0x608] sm:$0xff]
                %345 = vst [vmem:[%s149 + $0x308] sm:$0xff] %v344
                %v346 = vld [vmem:[%s148 + $0x620] sm:$0xff]
                %347 = vst [vmem:[%s149 + $0x310] sm:$0xff] %v346
                %v348 = vld [vmem:[%s148 + $0x628] sm:$0xff]
                %349 = vst [vmem:[%s149 + $0x318] sm:$0xff] %v348
                %v350 = vld [vmem:[%s148 + $0x640] sm:$0xff]
                %351 = vst [vmem:[%s149 + $0x320] sm:$0xff] %v350
                %v352 = vld [vmem:[%s148 + $0x648] sm:$0xff]
                %353 = vst [vmem:[%s149 + $0x328] sm:$0xff] %v352
                %v354 = vld [vmem:[%s148 + $0x660] sm:$0xff]
                %355 = vst [vmem:[%s149 + $0x330] sm:$0xff] %v354
                %v356 = vld [vmem:[%s148 + $0x668] sm:$0xff]
                %357 = vst [vmem:[%s149 + $0x338] sm:$0xff] %v356
                %v358 = vld [vmem:[%s148 + $0x680] sm:$0xff]
                %359 = vst [vmem:[%s149 + $0x340] sm:$0xff] %v358
                %v360 = vld [vmem:[%s148 + $0x688] sm:$0xff]
                %361 = vst [vmem:[%s149 + $0x348] sm:$0xff] %v360
                %v362 = vld [vmem:[%s148 + $0x6a0] sm:$0xff]
                %363 = vst [vmem:[%s149 + $0x350] sm:$0xff] %v362
                %v364 = vld [vmem:[%s148 + $0x6a8] sm:$0xff]
                %365 = vst [vmem:[%s149 + $0x358] sm:$0xff] %v364
                %v366 = vld [vmem:[%s148 + $0x6c0] sm:$0xff]
                %367 = vst [vmem:[%s149 + $0x360] sm:$0xff] %v366
                %v368 = vld [vmem:[%s148 + $0x6c8] sm:$0xff]
                %369 = vst [vmem:[%s149 + $0x368] sm:$0xff] %v368
                %v370 = vld [vmem:[%s148 + $0x6e0] sm:$0xff]
                %371 = vst [vmem:[%s149 + $0x370] sm:$0xff] %v370
                %v372 = vld [vmem:[%s148 + $0x6e8] sm:$0xff]
                %373 = vst [vmem:[%s149 + $0x378] sm:$0xff] %v372
                %v374 = vld [vmem:[%s148 + $0x700] sm:$0xff]
                %375 = vst [vmem:[%s149 + $0x380] sm:$0xff] %v374
                %v376 = vld [vmem:[%s148 + $0x708] sm:$0xff]
                %377 = vst [vmem:[%s149 + $0x388] sm:$0xff] %v376
                %v378 = vld [vmem:[%s148 + $0x720] sm:$0xff]
                %379 = vst [vmem:[%s149 + $0x390] sm:$0xff] %v378
                %v380 = vld [vmem:[%s148 + $0x728] sm:$0xff]
                %381 = vst [vmem:[%s149 + $0x398] sm:$0xff] %v380
                %v382 = vld [vmem:[%s148 + $0x740] sm:$0xff]
                %383 = vst [vmem:[%s149 + $0x3a0] sm:$0xff] %v382
                %v384 = vld [vmem:[%s148 + $0x748] sm:$0xff]
                %385 = vst [vmem:[%s149 + $0x3a8] sm:$0xff] %v384
                %v386 = vld [vmem:[%s148 + $0x760] sm:$0xff]
                %387 = vst [vmem:[%s149 + $0x3b0] sm:$0xff] %v386
                %v388 = vld [vmem:[%s148 + $0x768] sm:$0xff]
                %389 = vst [vmem:[%s149 + $0x3b8] sm:$0xff] %v388
                %v390 = vld [vmem:[%s148 + $0x780] sm:$0xff]
                %391 = vst [vmem:[%s149 + $0x3c0] sm:$0xff] %v390
                %v392 = vld [vmem:[%s148 + $0x788] sm:$0xff]
                %393 = vst [vmem:[%s149 + $0x3c8] sm:$0xff] %v392
                %v394 = vld [vmem:[%s148 + $0x7a0] sm:$0xff]
                %395 = vst [vmem:[%s149 + $0x3d0] sm:$0xff] %v394
                %v396 = vld [vmem:[%s148 + $0x7a8] sm:$0xff]
                %397 = vst [vmem:[%s149 + $0x3d8] sm:$0xff] %v396
                %v398 = vld [vmem:[%s148 + $0x7c0] sm:$0xff]
                %399 = vst [vmem:[%s149 + $0x3e0] sm:$0xff] %v398
                %v400 = vld [vmem:[%s148 + $0x7c8] sm:$0xff]
                %401 = vst [vmem:[%s149 + $0x3e8] sm:$0xff] %v400
                %v402 = vld [vmem:[%s148 + $0x7e0] sm:$0xff]
                %403 = vst [vmem:[%s149 + $0x3f0] sm:$0xff] %v402
                %v404 = vld [vmem:[%s148 + $0x7e8] sm:$0xff]
                %405 = vst [vmem:[%s149 + $0x3f8] sm:$0xff] %v404
                %v406 = vld [vmem:[%s148 + $0x800] sm:$0xff]
                %407 = vst [vmem:[%s149 + $0x400] sm:$0xff] %v406
                %v408 = vld [vmem:[%s148 + $0x808] sm:$0xff]
                %409 = vst [vmem:[%s149 + $0x408] sm:$0xff] %v408
                %v410 = vld [vmem:[%s148 + $0x820] sm:$0xff]
                %411 = vst [vmem:[%s149 + $0x410] sm:$0xff] %v410
                %v412 = vld [vmem:[%s148 + $0x828] sm:$0xff]
                %413 = vst [vmem:[%s149 + $0x418] sm:$0xff] %v412
                %v414 = vld [vmem:[%s148 + $0x840] sm:$0xff]
                %415 = vst [vmem:[%s149 + $0x420] sm:$0xff] %v414
                %v416 = vld [vmem:[%s148 + $0x848] sm:$0xff]
                %417 = vst [vmem:[%s149 + $0x428] sm:$0xff] %v416
                %v418 = vld [vmem:[%s148 + $0x860] sm:$0xff]
                %419 = vst [vmem:[%s149 + $0x430] sm:$0xff] %v418
                %v420 = vld [vmem:[%s148 + $0x868] sm:$0xff]
                %421 = vst [vmem:[%s149 + $0x438] sm:$0xff] %v420
                %v422 = vld [vmem:[%s148 + $0x880] sm:$0xff]
                %423 = vst [vmem:[%s149 + $0x440] sm:$0xff] %v422
                %v424 = vld [vmem:[%s148 + $0x888] sm:$0xff]
                %425 = vst [vmem:[%s149 + $0x448] sm:$0xff] %v424
                %v426 = vld [vmem:[%s148 + $0x8a0] sm:$0xff]
                %427 = vst [vmem:[%s149 + $0x450] sm:$0xff] %v426
                %v428 = vld [vmem:[%s148 + $0x8a8] sm:$0xff]
                %429 = vst [vmem:[%s149 + $0x458] sm:$0xff] %v428
                %v430 = vld [vmem:[%s148 + $0x8c0] sm:$0xff]
                %431 = vst [vmem:[%s149 + $0x460] sm:$0xff] %v430
                %v432 = vld [vmem:[%s148 + $0x8c8] sm:$0xff]
                %433 = vst [vmem:[%s149 + $0x468] sm:$0xff] %v432
                %v434 = vld [vmem:[%s148 + $0x8e0] sm:$0xff]
                %435 = vst [vmem:[%s149 + $0x470] sm:$0xff] %v434
                %v436 = vld [vmem:[%s148 + $0x8e8] sm:$0xff]
                %437 = vst [vmem:[%s149 + $0x478] sm:$0xff] %v436
                %v438 = vld [vmem:[%s148 + $0x900] sm:$0xff]
                %439 = vst [vmem:[%s149 + $0x480] sm:$0xff] %v438
                %v440 = vld [vmem:[%s148 + $0x908] sm:$0xff]
                %441 = vst [vmem:[%s149 + $0x488] sm:$0xff] %v440
                %v442 = vld [vmem:[%s148 + $0x920] sm:$0xff]
                %443 = vst [vmem:[%s149 + $0x490] sm:$0xff] %v442
                %v444 = vld [vmem:[%s148 + $0x928] sm:$0xff]
                %445 = vst [vmem:[%s149 + $0x498] sm:$0xff] %v444
                %v446 = vld [vmem:[%s148 + $0x940] sm:$0xff]
                %447 = vst [vmem:[%s149 + $0x4a0] sm:$0xff] %v446
                %v448 = vld [vmem:[%s148 + $0x948] sm:$0xff]
                %449 = vst [vmem:[%s149 + $0x4a8] sm:$0xff] %v448
                %v450 = vld [vmem:[%s148 + $0x960] sm:$0xff]
                %451 = vst [vmem:[%s149 + $0x4b0] sm:$0xff] %v450
                %v452 = vld [vmem:[%s148 + $0x968] sm:$0xff]
                %453 = vst [vmem:[%s149 + $0x4b8] sm:$0xff] %v452
                %v454 = vld [vmem:[%s148 + $0x980] sm:$0xff]
                %455 = vst [vmem:[%s149 + $0x4c0] sm:$0xff] %v454
                %v456 = vld [vmem:[%s148 + $0x988] sm:$0xff]
                %457 = vst [vmem:[%s149 + $0x4c8] sm:$0xff] %v456
                %v458 = vld [vmem:[%s148 + $0x9a0] sm:$0xff]
                %459 = vst [vmem:[%s149 + $0x4d0] sm:$0xff] %v458
                %v460 = vld [vmem:[%s148 + $0x9a8] sm:$0xff]
                %461 = vst [vmem:[%s149 + $0x4d8] sm:$0xff] %v460
                %v462 = vld [vmem:[%s148 + $0x9c0] sm:$0xff]
                %463 = vst [vmem:[%s149 + $0x4e0] sm:$0xff] %v462
                %v464 = vld [vmem:[%s148 + $0x9c8] sm:$0xff]
                %465 = vst [vmem:[%s149 + $0x4e8] sm:$0xff] %v464
                %v466 = vld [vmem:[%s148 + $0x9e0] sm:$0xff]
                %467 = vst [vmem:[%s149 + $0x4f0] sm:$0xff] %v466
                %v468 = vld [vmem:[%s148 + $0x9e8] sm:$0xff]
                %469 = vst [vmem:[%s149 + $0x4f8] sm:$0xff] %v468
                %v470 = vld [vmem:[%s148 + $0xa00] sm:$0xff]
                %471 = vst [vmem:[%s149 + $0x500] sm:$0xff] %v470
                %v472 = vld [vmem:[%s148 + $0xa08] sm:$0xff]
                %473 = vst [vmem:[%s149 + $0x508] sm:$0xff] %v472
                %v474 = vld [vmem:[%s148 + $0xa20] sm:$0xff]
                %475 = vst [vmem:[%s149 + $0x510] sm:$0xff] %v474
                %v476 = vld [vmem:[%s148 + $0xa28] sm:$0xff]
                %477 = vst [vmem:[%s149 + $0x518] sm:$0xff] %v476
                %v478 = vld [vmem:[%s148 + $0xa40] sm:$0xff]
                %479 = vst [vmem:[%s149 + $0x520] sm:$0xff] %v478
                %v480 = vld [vmem:[%s148 + $0xa48] sm:$0xff]
                %481 = vst [vmem:[%s149 + $0x528] sm:$0xff] %v480
                %v482 = vld [vmem:[%s148 + $0xa60] sm:$0xff]
                %483 = vst [vmem:[%s149 + $0x530] sm:$0xff] %v482
                %v484 = vld [vmem:[%s148 + $0xa68] sm:$0xff]
                %485 = vst [vmem:[%s149 + $0x538] sm:$0xff] %v484
                %v486 = vld [vmem:[%s148 + $0xa80] sm:$0xff]
                %487 = vst [vmem:[%s149 + $0x540] sm:$0xff] %v486
                %v488 = vld [vmem:[%s148 + $0xa88] sm:$0xff]
                %489 = vst [vmem:[%s149 + $0x548] sm:$0xff] %v488
                %v490 = vld [vmem:[%s148 + $0xaa0] sm:$0xff]
                %491 = vst [vmem:[%s149 + $0x550] sm:$0xff] %v490
                %v492 = vld [vmem:[%s148 + $0xaa8] sm:$0xff]
                %493 = vst [vmem:[%s149 + $0x558] sm:$0xff] %v492
                %v494 = vld [vmem:[%s148 + $0xac0] sm:$0xff]
                %495 = vst [vmem:[%s149 + $0x560] sm:$0xff] %v494
                %v496 = vld [vmem:[%s148 + $0xac8] sm:$0xff]
                %497 = vst [vmem:[%s149 + $0x568] sm:$0xff] %v496
                %v498 = vld [vmem:[%s148 + $0xae0] sm:$0xff]
                %499 = vst [vmem:[%s149 + $0x570] sm:$0xff] %v498
                %v500 = vld [vmem:[%s148 + $0xae8] sm:$0xff]
                %501 = vst [vmem:[%s149 + $0x578] sm:$0xff] %v500
                %v502 = vld [vmem:[%s148 + $0xb00] sm:$0xff]
                %503 = vst [vmem:[%s149 + $0x580] sm:$0xff] %v502
                %v504 = vld [vmem:[%s148 + $0xb08] sm:$0xff]
                %505 = vst [vmem:[%s149 + $0x588] sm:$0xff] %v504
                %v506 = vld [vmem:[%s148 + $0xb20] sm:$0xff]
                %507 = vst [vmem:[%s149 + $0x590] sm:$0xff] %v506
                %v508 = vld [vmem:[%s148 + $0xb28] sm:$0xff]
                %509 = vst [vmem:[%s149 + $0x598] sm:$0xff] %v508
                %v510 = vld [vmem:[%s148 + $0xb40] sm:$0xff]
                %511 = vst [vmem:[%s149 + $0x5a0] sm:$0xff] %v510
                %v512 = vld [vmem:[%s148 + $0xb48] sm:$0xff]
                %513 = vst [vmem:[%s149 + $0x5a8] sm:$0xff] %v512
                %v514 = vld [vmem:[%s148 + $0xb60] sm:$0xff]
                %515 = vst [vmem:[%s149 + $0x5b0] sm:$0xff] %v514
                %v516 = vld [vmem:[%s148 + $0xb68] sm:$0xff]
                %517 = vst [vmem:[%s149 + $0x5b8] sm:$0xff] %v516
                %v518 = vld [vmem:[%s148 + $0xb80] sm:$0xff]
                %519 = vst [vmem:[%s149 + $0x5c0] sm:$0xff] %v518
                %v520 = vld [vmem:[%s148 + $0xb88] sm:$0xff]
                %521 = vst [vmem:[%s149 + $0x5c8] sm:$0xff] %v520
                %v522 = vld [vmem:[%s148 + $0xba0] sm:$0xff]
                %523 = vst [vmem:[%s149 + $0x5d0] sm:$0xff] %v522
                %v524 = vld [vmem:[%s148 + $0xba8] sm:$0xff]
                %525 = vst [vmem:[%s149 + $0x5d8] sm:$0xff] %v524
                %v526 = vld [vmem:[%s148 + $0xbc0] sm:$0xff]
                %527 = vst [vmem:[%s149 + $0x5e0] sm:$0xff] %v526
                %v528 = vld [vmem:[%s148 + $0xbc8] sm:$0xff]
                %529 = vst [vmem:[%s149 + $0x5e8] sm:$0xff] %v528
                %v530 = vld [vmem:[%s148 + $0xbe0] sm:$0xff]
                %531 = vst [vmem:[%s149 + $0x5f0] sm:$0xff] %v530
                %v532 = vld [vmem:[%s148 + $0xbe8] sm:$0xff]
                %533 = vst [vmem:[%s149 + $0x5f8] sm:$0xff] %v532
                %v534 = vld [vmem:[%s148 + $0xc00] sm:$0xff]
                %535 = vst [vmem:[%s149 + $0x600] sm:$0xff] %v534
                %v536 = vld [vmem:[%s148 + $0xc08] sm:$0xff]
                %537 = vst [vmem:[%s149 + $0x608] sm:$0xff] %v536
                %v538 = vld [vmem:[%s148 + $0xc20] sm:$0xff]
                %539 = vst [vmem:[%s149 + $0x610] sm:$0xff] %v538
                %v540 = vld [vmem:[%s148 + $0xc28] sm:$0xff]
                %541 = vst [vmem:[%s149 + $0x618] sm:$0xff] %v540
                %v542 = vld [vmem:[%s148 + $0xc40] sm:$0xff]
                %543 = vst [vmem:[%s149 + $0x620] sm:$0xff] %v542
                %v544 = vld [vmem:[%s148 + $0xc48] sm:$0xff]
                %545 = vst [vmem:[%s149 + $0x628] sm:$0xff] %v544
                %v546 = vld [vmem:[%s148 + $0xc60] sm:$0xff]
                %547 = vst [vmem:[%s149 + $0x630] sm:$0xff] %v546
                %v548 = vld [vmem:[%s148 + $0xc68] sm:$0xff]
                %549 = vst [vmem:[%s149 + $0x638] sm:$0xff] %v548
                %v550 = vld [vmem:[%s148 + $0xc80] sm:$0xff]
                %551 = vst [vmem:[%s149 + $0x640] sm:$0xff] %v550
                %v552 = vld [vmem:[%s148 + $0xc88] sm:$0xff]
                %553 = vst [vmem:[%s149 + $0x648] sm:$0xff] %v552
                %v554 = vld [vmem:[%s148 + $0xca0] sm:$0xff]
                %555 = vst [vmem:[%s149 + $0x650] sm:$0xff] %v554
                %v556 = vld [vmem:[%s148 + $0xca8] sm:$0xff]
                %557 = vst [vmem:[%s149 + $0x658] sm:$0xff] %v556
                %v558 = vld [vmem:[%s148 + $0xcc0] sm:$0xff]
                %559 = vst [vmem:[%s149 + $0x660] sm:$0xff] %v558
                %v560 = vld [vmem:[%s148 + $0xcc8] sm:$0xff]
                %561 = vst [vmem:[%s149 + $0x668] sm:$0xff] %v560
                %v562 = vld [vmem:[%s148 + $0xce0] sm:$0xff]
                %563 = vst [vmem:[%s149 + $0x670] sm:$0xff] %v562
                %v564 = vld [vmem:[%s148 + $0xce8] sm:$0xff]
                %565 = vst [vmem:[%s149 + $0x678] sm:$0xff] %v564
                %v566 = vld [vmem:[%s148 + $0xd00] sm:$0xff]
                %567 = vst [vmem:[%s149 + $0x680] sm:$0xff] %v566
                %v568 = vld [vmem:[%s148 + $0xd08] sm:$0xff]
                %569 = vst [vmem:[%s149 + $0x688] sm:$0xff] %v568
                %v570 = vld [vmem:[%s148 + $0xd20] sm:$0xff]
                %571 = vst [vmem:[%s149 + $0x690] sm:$0xff] %v570
                %v572 = vld [vmem:[%s148 + $0xd28] sm:$0xff]
                %573 = vst [vmem:[%s149 + $0x698] sm:$0xff] %v572
                %v574 = vld [vmem:[%s148 + $0xd40] sm:$0xff]
                %575 = vst [vmem:[%s149 + $0x6a0] sm:$0xff] %v574
                %v576 = vld [vmem:[%s148 + $0xd48] sm:$0xff]
                %577 = vst [vmem:[%s149 + $0x6a8] sm:$0xff] %v576
                %v578 = vld [vmem:[%s148 + $0xd60] sm:$0xff]
                %579 = vst [vmem:[%s149 + $0x6b0] sm:$0xff] %v578
                %v580 = vld [vmem:[%s148 + $0xd68] sm:$0xff]
                %581 = vst [vmem:[%s149 + $0x6b8] sm:$0xff] %v580
                %v582 = vld [vmem:[%s148 + $0xd80] sm:$0xff]
                %583 = vst [vmem:[%s149 + $0x6c0] sm:$0xff] %v582
                %v584 = vld [vmem:[%s148 + $0xd88] sm:$0xff]
                %585 = vst [vmem:[%s149 + $0x6c8] sm:$0xff] %v584
                %v586 = vld [vmem:[%s148 + $0xda0] sm:$0xff]
                %587 = vst [vmem:[%s149 + $0x6d0] sm:$0xff] %v586
                %v588 = vld [vmem:[%s148 + $0xda8] sm:$0xff]
                %589 = vst [vmem:[%s149 + $0x6d8] sm:$0xff] %v588
                %v590 = vld [vmem:[%s148 + $0xdc0] sm:$0xff]
                %591 = vst [vmem:[%s149 + $0x6e0] sm:$0xff] %v590
                %v592 = vld [vmem:[%s148 + $0xdc8] sm:$0xff]
                %593 = vst [vmem:[%s149 + $0x6e8] sm:$0xff] %v592
                %v594 = vld [vmem:[%s148 + $0xde0] sm:$0xff]
                %595 = vst [vmem:[%s149 + $0x6f0] sm:$0xff] %v594
                %v596 = vld [vmem:[%s148 + $0xde8] sm:$0xff]
                %597 = vst [vmem:[%s149 + $0x6f8] sm:$0xff] %v596
                %v598 = vld [vmem:[%s148 + $0xe00] sm:$0xff]
                %599 = vst [vmem:[%s149 + $0x700] sm:$0xff] %v598
                %v600 = vld [vmem:[%s148 + $0xe08] sm:$0xff]
                %601 = vst [vmem:[%s149 + $0x708] sm:$0xff] %v600
                %v602 = vld [vmem:[%s148 + $0xe20] sm:$0xff]
                %603 = vst [vmem:[%s149 + $0x710] sm:$0xff] %v602
                %v604 = vld [vmem:[%s148 + $0xe28] sm:$0xff]
                %605 = vst [vmem:[%s149 + $0x718] sm:$0xff] %v604
                %v606 = vld [vmem:[%s148 + $0xe40] sm:$0xff]
                %607 = vst [vmem:[%s149 + $0x720] sm:$0xff] %v606
                %v608 = vld [vmem:[%s148 + $0xe48] sm:$0xff]
                %609 = vst [vmem:[%s149 + $0x728] sm:$0xff] %v608
                %v610 = vld [vmem:[%s148 + $0xe60] sm:$0xff]
                %611 = vst [vmem:[%s149 + $0x730] sm:$0xff] %v610
                %v612 = vld [vmem:[%s148 + $0xe68] sm:$0xff]
                %613 = vst [vmem:[%s149 + $0x738] sm:$0xff] %v612
                %v614 = vld [vmem:[%s148 + $0xe80] sm:$0xff]
                %615 = vst [vmem:[%s149 + $0x740] sm:$0xff] %v614
                %v616 = vld [vmem:[%s148 + $0xe88] sm:$0xff]
                %617 = vst [vmem:[%s149 + $0x748] sm:$0xff] %v616
                %v618 = vld [vmem:[%s148 + $0xea0] sm:$0xff]
                %619 = vst [vmem:[%s149 + $0x750] sm:$0xff] %v618
                %v620 = vld [vmem:[%s148 + $0xea8] sm:$0xff]
                %621 = vst [vmem:[%s149 + $0x758] sm:$0xff] %v620
                %v622 = vld [vmem:[%s148 + $0xec0] sm:$0xff]
                %623 = vst [vmem:[%s149 + $0x760] sm:$0xff] %v622
                %v624 = vld [vmem:[%s148 + $0xec8] sm:$0xff]
                %625 = vst [vmem:[%s149 + $0x768] sm:$0xff] %v624
                %v626 = vld [vmem:[%s148 + $0xee0] sm:$0xff]
                %627 = vst [vmem:[%s149 + $0x770] sm:$0xff] %v626
                %v628 = vld [vmem:[%s148 + $0xee8] sm:$0xff]
                %629 = vst [vmem:[%s149 + $0x778] sm:$0xff] %v628
                %v630 = vld [vmem:[%s148 + $0xf00] sm:$0xff]
                %631 = vst [vmem:[%s149 + $0x780] sm:$0xff] %v630
                %v632 = vld [vmem:[%s148 + $0xf08] sm:$0xff]
                %633 = vst [vmem:[%s149 + $0x788] sm:$0xff] %v632
                %v634 = vld [vmem:[%s148 + $0xf20] sm:$0xff]
                %635 = vst [vmem:[%s149 + $0x790] sm:$0xff] %v634
                %v636 = vld [vmem:[%s148 + $0xf28] sm:$0xff]
                %637 = vst [vmem:[%s149 + $0x798] sm:$0xff] %v636
                %v638 = vld [vmem:[%s148 + $0xf40] sm:$0xff]
                %639 = vst [vmem:[%s149 + $0x7a0] sm:$0xff] %v638
                %v640 = vld [vmem:[%s148 + $0xf48] sm:$0xff]
                %641 = vst [vmem:[%s149 + $0x7a8] sm:$0xff] %v640
                %v642 = vld [vmem:[%s148 + $0xf60] sm:$0xff]
                %643 = vst [vmem:[%s149 + $0x7b0] sm:$0xff] %v642
                %v644 = vld [vmem:[%s148 + $0xf68] sm:$0xff]
                %645 = vst [vmem:[%s149 + $0x7b8] sm:$0xff] %v644
                %v646 = vld [vmem:[%s148 + $0xf80] sm:$0xff]
                %647 = vst [vmem:[%s149 + $0x7c0] sm:$0xff] %v646
                %v648 = vld [vmem:[%s148 + $0xf88] sm:$0xff]
                %649 = vst [vmem:[%s149 + $0x7c8] sm:$0xff] %v648
                %v650 = vld [vmem:[%s148 + $0xfa0] sm:$0xff]
                %651 = vst [vmem:[%s149 + $0x7d0] sm:$0xff] %v650
                %v652 = vld [vmem:[%s148 + $0xfa8] sm:$0xff]
                %653 = vst [vmem:[%s149 + $0x7d8] sm:$0xff] %v652
                %v654 = vld [vmem:[%s148 + $0xfc0] sm:$0xff]
                %655 = vst [vmem:[%s149 + $0x7e0] sm:$0xff] %v654
                %v656 = vld [vmem:[%s148 + $0xfc8] sm:$0xff]
                %657 = vst [vmem:[%s149 + $0x7e8] sm:$0xff] %v656
                %v658 = vld [vmem:[%s148 + $0xfe0] sm:$0xff]
                %659 = vst [vmem:[%s149 + $0x7f0] sm:$0xff] %v658
                %v660 = vld [vmem:[%s148 + $0xfe8] sm:$0xff]
                %661 = vst [vmem:[%s149 + $0x7f8] sm:$0xff] %v660
              $region41: #{discriminator_forward.3} parent=35 // loop_footer
                %s147 = sadd.s32 1, %s143
              $region42: #{discriminator_forward.3} parent=35 // loop_footer_branch
                %142 = sbr.rel target = $region38
              $region43: #{discriminator_forward.3} parent=35 // loop_exit
                _
            $region36: #{discriminator_forward.3} parent=31 // pred_fallthru
              _
            // Predicated region
            $region44: #{discriminator_forward.3} parent=31 // pred_check
              _
            $region45: #{discriminator_forward.3} parent=31 // pred_check_branch
              %663 = sbr.rel target = $region47
            $region46: #{discriminator_forward.3} parent=31 // pred_region
              _
            $region47: #{discriminator_forward.3} parent=31 // pred_fallthru
              _
          $region32: #{discriminator_forward.3} parent=27 // pred_fallthru
            _
          %664 = vnop
        $region28: #{discriminator_forward.3} parent=23 // pred_fallthru
          _
      $region24: #{discriminator_forward.3} parent=5 // pred_fallthru
        _
      %p665 = scmp.le.s32.totalorder 1, %s9
      %p666 = scmp.lt.s32.totalorder %s9, 3
      %p667 = pnand %p665, %p666
      %p668 = pneg %p667
      // Predicated region
      $region48: #{discriminator_forward.3} parent=5 // pred_check
        _
      $region49: #{discriminator_forward.3} parent=5 // pred_check_branch
        %670 = sbr.rel (%p667) target = $region51
      $region50: #{discriminator_forward.3} parent=5 // pred_region
        %s671 = ssub.s32 %s9, 1
        %s672 = sand.u32 %s43, 1
        %s673 = sand.u32 %s43, 1
        %s674 = smul.addr %s673, 2048
        %s675 = scalar_lea.vmem [#allocation2], %s674
        // Predicated region
        $region52: #{discriminator_forward.3} parent=50 // pred_check
          %p676 = pneg %p56
        $region53: #{discriminator_forward.3} parent=50 // pred_check_branch
          %678 = sbr.rel (%p676) target = $region55
        $region54: #{discriminator_forward.3} parent=50 // pred_region
          _
        $region55: #{discriminator_forward.3} parent=50 // pred_fallthru
          _
        %p679 = pneg %p30
        %p680 = pneg %p27
        %s681 = sand.u32 %s43, 1
        %s682 = sand.u32 %s43, 1
        %s683 = smul.addr %s682, 2048
        %s684 = scalar_lea.vmem [#allocation2], %s683
        %p685 = pneg %p56
        %p686 = pneg %p53
        %p687 = pneg %p77
        %p688 = pneg %p74
        %p689 = pneg %p103
        %p690 = pneg %p100
        %s691 = smul.u32 4, %s14
        %p692 = scmp.lt.s32.totalorder %s691, 7
        %s693 = scalar_select %p692, %s691, 7
        %s694 = smul.addr %s693, 8
        %s695 = scalar_lea.vmem %s3, %s694
        %s696 = smul.u32 4, %s14
        %s697 = smul.u32 4, %s14
        %p698 = scmp.lt.s32.totalorder %s697, 7
        %s699 = scalar_select %p698, %s697, 7
        %s700 = smul.addr %s699, 8
        %s701 = scalar_lea.vmem %s3, %s700
        %s702 = smul.u32 4, %s14
        %v703 = vld [vmem:[%s0] sm:$0xff]
        %v704 = vld [vmem:[%s0 + $0x8] sm:$0xff]
        %v705 = vld [vmem:[%s0 + $0x10] sm:$0xff]
        %v706 = vld [vmem:[%s0 + $0x18] sm:$0xff]
        %v707 = vld [vmem:[%s675] sm:$0xff]
        %v708 = vld [vmem:[%s675 + $0x8] sm:$0xff]
        %v709 = vld [vmem:[%s675 + $0x10] sm:$0xff]
        %v710 = vld [vmem:[%s675 + $0x18] sm:$0xff]
        %v711 = vld [vmem:[%s675 + $0x20] sm:$0xff]
        %v712 = vld [vmem:[%s675 + $0x28] sm:$0xff]
        %v713 = vld [vmem:[%s675 + $0x30] sm:$0xff]
        %v714 = vld [vmem:[%s675 + $0x38] sm:$0xff]
        %v715 = vld [vmem:[%s675 + $0x40] sm:$0xff]
        %v716 = vld [vmem:[%s675 + $0x48] sm:$0xff]
        %v717 = vld [vmem:[%s675 + $0x50] sm:$0xff]
        %v718 = vld [vmem:[%s675 + $0x58] sm:$0xff]
        %v719 = vld [vmem:[%s675 + $0x60] sm:$0xff]
        %v720 = vld [vmem:[%s675 + $0x68] sm:$0xff]
        %v721 = vld [vmem:[%s675 + $0x70] sm:$0xff]
        %v722 = vld [vmem:[%s675 + $0x78] sm:$0xff]
        %v723 = vld [vmem:[%s675 + $0x80] sm:$0xff]
        %v724 = vld [vmem:[%s675 + $0x88] sm:$0xff]
        %v725 = vld [vmem:[%s675 + $0x90] sm:$0xff]
        %v726 = vld [vmem:[%s675 + $0x98] sm:$0xff]
        %v727 = vld [vmem:[%s675 + $0xa0] sm:$0xff]
        %v728 = vld [vmem:[%s675 + $0xa8] sm:$0xff]
        %v729 = vld [vmem:[%s675 + $0xb0] sm:$0xff]
        %v730 = vld [vmem:[%s675 + $0xb8] sm:$0xff]
        %v731 = vld [vmem:[%s675 + $0xc0] sm:$0xff]
        %v732 = vld [vmem:[%s675 + $0xc8] sm:$0xff]
        %v733 = vld [vmem:[%s675 + $0xd0] sm:$0xff]
        %v734 = vld [vmem:[%s675 + $0xd8] sm:$0xff]
        %v735 = vld [vmem:[%s675 + $0xe0] sm:$0xff]
        %v736 = vld [vmem:[%s675 + $0xe8] sm:$0xff]
        %v737 = vld [vmem:[%s675 + $0xf0] sm:$0xff]
        %v738 = vld [vmem:[%s675 + $0xf8] sm:$0xff]
        %v739 = vld [vmem:[%s675 + $0x100] sm:$0xff]
        %v740 = vld [vmem:[%s675 + $0x108] sm:$0xff]
        %v741 = vld [vmem:[%s675 + $0x110] sm:$0xff]
        %v742 = vld [vmem:[%s675 + $0x118] sm:$0xff]
        %v743 = vld [vmem:[%s675 + $0x120] sm:$0xff]
        %v744 = vld [vmem:[%s675 + $0x128] sm:$0xff]
        %v745 = vld [vmem:[%s675 + $0x130] sm:$0xff]
        %v746 = vld [vmem:[%s675 + $0x138] sm:$0xff]
        %v747 = vld [vmem:[%s675 + $0x140] sm:$0xff]
        %v748 = vld [vmem:[%s675 + $0x148] sm:$0xff]
        %v749 = vld [vmem:[%s675 + $0x150] sm:$0xff]
        %v750 = vld [vmem:[%s675 + $0x158] sm:$0xff]
        %v751 = vld [vmem:[%s675 + $0x160] sm:$0xff]
        %v752 = vld [vmem:[%s675 + $0x168] sm:$0xff]
        %v753 = vld [vmem:[%s675 + $0x170] sm:$0xff]
        %v754 = vld [vmem:[%s675 + $0x178] sm:$0xff]
        %v755 = vld [vmem:[%s675 + $0x180] sm:$0xff]
        %v756 = vld [vmem:[%s675 + $0x188] sm:$0xff]
        %v757 = vld [vmem:[%s675 + $0x190] sm:$0xff]
        %v758 = vld [vmem:[%s675 + $0x198] sm:$0xff]
        %v759 = vld [vmem:[%s675 + $0x1a0] sm:$0xff]
        %v760 = vld [vmem:[%s675 + $0x1a8] sm:$0xff]
        %v761 = vld [vmem:[%s675 + $0x1b0] sm:$0xff]
        %v762 = vld [vmem:[%s675 + $0x1b8] sm:$0xff]
        %v763 = vld [vmem:[%s675 + $0x1c0] sm:$0xff]
        %v764 = vld [vmem:[%s675 + $0x1c8] sm:$0xff]
        %v765 = vld [vmem:[%s675 + $0x1d0] sm:$0xff]
        %v766 = vld [vmem:[%s675 + $0x1d8] sm:$0xff]
        %v767 = vld [vmem:[%s675 + $0x1e0] sm:$0xff]
        %v768 = vld [vmem:[%s675 + $0x1e8] sm:$0xff]
        %v769 = vld [vmem:[%s675 + $0x1f0] sm:$0xff]
        %v770 = vld [vmem:[%s675 + $0x1f8] sm:$0xff]
        %v771 = vld [vmem:[%s675 + $0x200] sm:$0xff]
        %v772 = vld [vmem:[%s675 + $0x208] sm:$0xff]
        %v773 = vld [vmem:[%s675 + $0x210] sm:$0xff]
        %v774 = vld [vmem:[%s675 + $0x218] sm:$0xff]
        %v775 = vld [vmem:[%s675 + $0x220] sm:$0xff]
        %v776 = vld [vmem:[%s675 + $0x228] sm:$0xff]
        %v777 = vld [vmem:[%s675 + $0x230] sm:$0xff]
        %v778 = vld [vmem:[%s675 + $0x238] sm:$0xff]
        %v779 = vld [vmem:[%s675 + $0x240] sm:$0xff]
        %v780 = vld [vmem:[%s675 + $0x248] sm:$0xff]
        %v781 = vld [vmem:[%s675 + $0x250] sm:$0xff]
        %v782 = vld [vmem:[%s675 + $0x258] sm:$0xff]
        %v783 = vld [vmem:[%s675 + $0x260] sm:$0xff]
        %v784 = vld [vmem:[%s675 + $0x268] sm:$0xff]
        %v785 = vld [vmem:[%s675 + $0x270] sm:$0xff]
        %v786 = vld [vmem:[%s675 + $0x278] sm:$0xff]
        %v787 = vld [vmem:[%s675 + $0x280] sm:$0xff]
        %v788 = vld [vmem:[%s675 + $0x288] sm:$0xff]
        %v789 = vld [vmem:[%s675 + $0x290] sm:$0xff]
        %v790 = vld [vmem:[%s675 + $0x298] sm:$0xff]
        %v791 = vld [vmem:[%s675 + $0x2a0] sm:$0xff]
        %v792 = vld [vmem:[%s675 + $0x2a8] sm:$0xff]
        %v793 = vld [vmem:[%s675 + $0x2b0] sm:$0xff]
        %v794 = vld [vmem:[%s675 + $0x2b8] sm:$0xff]
        %v795 = vld [vmem:[%s675 + $0x2c0] sm:$0xff]
        %v796 = vld [vmem:[%s675 + $0x2c8] sm:$0xff]
        %v797 = vld [vmem:[%s675 + $0x2d0] sm:$0xff]
        %v798 = vld [vmem:[%s675 + $0x2d8] sm:$0xff]
        %v799 = vld [vmem:[%s675 + $0x2e0] sm:$0xff]
        %v800 = vld [vmem:[%s675 + $0x2e8] sm:$0xff]
        %v801 = vld [vmem:[%s675 + $0x2f0] sm:$0xff]
        %v802 = vld [vmem:[%s675 + $0x2f8] sm:$0xff]
        %v803 = vld [vmem:[%s675 + $0x300] sm:$0xff]
        %v804 = vld [vmem:[%s675 + $0x308] sm:$0xff]
        %v805 = vld [vmem:[%s675 + $0x310] sm:$0xff]
        %v806 = vld [vmem:[%s675 + $0x318] sm:$0xff]
        %v807 = vld [vmem:[%s675 + $0x320] sm:$0xff]
        %v808 = vld [vmem:[%s675 + $0x328] sm:$0xff]
        %v809 = vld [vmem:[%s675 + $0x330] sm:$0xff]
        %v810 = vld [vmem:[%s675 + $0x338] sm:$0xff]
        %v811 = vld [vmem:[%s675 + $0x340] sm:$0xff]
        %v812 = vld [vmem:[%s675 + $0x348] sm:$0xff]
        %v813 = vld [vmem:[%s675 + $0x350] sm:$0xff]
        %v814 = vld [vmem:[%s675 + $0x358] sm:$0xff]
        %v815 = vld [vmem:[%s675 + $0x360] sm:$0xff]
        %v816 = vld [vmem:[%s675 + $0x368] sm:$0xff]
        %v817 = vld [vmem:[%s675 + $0x370] sm:$0xff]
        %v818 = vld [vmem:[%s675 + $0x378] sm:$0xff]
        %v819 = vld [vmem:[%s675 + $0x380] sm:$0xff]
        %v820 = vld [vmem:[%s675 + $0x388] sm:$0xff]
        %v821 = vld [vmem:[%s675 + $0x390] sm:$0xff]
        %v822 = vld [vmem:[%s675 + $0x398] sm:$0xff]
        %v823 = vld [vmem:[%s675 + $0x3a0] sm:$0xff]
        %v824 = vld [vmem:[%s675 + $0x3a8] sm:$0xff]
        %v825 = vld [vmem:[%s675 + $0x3b0] sm:$0xff]
        %v826 = vld [vmem:[%s675 + $0x3b8] sm:$0xff]
        %v827 = vld [vmem:[%s675 + $0x3c0] sm:$0xff]
        %v828 = vld [vmem:[%s675 + $0x3c8] sm:$0xff]
        %v829 = vld [vmem:[%s675 + $0x3d0] sm:$0xff]
        %v830 = vld [vmem:[%s675 + $0x3d8] sm:$0xff]
        %v831 = vld [vmem:[%s675 + $0x3e0] sm:$0xff]
        %v832 = vld [vmem:[%s675 + $0x3e8] sm:$0xff]
        %v833 = vld [vmem:[%s675 + $0x3f0] sm:$0xff]
        %v834 = vld [vmem:[%s675 + $0x3f8] sm:$0xff]
        %v835 = vld [vmem:[%s675 + $0x400] sm:$0xff]
        %v836 = vld [vmem:[%s675 + $0x408] sm:$0xff]
        %v837 = vld [vmem:[%s675 + $0x410] sm:$0xff]
        %v838 = vld [vmem:[%s675 + $0x418] sm:$0xff]
        %v839 = vld [vmem:[%s675 + $0x420] sm:$0xff]
        %v840 = vld [vmem:[%s675 + $0x428] sm:$0xff]
        %v841 = vld [vmem:[%s675 + $0x430] sm:$0xff]
        %v842 = vld [vmem:[%s675 + $0x438] sm:$0xff]
        %v843 = vld [vmem:[%s675 + $0x440] sm:$0xff]
        %v844 = vld [vmem:[%s675 + $0x448] sm:$0xff]
        %v845 = vld [vmem:[%s675 + $0x450] sm:$0xff]
        %v846 = vld [vmem:[%s675 + $0x458] sm:$0xff]
        %v847 = vld [vmem:[%s675 + $0x460] sm:$0xff]
        %v848 = vld [vmem:[%s675 + $0x468] sm:$0xff]
        %v849 = vld [vmem:[%s675 + $0x470] sm:$0xff]
        %v850 = vld [vmem:[%s675 + $0x478] sm:$0xff]
        %v851 = vld [vmem:[%s675 + $0x480] sm:$0xff]
        %v852 = vld [vmem:[%s675 + $0x488] sm:$0xff]
        %v853 = vld [vmem:[%s675 + $0x490] sm:$0xff]
        %v854 = vld [vmem:[%s675 + $0x498] sm:$0xff]
        %v855 = vld [vmem:[%s675 + $0x4a0] sm:$0xff]
        %v856 = vld [vmem:[%s675 + $0x4a8] sm:$0xff]
        %v857 = vld [vmem:[%s675 + $0x4b0] sm:$0xff]
        %v858 = vld [vmem:[%s675 + $0x4b8] sm:$0xff]
        %v859 = vld [vmem:[%s675 + $0x4c0] sm:$0xff]
        %v860 = vld [vmem:[%s675 + $0x4c8] sm:$0xff]
        %v861 = vld [vmem:[%s675 + $0x4d0] sm:$0xff]
        %v862 = vld [vmem:[%s675 + $0x4d8] sm:$0xff]
        %v863 = vld [vmem:[%s675 + $0x4e0] sm:$0xff]
        %v864 = vld [vmem:[%s675 + $0x4e8] sm:$0xff]
        %v865 = vld [vmem:[%s675 + $0x4f0] sm:$0xff]
        %v866 = vld [vmem:[%s675 + $0x4f8] sm:$0xff]
        %v867 = vld [vmem:[%s675 + $0x500] sm:$0xff]
        %v868 = vld [vmem:[%s675 + $0x508] sm:$0xff]
        %v869 = vld [vmem:[%s675 + $0x510] sm:$0xff]
        %v870 = vld [vmem:[%s675 + $0x518] sm:$0xff]
        %v871 = vld [vmem:[%s675 + $0x520] sm:$0xff]
        %v872 = vld [vmem:[%s675 + $0x528] sm:$0xff]
        %v873 = vld [vmem:[%s675 + $0x530] sm:$0xff]
        %v874 = vld [vmem:[%s675 + $0x538] sm:$0xff]
        %v875 = vld [vmem:[%s675 + $0x540] sm:$0xff]
        %v876 = vld [vmem:[%s675 + $0x548] sm:$0xff]
        %v877 = vld [vmem:[%s675 + $0x550] sm:$0xff]
        %v878 = vld [vmem:[%s675 + $0x558] sm:$0xff]
        %v879 = vld [vmem:[%s675 + $0x560] sm:$0xff]
        %v880 = vld [vmem:[%s675 + $0x568] sm:$0xff]
        %v881 = vld [vmem:[%s675 + $0x570] sm:$0xff]
        %v882 = vld [vmem:[%s675 + $0x578] sm:$0xff]
        %v883 = vld [vmem:[%s675 + $0x580] sm:$0xff]
        %v884 = vld [vmem:[%s675 + $0x588] sm:$0xff]
        %v885 = vld [vmem:[%s675 + $0x590] sm:$0xff]
        %v886 = vld [vmem:[%s675 + $0x598] sm:$0xff]
        %v887 = vld [vmem:[%s675 + $0x5a0] sm:$0xff]
        %v888 = vld [vmem:[%s675 + $0x5a8] sm:$0xff]
        %v889 = vld [vmem:[%s675 + $0x5b0] sm:$0xff]
        %v890 = vld [vmem:[%s675 + $0x5b8] sm:$0xff]
        %v891 = vld [vmem:[%s675 + $0x5c0] sm:$0xff]
        %v892 = vld [vmem:[%s675 + $0x5c8] sm:$0xff]
        %v893 = vld [vmem:[%s675 + $0x5d0] sm:$0xff]
        %v894 = vld [vmem:[%s675 + $0x5d8] sm:$0xff]
        %v895 = vld [vmem:[%s675 + $0x5e0] sm:$0xff]
        %v896 = vld [vmem:[%s675 + $0x5e8] sm:$0xff]
        %v897 = vld [vmem:[%s675 + $0x5f0] sm:$0xff]
        %v898 = vld [vmem:[%s675 + $0x5f8] sm:$0xff]
        %v899 = vld [vmem:[%s675 + $0x600] sm:$0xff]
        %v900 = vld [vmem:[%s675 + $0x608] sm:$0xff]
        %v901 = vld [vmem:[%s675 + $0x610] sm:$0xff]
        %v902 = vld [vmem:[%s675 + $0x618] sm:$0xff]
        %v903 = vld [vmem:[%s675 + $0x620] sm:$0xff]
        %v904 = vld [vmem:[%s675 + $0x628] sm:$0xff]
        %v905 = vld [vmem:[%s675 + $0x630] sm:$0xff]
        %v906 = vld [vmem:[%s675 + $0x638] sm:$0xff]
        %v907 = vld [vmem:[%s675 + $0x640] sm:$0xff]
        %v908 = vld [vmem:[%s675 + $0x648] sm:$0xff]
        %v909 = vld [vmem:[%s675 + $0x650] sm:$0xff]
        %v910 = vld [vmem:[%s675 + $0x658] sm:$0xff]
        %v911 = vld [vmem:[%s675 + $0x660] sm:$0xff]
        %v912 = vld [vmem:[%s675 + $0x668] sm:$0xff]
        %v913 = vld [vmem:[%s675 + $0x670] sm:$0xff]
        %v914 = vld [vmem:[%s675 + $0x678] sm:$0xff]
        %v915 = vld [vmem:[%s675 + $0x680] sm:$0xff]
        %v916 = vld [vmem:[%s675 + $0x688] sm:$0xff]
        %v917 = vld [vmem:[%s675 + $0x690] sm:$0xff]
        %v918 = vld [vmem:[%s675 + $0x698] sm:$0xff]
        %v919 = vld [vmem:[%s675 + $0x6a0] sm:$0xff]
        %v920 = vld [vmem:[%s675 + $0x6a8] sm:$0xff]
        %v921 = vld [vmem:[%s675 + $0x6b0] sm:$0xff]
        %v922 = vld [vmem:[%s675 + $0x6b8] sm:$0xff]
        %v923 = vld [vmem:[%s675 + $0x6c0] sm:$0xff]
        %v924 = vld [vmem:[%s675 + $0x6c8] sm:$0xff]
        %v925 = vld [vmem:[%s675 + $0x6d0] sm:$0xff]
        %v926 = vld [vmem:[%s675 + $0x6d8] sm:$0xff]
        %v927 = vld [vmem:[%s675 + $0x6e0] sm:$0xff]
        %v928 = vld [vmem:[%s675 + $0x6e8] sm:$0xff]
        %v929 = vld [vmem:[%s675 + $0x6f0] sm:$0xff]
        %v930 = vld [vmem:[%s675 + $0x6f8] sm:$0xff]
        %v931 = vld [vmem:[%s675 + $0x700] sm:$0xff]
        %v932 = vld [vmem:[%s675 + $0x708] sm:$0xff]
        %v933 = vld [vmem:[%s675 + $0x710] sm:$0xff]
        %v934 = vld [vmem:[%s675 + $0x718] sm:$0xff]
        %v935 = vld [vmem:[%s675 + $0x720] sm:$0xff]
        %v936 = vld [vmem:[%s675 + $0x728] sm:$0xff]
        %v937 = vld [vmem:[%s675 + $0x730] sm:$0xff]
        %v938 = vld [vmem:[%s675 + $0x738] sm:$0xff]
        %v939 = vld [vmem:[%s675 + $0x740] sm:$0xff]
        %v940 = vld [vmem:[%s675 + $0x748] sm:$0xff]
        %v941 = vld [vmem:[%s675 + $0x750] sm:$0xff]
        %v942 = vld [vmem:[%s675 + $0x758] sm:$0xff]
        %v943 = vld [vmem:[%s675 + $0x760] sm:$0xff]
        %v944 = vld [vmem:[%s675 + $0x768] sm:$0xff]
        %v945 = vld [vmem:[%s675 + $0x770] sm:$0xff]
        %v946 = vld [vmem:[%s675 + $0x778] sm:$0xff]
        %v947 = vld [vmem:[%s675 + $0x780] sm:$0xff]
        %v948 = vld [vmem:[%s675 + $0x788] sm:$0xff]
        %v949 = vld [vmem:[%s675 + $0x790] sm:$0xff]
        %v950 = vld [vmem:[%s675 + $0x798] sm:$0xff]
        %v951 = vld [vmem:[%s675 + $0x7a0] sm:$0xff]
        %v952 = vld [vmem:[%s675 + $0x7a8] sm:$0xff]
        %v953 = vld [vmem:[%s675 + $0x7b0] sm:$0xff]
        %v954 = vld [vmem:[%s675 + $0x7b8] sm:$0xff]
        %v955 = vld [vmem:[%s675 + $0x7c0] sm:$0xff]
        %v956 = vld [vmem:[%s675 + $0x7c8] sm:$0xff]
        %v957 = vld [vmem:[%s675 + $0x7d0] sm:$0xff]
        %v958 = vld [vmem:[%s675 + $0x7d8] sm:$0xff]
        %v959 = vld [vmem:[%s675 + $0x7e0] sm:$0xff]
        %v960 = vld [vmem:[%s675 + $0x7e8] sm:$0xff]
        %v961 = vld [vmem:[%s675 + $0x7f0] sm:$0xff]
        %v962 = vld [vmem:[%s675 + $0x7f8] sm:$0xff]
        %v963 = vld [vmem:[%s2] sm:$0xff]
        %965 = vset.pattern.permute.xlu0 0
        %966 = vperm.xlu0 %965, %v963
        %v967 = vpop.permute.xlu0 %966
        %v973 = vunpack.c.l.b16 %v703
        %v974 = vunpack.c.h.b16 %v703
        %v975 = vunpack.c.l.b16 %v704
        %v976 = vunpack.c.h.b16 %v704
        %v977 = vunpack.c.l.b16 %v705
        %v978 = vunpack.c.h.b16 %v705
        %v979 = vunpack.c.l.b16 %v706
        %v980 = vunpack.c.h.b16 %v706
        %v981 = vpack.c.b16 %v973, %v973
        %v982 = vpack.c.b16 %v974, %v974
        %v983 = vpack.c.b16 %v975, %v975
        %v984 = vpack.c.b16 %v976, %v976
        %v985 = vpack.c.b16 %v977, %v977
        %v986 = vpack.c.b16 %v978, %v978
        %v987 = vpack.c.b16 %v979, %v979
        %v988 = vpack.c.b16 %v980, %v980
        %v1253 = vunpack.c.l.b16 %v707
        %v1254 = vunpack.c.h.b16 %v707
        %v1255 = vunpack.c.l.b16 %v708
        %v1256 = vunpack.c.h.b16 %v708
        %v1257 = vunpack.c.l.b16 %v709
        %v1258 = vunpack.c.h.b16 %v709
        %v1259 = vunpack.c.l.b16 %v710
        %v1260 = vunpack.c.h.b16 %v710
        %v1261 = vunpack.c.l.b16 %v711
        %v1262 = vunpack.c.h.b16 %v711
        %v1263 = vunpack.c.l.b16 %v712
        %v1264 = vunpack.c.h.b16 %v712
        %v1265 = vunpack.c.l.b16 %v713
        %v1266 = vunpack.c.h.b16 %v713
        %v1267 = vunpack.c.l.b16 %v714
        %v1268 = vunpack.c.h.b16 %v714
        %v1269 = vunpack.c.l.b16 %v715
        %v1270 = vunpack.c.h.b16 %v715
        %v1271 = vunpack.c.l.b16 %v716
        %v1272 = vunpack.c.h.b16 %v716
        %v1273 = vunpack.c.l.b16 %v717
        %v1274 = vunpack.c.h.b16 %v717
        %v1275 = vunpack.c.l.b16 %v718
        %v1276 = vunpack.c.h.b16 %v718
        %v1277 = vunpack.c.l.b16 %v719
        %v1278 = vunpack.c.h.b16 %v719
        %v1279 = vunpack.c.l.b16 %v720
        %v1280 = vunpack.c.h.b16 %v720
        %v1281 = vunpack.c.l.b16 %v721
        %v1282 = vunpack.c.h.b16 %v721
        %v1283 = vunpack.c.l.b16 %v722
        %v1284 = vunpack.c.h.b16 %v722
        %v1285 = vunpack.c.l.b16 %v723
        %v1286 = vunpack.c.h.b16 %v723
        %v1287 = vunpack.c.l.b16 %v724
        %v1288 = vunpack.c.h.b16 %v724
        %v1289 = vunpack.c.l.b16 %v725
        %v1290 = vunpack.c.h.b16 %v725
        %v1291 = vunpack.c.l.b16 %v726
        %v1292 = vunpack.c.h.b16 %v726
        %v1293 = vunpack.c.l.b16 %v727
        %v1294 = vunpack.c.h.b16 %v727
        %v1295 = vunpack.c.l.b16 %v728
        %v1296 = vunpack.c.h.b16 %v728
        %v1297 = vunpack.c.l.b16 %v729
        %v1298 = vunpack.c.h.b16 %v729
        %v1299 = vunpack.c.l.b16 %v730
        %v1300 = vunpack.c.h.b16 %v730
        %v1301 = vunpack.c.l.b16 %v731
        %v1302 = vunpack.c.h.b16 %v731
        %v1303 = vunpack.c.l.b16 %v732
        %v1304 = vunpack.c.h.b16 %v732
        %v1305 = vunpack.c.l.b16 %v733
        %v1306 = vunpack.c.h.b16 %v733
        %v1307 = vunpack.c.l.b16 %v734
        %v1308 = vunpack.c.h.b16 %v734
        %v1309 = vunpack.c.l.b16 %v735
        %v1310 = vunpack.c.h.b16 %v735
        %v1311 = vunpack.c.l.b16 %v736
        %v1312 = vunpack.c.h.b16 %v736
        %v1313 = vunpack.c.l.b16 %v737
        %v1314 = vunpack.c.h.b16 %v737
        %v1315 = vunpack.c.l.b16 %v738
        %v1316 = vunpack.c.h.b16 %v738
        %v1317 = vunpack.c.l.b16 %v739
        %v1318 = vunpack.c.h.b16 %v739
        %v1319 = vunpack.c.l.b16 %v740
        %v1320 = vunpack.c.h.b16 %v740
        %v1321 = vunpack.c.l.b16 %v741
        %v1322 = vunpack.c.h.b16 %v741
        %v1323 = vunpack.c.l.b16 %v742
        %v1324 = vunpack.c.h.b16 %v742
        %v1325 = vunpack.c.l.b16 %v743
        %v1326 = vunpack.c.h.b16 %v743
        %v1327 = vunpack.c.l.b16 %v744
        %v1328 = vunpack.c.h.b16 %v744
        %v1329 = vunpack.c.l.b16 %v745
        %v1330 = vunpack.c.h.b16 %v745
        %v1331 = vunpack.c.l.b16 %v746
        %v1332 = vunpack.c.h.b16 %v746
        %v1333 = vunpack.c.l.b16 %v747
        %v1334 = vunpack.c.h.b16 %v747
        %v1335 = vunpack.c.l.b16 %v748
        %v1336 = vunpack.c.h.b16 %v748
        %v1337 = vunpack.c.l.b16 %v749
        %v1338 = vunpack.c.h.b16 %v749
        %v1339 = vunpack.c.l.b16 %v750
        %v1340 = vunpack.c.h.b16 %v750
        %v1341 = vunpack.c.l.b16 %v751
        %v1342 = vunpack.c.h.b16 %v751
        %v1343 = vunpack.c.l.b16 %v752
        %v1344 = vunpack.c.h.b16 %v752
        %v1345 = vunpack.c.l.b16 %v753
        %v1346 = vunpack.c.h.b16 %v753
        %v1347 = vunpack.c.l.b16 %v754
        %v1348 = vunpack.c.h.b16 %v754
        %v1349 = vunpack.c.l.b16 %v755
        %v1350 = vunpack.c.h.b16 %v755
        %v1351 = vunpack.c.l.b16 %v756
        %v1352 = vunpack.c.h.b16 %v756
        %v1353 = vunpack.c.l.b16 %v757
        %v1354 = vunpack.c.h.b16 %v757
        %v1355 = vunpack.c.l.b16 %v758
        %v1356 = vunpack.c.h.b16 %v758
        %v1357 = vunpack.c.l.b16 %v759
        %v1358 = vunpack.c.h.b16 %v759
        %v1359 = vunpack.c.l.b16 %v760
        %v1360 = vunpack.c.h.b16 %v760
        %v1361 = vunpack.c.l.b16 %v761
        %v1362 = vunpack.c.h.b16 %v761
        %v1363 = vunpack.c.l.b16 %v762
        %v1364 = vunpack.c.h.b16 %v762
        %v1365 = vunpack.c.l.b16 %v763
        %v1366 = vunpack.c.h.b16 %v763
        %v1367 = vunpack.c.l.b16 %v764
        %v1368 = vunpack.c.h.b16 %v764
        %v1369 = vunpack.c.l.b16 %v765
        %v1370 = vunpack.c.h.b16 %v765
        %v1371 = vunpack.c.l.b16 %v766
        %v1372 = vunpack.c.h.b16 %v766
        %v1373 = vunpack.c.l.b16 %v767
        %v1374 = vunpack.c.h.b16 %v767
        %v1375 = vunpack.c.l.b16 %v768
        %v1376 = vunpack.c.h.b16 %v768
        %v1377 = vunpack.c.l.b16 %v769
        %v1378 = vunpack.c.h.b16 %v769
        %v1379 = vunpack.c.l.b16 %v770
        %v1380 = vunpack.c.h.b16 %v770
        %v1381 = vunpack.c.l.b16 %v771
        %v1382 = vunpack.c.h.b16 %v771
        %v1383 = vunpack.c.l.b16 %v772
        %v1384 = vunpack.c.h.b16 %v772
        %v1385 = vunpack.c.l.b16 %v773
        %v1386 = vunpack.c.h.b16 %v773
        %v1387 = vunpack.c.l.b16 %v774
        %v1388 = vunpack.c.h.b16 %v774
        %v1389 = vunpack.c.l.b16 %v775
        %v1390 = vunpack.c.h.b16 %v775
        %v1391 = vunpack.c.l.b16 %v776
        %v1392 = vunpack.c.h.b16 %v776
        %v1393 = vunpack.c.l.b16 %v777
        %v1394 = vunpack.c.h.b16 %v777
        %v1395 = vunpack.c.l.b16 %v778
        %v1396 = vunpack.c.h.b16 %v778
        %v1397 = vunpack.c.l.b16 %v779
        %v1398 = vunpack.c.h.b16 %v779
        %v1399 = vunpack.c.l.b16 %v780
        %v1400 = vunpack.c.h.b16 %v780
        %v1401 = vunpack.c.l.b16 %v781
        %v1402 = vunpack.c.h.b16 %v781
        %v1403 = vunpack.c.l.b16 %v782
        %v1404 = vunpack.c.h.b16 %v782
        %v1405 = vunpack.c.l.b16 %v783
        %v1406 = vunpack.c.h.b16 %v783
        %v1407 = vunpack.c.l.b16 %v784
        %v1408 = vunpack.c.h.b16 %v784
        %v1409 = vunpack.c.l.b16 %v785
        %v1410 = vunpack.c.h.b16 %v785
        %v1411 = vunpack.c.l.b16 %v786
        %v1412 = vunpack.c.h.b16 %v786
        %v1413 = vunpack.c.l.b16 %v787
        %v1414 = vunpack.c.h.b16 %v787
        %v1415 = vunpack.c.l.b16 %v788
        %v1416 = vunpack.c.h.b16 %v788
        %v1417 = vunpack.c.l.b16 %v789
        %v1418 = vunpack.c.h.b16 %v789
        %v1419 = vunpack.c.l.b16 %v790
        %v1420 = vunpack.c.h.b16 %v790
        %v1421 = vunpack.c.l.b16 %v791
        %v1422 = vunpack.c.h.b16 %v791
        %v1423 = vunpack.c.l.b16 %v792
        %v1424 = vunpack.c.h.b16 %v792
        %v1425 = vunpack.c.l.b16 %v793
        %v1426 = vunpack.c.h.b16 %v793
        %v1427 = vunpack.c.l.b16 %v794
        %v1428 = vunpack.c.h.b16 %v794
        %v1429 = vunpack.c.l.b16 %v795
        %v1430 = vunpack.c.h.b16 %v795
        %v1431 = vunpack.c.l.b16 %v796
        %v1432 = vunpack.c.h.b16 %v796
        %v1433 = vunpack.c.l.b16 %v797
        %v1434 = vunpack.c.h.b16 %v797
        %v1435 = vunpack.c.l.b16 %v798
        %v1436 = vunpack.c.h.b16 %v798
        %v1437 = vunpack.c.l.b16 %v799
        %v1438 = vunpack.c.h.b16 %v799
        %v1439 = vunpack.c.l.b16 %v800
        %v1440 = vunpack.c.h.b16 %v800
        %v1441 = vunpack.c.l.b16 %v801
        %v1442 = vunpack.c.h.b16 %v801
        %v1443 = vunpack.c.l.b16 %v802
        %v1444 = vunpack.c.h.b16 %v802
        %v1445 = vunpack.c.l.b16 %v803
        %v1446 = vunpack.c.h.b16 %v803
        %v1447 = vunpack.c.l.b16 %v804
        %v1448 = vunpack.c.h.b16 %v804
        %v1449 = vunpack.c.l.b16 %v805
        %v1450 = vunpack.c.h.b16 %v805
        %v1451 = vunpack.c.l.b16 %v806
        %v1452 = vunpack.c.h.b16 %v806
        %v1453 = vunpack.c.l.b16 %v807
        %v1454 = vunpack.c.h.b16 %v807
        %v1455 = vunpack.c.l.b16 %v808
        %v1456 = vunpack.c.h.b16 %v808
        %v1457 = vunpack.c.l.b16 %v809
        %v1458 = vunpack.c.h.b16 %v809
        %v1459 = vunpack.c.l.b16 %v810
        %v1460 = vunpack.c.h.b16 %v810
        %v1461 = vunpack.c.l.b16 %v811
        %v1462 = vunpack.c.h.b16 %v811
        %v1463 = vunpack.c.l.b16 %v812
        %v1464 = vunpack.c.h.b16 %v812
        %v1465 = vunpack.c.l.b16 %v813
        %v1466 = vunpack.c.h.b16 %v813
        %v1467 = vunpack.c.l.b16 %v814
        %v1468 = vunpack.c.h.b16 %v814
        %v1469 = vunpack.c.l.b16 %v815
        %v1470 = vunpack.c.h.b16 %v815
        %v1471 = vunpack.c.l.b16 %v816
        %v1472 = vunpack.c.h.b16 %v816
        %v1473 = vunpack.c.l.b16 %v817
        %v1474 = vunpack.c.h.b16 %v817
        %v1475 = vunpack.c.l.b16 %v818
        %v1476 = vunpack.c.h.b16 %v818
        %v1477 = vunpack.c.l.b16 %v819
        %v1478 = vunpack.c.h.b16 %v819
        %v1479 = vunpack.c.l.b16 %v820
        %v1480 = vunpack.c.h.b16 %v820
        %v1481 = vunpack.c.l.b16 %v821
        %v1482 = vunpack.c.h.b16 %v821
        %v1483 = vunpack.c.l.b16 %v822
        %v1484 = vunpack.c.h.b16 %v822
        %v1485 = vunpack.c.l.b16 %v823
        %v1486 = vunpack.c.h.b16 %v823
        %v1487 = vunpack.c.l.b16 %v824
        %v1488 = vunpack.c.h.b16 %v824
        %v1489 = vunpack.c.l.b16 %v825
        %v1490 = vunpack.c.h.b16 %v825
        %v1491 = vunpack.c.l.b16 %v826
        %v1492 = vunpack.c.h.b16 %v826
        %v1493 = vunpack.c.l.b16 %v827
        %v1494 = vunpack.c.h.b16 %v827
        %v1495 = vunpack.c.l.b16 %v828
        %v1496 = vunpack.c.h.b16 %v828
        %v1497 = vunpack.c.l.b16 %v829
        %v1498 = vunpack.c.h.b16 %v829
        %v1499 = vunpack.c.l.b16 %v830
        %v1500 = vunpack.c.h.b16 %v830
        %v1501 = vunpack.c.l.b16 %v831
        %v1502 = vunpack.c.h.b16 %v831
        %v1503 = vunpack.c.l.b16 %v832
        %v1504 = vunpack.c.h.b16 %v832
        %v1505 = vunpack.c.l.b16 %v833
        %v1506 = vunpack.c.h.b16 %v833
        %v1507 = vunpack.c.l.b16 %v834
        %v1508 = vunpack.c.h.b16 %v834
        %v1509 = vunpack.c.l.b16 %v835
        %v1510 = vunpack.c.h.b16 %v835
        %v1511 = vunpack.c.l.b16 %v836
        %v1512 = vunpack.c.h.b16 %v836
        %v1513 = vunpack.c.l.b16 %v837
        %v1514 = vunpack.c.h.b16 %v837
        %v1515 = vunpack.c.l.b16 %v838
        %v1516 = vunpack.c.h.b16 %v838
        %v1517 = vunpack.c.l.b16 %v839
        %v1518 = vunpack.c.h.b16 %v839
        %v1519 = vunpack.c.l.b16 %v840
        %v1520 = vunpack.c.h.b16 %v840
        %v1521 = vunpack.c.l.b16 %v841
        %v1522 = vunpack.c.h.b16 %v841
        %v1523 = vunpack.c.l.b16 %v842
        %v1524 = vunpack.c.h.b16 %v842
        %v1525 = vunpack.c.l.b16 %v843
        %v1526 = vunpack.c.h.b16 %v843
        %v1527 = vunpack.c.l.b16 %v844
        %v1528 = vunpack.c.h.b16 %v844
        %v1529 = vunpack.c.l.b16 %v845
        %v1530 = vunpack.c.h.b16 %v845
        %v1531 = vunpack.c.l.b16 %v846
        %v1532 = vunpack.c.h.b16 %v846
        %v1533 = vunpack.c.l.b16 %v847
        %v1534 = vunpack.c.h.b16 %v847
        %v1535 = vunpack.c.l.b16 %v848
        %v1536 = vunpack.c.h.b16 %v848
        %v1537 = vunpack.c.l.b16 %v849
        %v1538 = vunpack.c.h.b16 %v849
        %v1539 = vunpack.c.l.b16 %v850
        %v1540 = vunpack.c.h.b16 %v850
        %v1541 = vunpack.c.l.b16 %v851
        %v1542 = vunpack.c.h.b16 %v851
        %v1543 = vunpack.c.l.b16 %v852
        %v1544 = vunpack.c.h.b16 %v852
        %v1545 = vunpack.c.l.b16 %v853
        %v1546 = vunpack.c.h.b16 %v853
        %v1547 = vunpack.c.l.b16 %v854
        %v1548 = vunpack.c.h.b16 %v854
        %v1549 = vunpack.c.l.b16 %v855
        %v1550 = vunpack.c.h.b16 %v855
        %v1551 = vunpack.c.l.b16 %v856
        %v1552 = vunpack.c.h.b16 %v856
        %v1553 = vunpack.c.l.b16 %v857
        %v1554 = vunpack.c.h.b16 %v857
        %v1555 = vunpack.c.l.b16 %v858
        %v1556 = vunpack.c.h.b16 %v858
        %v1557 = vunpack.c.l.b16 %v859
        %v1558 = vunpack.c.h.b16 %v859
        %v1559 = vunpack.c.l.b16 %v860
        %v1560 = vunpack.c.h.b16 %v860
        %v1561 = vunpack.c.l.b16 %v861
        %v1562 = vunpack.c.h.b16 %v861
        %v1563 = vunpack.c.l.b16 %v862
        %v1564 = vunpack.c.h.b16 %v862
        %v1565 = vunpack.c.l.b16 %v863
        %v1566 = vunpack.c.h.b16 %v863
        %v1567 = vunpack.c.l.b16 %v864
        %v1568 = vunpack.c.h.b16 %v864
        %v1569 = vunpack.c.l.b16 %v865
        %v1570 = vunpack.c.h.b16 %v865
        %v1571 = vunpack.c.l.b16 %v866
        %v1572 = vunpack.c.h.b16 %v866
        %v1573 = vunpack.c.l.b16 %v867
        %v1574 = vunpack.c.h.b16 %v867
        %v1575 = vunpack.c.l.b16 %v868
        %v1576 = vunpack.c.h.b16 %v868
        %v1577 = vunpack.c.l.b16 %v869
        %v1578 = vunpack.c.h.b16 %v869
        %v1579 = vunpack.c.l.b16 %v870
        %v1580 = vunpack.c.h.b16 %v870
        %v1581 = vunpack.c.l.b16 %v871
        %v1582 = vunpack.c.h.b16 %v871
        %v1583 = vunpack.c.l.b16 %v872
        %v1584 = vunpack.c.h.b16 %v872
        %v1585 = vunpack.c.l.b16 %v873
        %v1586 = vunpack.c.h.b16 %v873
        %v1587 = vunpack.c.l.b16 %v874
        %v1588 = vunpack.c.h.b16 %v874
        %v1589 = vunpack.c.l.b16 %v875
        %v1590 = vunpack.c.h.b16 %v875
        %v1591 = vunpack.c.l.b16 %v876
        %v1592 = vunpack.c.h.b16 %v876
        %v1593 = vunpack.c.l.b16 %v877
        %v1594 = vunpack.c.h.b16 %v877
        %v1595 = vunpack.c.l.b16 %v878
        %v1596 = vunpack.c.h.b16 %v878
        %v1597 = vunpack.c.l.b16 %v879
        %v1598 = vunpack.c.h.b16 %v879
        %v1599 = vunpack.c.l.b16 %v880
        %v1600 = vunpack.c.h.b16 %v880
        %v1601 = vunpack.c.l.b16 %v881
        %v1602 = vunpack.c.h.b16 %v881
        %v1603 = vunpack.c.l.b16 %v882
        %v1604 = vunpack.c.h.b16 %v882
        %v1605 = vunpack.c.l.b16 %v883
        %v1606 = vunpack.c.h.b16 %v883
        %v1607 = vunpack.c.l.b16 %v884
        %v1608 = vunpack.c.h.b16 %v884
        %v1609 = vunpack.c.l.b16 %v885
        %v1610 = vunpack.c.h.b16 %v885
        %v1611 = vunpack.c.l.b16 %v886
        %v1612 = vunpack.c.h.b16 %v886
        %v1613 = vunpack.c.l.b16 %v887
        %v1614 = vunpack.c.h.b16 %v887
        %v1615 = vunpack.c.l.b16 %v888
        %v1616 = vunpack.c.h.b16 %v888
        %v1617 = vunpack.c.l.b16 %v889
        %v1618 = vunpack.c.h.b16 %v889
        %v1619 = vunpack.c.l.b16 %v890
        %v1620 = vunpack.c.h.b16 %v890
        %v1621 = vunpack.c.l.b16 %v891
        %v1622 = vunpack.c.h.b16 %v891
        %v1623 = vunpack.c.l.b16 %v892
        %v1624 = vunpack.c.h.b16 %v892
        %v1625 = vunpack.c.l.b16 %v893
        %v1626 = vunpack.c.h.b16 %v893
        %v1627 = vunpack.c.l.b16 %v894
        %v1628 = vunpack.c.h.b16 %v894
        %v1629 = vunpack.c.l.b16 %v895
        %v1630 = vunpack.c.h.b16 %v895
        %v1631 = vunpack.c.l.b16 %v896
        %v1632 = vunpack.c.h.b16 %v896
        %v1633 = vunpack.c.l.b16 %v897
        %v1634 = vunpack.c.h.b16 %v897
        %v1635 = vunpack.c.l.b16 %v898
        %v1636 = vunpack.c.h.b16 %v898
        %v1637 = vunpack.c.l.b16 %v899
        %v1638 = vunpack.c.h.b16 %v899
        %v1639 = vunpack.c.l.b16 %v900
        %v1640 = vunpack.c.h.b16 %v900
        %v1641 = vunpack.c.l.b16 %v901
        %v1642 = vunpack.c.h.b16 %v901
        %v1643 = vunpack.c.l.b16 %v902
        %v1644 = vunpack.c.h.b16 %v902
        %v1645 = vunpack.c.l.b16 %v903
        %v1646 = vunpack.c.h.b16 %v903
        %v1647 = vunpack.c.l.b16 %v904
        %v1648 = vunpack.c.h.b16 %v904
        %v1649 = vunpack.c.l.b16 %v905
        %v1650 = vunpack.c.h.b16 %v905
        %v1651 = vunpack.c.l.b16 %v906
        %v1652 = vunpack.c.h.b16 %v906
        %v1653 = vunpack.c.l.b16 %v907
        %v1654 = vunpack.c.h.b16 %v907
        %v1655 = vunpack.c.l.b16 %v908
        %v1656 = vunpack.c.h.b16 %v908
        %v1657 = vunpack.c.l.b16 %v909
        %v1658 = vunpack.c.h.b16 %v909
        %v1659 = vunpack.c.l.b16 %v910
        %v1660 = vunpack.c.h.b16 %v910
        %v1661 = vunpack.c.l.b16 %v911
        %v1662 = vunpack.c.h.b16 %v911
        %v1663 = vunpack.c.l.b16 %v912
        %v1664 = vunpack.c.h.b16 %v912
        %v1665 = vunpack.c.l.b16 %v913
        %v1666 = vunpack.c.h.b16 %v913
        %v1667 = vunpack.c.l.b16 %v914
        %v1668 = vunpack.c.h.b16 %v914
        %v1669 = vunpack.c.l.b16 %v915
        %v1670 = vunpack.c.h.b16 %v915
        %v1671 = vunpack.c.l.b16 %v916
        %v1672 = vunpack.c.h.b16 %v916
        %v1673 = vunpack.c.l.b16 %v917
        %v1674 = vunpack.c.h.b16 %v917
        %v1675 = vunpack.c.l.b16 %v918
        %v1676 = vunpack.c.h.b16 %v918
        %v1677 = vunpack.c.l.b16 %v919
        %v1678 = vunpack.c.h.b16 %v919
        %v1679 = vunpack.c.l.b16 %v920
        %v1680 = vunpack.c.h.b16 %v920
        %v1681 = vunpack.c.l.b16 %v921
        %v1682 = vunpack.c.h.b16 %v921
        %v1683 = vunpack.c.l.b16 %v922
        %v1684 = vunpack.c.h.b16 %v922
        %v1685 = vunpack.c.l.b16 %v923
        %v1686 = vunpack.c.h.b16 %v923
        %v1687 = vunpack.c.l.b16 %v924
        %v1688 = vunpack.c.h.b16 %v924
        %v1689 = vunpack.c.l.b16 %v925
        %v1690 = vunpack.c.h.b16 %v925
        %v1691 = vunpack.c.l.b16 %v926
        %v1692 = vunpack.c.h.b16 %v926
        %v1693 = vunpack.c.l.b16 %v927
        %v1694 = vunpack.c.h.b16 %v927
        %v1695 = vunpack.c.l.b16 %v928
        %v1696 = vunpack.c.h.b16 %v928
        %v1697 = vunpack.c.l.b16 %v929
        %v1698 = vunpack.c.h.b16 %v929
        %v1699 = vunpack.c.l.b16 %v930
        %v1700 = vunpack.c.h.b16 %v930
        %v1701 = vunpack.c.l.b16 %v931
        %v1702 = vunpack.c.h.b16 %v931
        %v1703 = vunpack.c.l.b16 %v932
        %v1704 = vunpack.c.h.b16 %v932
        %v1705 = vunpack.c.l.b16 %v933
        %v1706 = vunpack.c.h.b16 %v933
        %v1707 = vunpack.c.l.b16 %v934
        %v1708 = vunpack.c.h.b16 %v934
        %v1709 = vunpack.c.l.b16 %v935
        %v1710 = vunpack.c.h.b16 %v935
        %v1711 = vunpack.c.l.b16 %v936
        %v1712 = vunpack.c.h.b16 %v936
        %v1713 = vunpack.c.l.b16 %v937
        %v1714 = vunpack.c.h.b16 %v937
        %v1715 = vunpack.c.l.b16 %v938
        %v1716 = vunpack.c.h.b16 %v938
        %v1717 = vunpack.c.l.b16 %v939
        %v1718 = vunpack.c.h.b16 %v939
        %v1719 = vunpack.c.l.b16 %v940
        %v1720 = vunpack.c.h.b16 %v940
        %v1721 = vunpack.c.l.b16 %v941
        %v1722 = vunpack.c.h.b16 %v941
        %v1723 = vunpack.c.l.b16 %v942
        %v1724 = vunpack.c.h.b16 %v942
        %v1725 = vunpack.c.l.b16 %v943
        %v1726 = vunpack.c.h.b16 %v943
        %v1727 = vunpack.c.l.b16 %v944
        %v1728 = vunpack.c.h.b16 %v944
        %v1729 = vunpack.c.l.b16 %v945
        %v1730 = vunpack.c.h.b16 %v945
        %v1731 = vunpack.c.l.b16 %v946
        %v1732 = vunpack.c.h.b16 %v946
        %v1733 = vunpack.c.l.b16 %v947
        %v1734 = vunpack.c.h.b16 %v947
        %v1735 = vunpack.c.l.b16 %v948
        %v1736 = vunpack.c.h.b16 %v948
        %v1737 = vunpack.c.l.b16 %v949
        %v1738 = vunpack.c.h.b16 %v949
        %v1739 = vunpack.c.l.b16 %v950
        %v1740 = vunpack.c.h.b16 %v950
        %v1741 = vunpack.c.l.b16 %v951
        %v1742 = vunpack.c.h.b16 %v951
        %v1743 = vunpack.c.l.b16 %v952
        %v1744 = vunpack.c.h.b16 %v952
        %v1745 = vunpack.c.l.b16 %v953
        %v1746 = vunpack.c.h.b16 %v953
        %v1747 = vunpack.c.l.b16 %v954
        %v1748 = vunpack.c.h.b16 %v954
        %v1749 = vunpack.c.l.b16 %v955
        %v1750 = vunpack.c.h.b16 %v955
        %v1751 = vunpack.c.l.b16 %v956
        %v1752 = vunpack.c.h.b16 %v956
        %v1753 = vunpack.c.l.b16 %v957
        %v1754 = vunpack.c.h.b16 %v957
        %v1755 = vunpack.c.l.b16 %v958
        %v1756 = vunpack.c.h.b16 %v958
        %v1757 = vunpack.c.l.b16 %v959
        %v1758 = vunpack.c.h.b16 %v959
        %v1759 = vunpack.c.l.b16 %v960
        %v1760 = vunpack.c.h.b16 %v960
        %v1761 = vunpack.c.l.b16 %v961
        %v1762 = vunpack.c.h.b16 %v961
        %v1763 = vunpack.c.l.b16 %v962
        %v1764 = vunpack.c.h.b16 %v962
        %v1765 = vpack.c.b16 %v1257, %v1253
        %v1766 = vpack.c.b16 %v1258, %v1254
        %v1767 = vpack.c.b16 %v1259, %v1255
        %v1768 = vpack.c.b16 %v1260, %v1256
        %v1769 = vpack.c.b16 %v1265, %v1261
        %v1770 = vpack.c.b16 %v1266, %v1262
        %v1771 = vpack.c.b16 %v1267, %v1263
        %v1772 = vpack.c.b16 %v1268, %v1264
        %v1773 = vpack.c.b16 %v1273, %v1269
        %v1774 = vpack.c.b16 %v1274, %v1270
        %v1775 = vpack.c.b16 %v1275, %v1271
        %v1776 = vpack.c.b16 %v1276, %v1272
        %v1777 = vpack.c.b16 %v1281, %v1277
        %v1778 = vpack.c.b16 %v1282, %v1278
        %v1779 = vpack.c.b16 %v1283, %v1279
        %v1780 = vpack.c.b16 %v1284, %v1280
        %v1781 = vpack.c.b16 %v1289, %v1285
        %v1782 = vpack.c.b16 %v1290, %v1286
        %v1783 = vpack.c.b16 %v1291, %v1287
        %v1784 = vpack.c.b16 %v1292, %v1288
        %v1785 = vpack.c.b16 %v1297, %v1293
        %v1786 = vpack.c.b16 %v1298, %v1294
        %v1787 = vpack.c.b16 %v1299, %v1295
        %v1788 = vpack.c.b16 %v1300, %v1296
        %v1789 = vpack.c.b16 %v1305, %v1301
        %v1790 = vpack.c.b16 %v1306, %v1302
        %v1791 = vpack.c.b16 %v1307, %v1303
        %v1792 = vpack.c.b16 %v1308, %v1304
        %v1793 = vpack.c.b16 %v1313, %v1309
        %v1794 = vpack.c.b16 %v1314, %v1310
        %v1795 = vpack.c.b16 %v1315, %v1311
        %v1796 = vpack.c.b16 %v1316, %v1312
        %v1797 = vpack.c.b16 %v1321, %v1317
        %v1798 = vpack.c.b16 %v1322, %v1318
        %v1799 = vpack.c.b16 %v1323, %v1319
        %v1800 = vpack.c.b16 %v1324, %v1320
        %v1801 = vpack.c.b16 %v1329, %v1325
        %v1802 = vpack.c.b16 %v1330, %v1326
        %v1803 = vpack.c.b16 %v1331, %v1327
        %v1804 = vpack.c.b16 %v1332, %v1328
        %v1805 = vpack.c.b16 %v1337, %v1333
        %v1806 = vpack.c.b16 %v1338, %v1334
        %v1807 = vpack.c.b16 %v1339, %v1335
        %v1808 = vpack.c.b16 %v1340, %v1336
        %v1809 = vpack.c.b16 %v1345, %v1341
        %v1810 = vpack.c.b16 %v1346, %v1342
        %v1811 = vpack.c.b16 %v1347, %v1343
        %v1812 = vpack.c.b16 %v1348, %v1344
        %v1813 = vpack.c.b16 %v1353, %v1349
        %v1814 = vpack.c.b16 %v1354, %v1350
        %v1815 = vpack.c.b16 %v1355, %v1351
        %v1816 = vpack.c.b16 %v1356, %v1352
        %v1817 = vpack.c.b16 %v1361, %v1357
        %v1818 = vpack.c.b16 %v1362, %v1358
        %v1819 = vpack.c.b16 %v1363, %v1359
        %v1820 = vpack.c.b16 %v1364, %v1360
        %v1821 = vpack.c.b16 %v1369, %v1365
        %v1822 = vpack.c.b16 %v1370, %v1366
        %v1823 = vpack.c.b16 %v1371, %v1367
        %v1824 = vpack.c.b16 %v1372, %v1368
        %v1825 = vpack.c.b16 %v1377, %v1373
        %v1826 = vpack.c.b16 %v1378, %v1374
        %v1827 = vpack.c.b16 %v1379, %v1375
        %v1828 = vpack.c.b16 %v1380, %v1376
        %v1829 = vpack.c.b16 %v1385, %v1381
        %v1830 = vpack.c.b16 %v1386, %v1382
        %v1831 = vpack.c.b16 %v1387, %v1383
        %v1832 = vpack.c.b16 %v1388, %v1384
        %v1833 = vpack.c.b16 %v1393, %v1389
        %v1834 = vpack.c.b16 %v1394, %v1390
        %v1835 = vpack.c.b16 %v1395, %v1391
        %v1836 = vpack.c.b16 %v1396, %v1392
        %v1837 = vpack.c.b16 %v1401, %v1397
        %v1838 = vpack.c.b16 %v1402, %v1398
        %v1839 = vpack.c.b16 %v1403, %v1399
        %v1840 = vpack.c.b16 %v1404, %v1400
        %v1841 = vpack.c.b16 %v1409, %v1405
        %v1842 = vpack.c.b16 %v1410, %v1406
        %v1843 = vpack.c.b16 %v1411, %v1407
        %v1844 = vpack.c.b16 %v1412, %v1408
        %v1845 = vpack.c.b16 %v1417, %v1413
        %v1846 = vpack.c.b16 %v1418, %v1414
        %v1847 = vpack.c.b16 %v1419, %v1415
        %v1848 = vpack.c.b16 %v1420, %v1416
        %v1849 = vpack.c.b16 %v1425, %v1421
        %v1850 = vpack.c.b16 %v1426, %v1422
        %v1851 = vpack.c.b16 %v1427, %v1423
        %v1852 = vpack.c.b16 %v1428, %v1424
        %v1853 = vpack.c.b16 %v1433, %v1429
        %v1854 = vpack.c.b16 %v1434, %v1430
        %v1855 = vpack.c.b16 %v1435, %v1431
        %v1856 = vpack.c.b16 %v1436, %v1432
        %v1857 = vpack.c.b16 %v1441, %v1437
        %v1858 = vpack.c.b16 %v1442, %v1438
        %v1859 = vpack.c.b16 %v1443, %v1439
        %v1860 = vpack.c.b16 %v1444, %v1440
        %v1861 = vpack.c.b16 %v1449, %v1445
        %v1862 = vpack.c.b16 %v1450, %v1446
        %v1863 = vpack.c.b16 %v1451, %v1447
        %v1864 = vpack.c.b16 %v1452, %v1448
        %v1865 = vpack.c.b16 %v1457, %v1453
        %v1866 = vpack.c.b16 %v1458, %v1454
        %v1867 = vpack.c.b16 %v1459, %v1455
        %v1868 = vpack.c.b16 %v1460, %v1456
        %v1869 = vpack.c.b16 %v1465, %v1461
        %v1870 = vpack.c.b16 %v1466, %v1462
        %v1871 = vpack.c.b16 %v1467, %v1463
        %v1872 = vpack.c.b16 %v1468, %v1464
        %v1873 = vpack.c.b16 %v1473, %v1469
        %v1874 = vpack.c.b16 %v1474, %v1470
        %v1875 = vpack.c.b16 %v1475, %v1471
        %v1876 = vpack.c.b16 %v1476, %v1472
        %v1877 = vpack.c.b16 %v1481, %v1477
        %v1878 = vpack.c.b16 %v1482, %v1478
        %v1879 = vpack.c.b16 %v1483, %v1479
        %v1880 = vpack.c.b16 %v1484, %v1480
        %v1881 = vpack.c.b16 %v1489, %v1485
        %v1882 = vpack.c.b16 %v1490, %v1486
        %v1883 = vpack.c.b16 %v1491, %v1487
        %v1884 = vpack.c.b16 %v1492, %v1488
        %v1885 = vpack.c.b16 %v1497, %v1493
        %v1886 = vpack.c.b16 %v1498, %v1494
        %v1887 = vpack.c.b16 %v1499, %v1495
        %v1888 = vpack.c.b16 %v1500, %v1496
        %v1889 = vpack.c.b16 %v1505, %v1501
        %v1890 = vpack.c.b16 %v1506, %v1502
        %v1891 = vpack.c.b16 %v1507, %v1503
        %v1892 = vpack.c.b16 %v1508, %v1504
        %v1893 = vpack.c.b16 %v1513, %v1509
        %v1894 = vpack.c.b16 %v1514, %v1510
        %v1895 = vpack.c.b16 %v1515, %v1511
        %v1896 = vpack.c.b16 %v1516, %v1512
        %v1897 = vpack.c.b16 %v1521, %v1517
        %v1898 = vpack.c.b16 %v1522, %v1518
        %v1899 = vpack.c.b16 %v1523, %v1519
        %v1900 = vpack.c.b16 %v1524, %v1520
        %v1901 = vpack.c.b16 %v1529, %v1525
        %v1902 = vpack.c.b16 %v1530, %v1526
        %v1903 = vpack.c.b16 %v1531, %v1527
        %v1904 = vpack.c.b16 %v1532, %v1528
        %v1905 = vpack.c.b16 %v1537, %v1533
        %v1906 = vpack.c.b16 %v1538, %v1534
        %v1907 = vpack.c.b16 %v1539, %v1535
        %v1908 = vpack.c.b16 %v1540, %v1536
        %v1909 = vpack.c.b16 %v1545, %v1541
        %v1910 = vpack.c.b16 %v1546, %v1542
        %v1911 = vpack.c.b16 %v1547, %v1543
        %v1912 = vpack.c.b16 %v1548, %v1544
        %v1913 = vpack.c.b16 %v1553, %v1549
        %v1914 = vpack.c.b16 %v1554, %v1550
        %v1915 = vpack.c.b16 %v1555, %v1551
        %v1916 = vpack.c.b16 %v1556, %v1552
        %v1917 = vpack.c.b16 %v1561, %v1557
        %v1918 = vpack.c.b16 %v1562, %v1558
        %v1919 = vpack.c.b16 %v1563, %v1559
        %v1920 = vpack.c.b16 %v1564, %v1560
        %v1921 = vpack.c.b16 %v1569, %v1565
        %v1922 = vpack.c.b16 %v1570, %v1566
        %v1923 = vpack.c.b16 %v1571, %v1567
        %v1924 = vpack.c.b16 %v1572, %v1568
        %v1925 = vpack.c.b16 %v1577, %v1573
        %v1926 = vpack.c.b16 %v1578, %v1574
        %v1927 = vpack.c.b16 %v1579, %v1575
        %v1928 = vpack.c.b16 %v1580, %v1576
        %v1929 = vpack.c.b16 %v1585, %v1581
        %v1930 = vpack.c.b16 %v1586, %v1582
        %v1931 = vpack.c.b16 %v1587, %v1583
        %v1932 = vpack.c.b16 %v1588, %v1584
        %v1933 = vpack.c.b16 %v1593, %v1589
        %v1934 = vpack.c.b16 %v1594, %v1590
        %v1935 = vpack.c.b16 %v1595, %v1591
        %v1936 = vpack.c.b16 %v1596, %v1592
        %v1937 = vpack.c.b16 %v1601, %v1597
        %v1938 = vpack.c.b16 %v1602, %v1598
        %v1939 = vpack.c.b16 %v1603, %v1599
        %v1940 = vpack.c.b16 %v1604, %v1600
        %v1941 = vpack.c.b16 %v1609, %v1605
        %v1942 = vpack.c.b16 %v1610, %v1606
        %v1943 = vpack.c.b16 %v1611, %v1607
        %v1944 = vpack.c.b16 %v1612, %v1608
        %v1945 = vpack.c.b16 %v1617, %v1613
        %v1946 = vpack.c.b16 %v1618, %v1614
        %v1947 = vpack.c.b16 %v1619, %v1615
        %v1948 = vpack.c.b16 %v1620, %v1616
        %v1949 = vpack.c.b16 %v1625, %v1621
        %v1950 = vpack.c.b16 %v1626, %v1622
        %v1951 = vpack.c.b16 %v1627, %v1623
        %v1952 = vpack.c.b16 %v1628, %v1624
        %v1953 = vpack.c.b16 %v1633, %v1629
        %v1954 = vpack.c.b16 %v1634, %v1630
        %v1955 = vpack.c.b16 %v1635, %v1631
        %v1956 = vpack.c.b16 %v1636, %v1632
        %v1957 = vpack.c.b16 %v1641, %v1637
        %v1958 = vpack.c.b16 %v1642, %v1638
        %v1959 = vpack.c.b16 %v1643, %v1639
        %v1960 = vpack.c.b16 %v1644, %v1640
        %v1961 = vpack.c.b16 %v1649, %v1645
        %v1962 = vpack.c.b16 %v1650, %v1646
        %v1963 = vpack.c.b16 %v1651, %v1647
        %v1964 = vpack.c.b16 %v1652, %v1648
        %v1965 = vpack.c.b16 %v1657, %v1653
        %v1966 = vpack.c.b16 %v1658, %v1654
        %v1967 = vpack.c.b16 %v1659, %v1655
        %v1968 = vpack.c.b16 %v1660, %v1656
        %v1969 = vpack.c.b16 %v1665, %v1661
        %v1970 = vpack.c.b16 %v1666, %v1662
        %v1971 = vpack.c.b16 %v1667, %v1663
        %v1972 = vpack.c.b16 %v1668, %v1664
        %v1973 = vpack.c.b16 %v1673, %v1669
        %v1974 = vpack.c.b16 %v1674, %v1670
        %v1975 = vpack.c.b16 %v1675, %v1671
        %v1976 = vpack.c.b16 %v1676, %v1672
        %v1977 = vpack.c.b16 %v1681, %v1677
        %v1978 = vpack.c.b16 %v1682, %v1678
        %v1979 = vpack.c.b16 %v1683, %v1679
        %v1980 = vpack.c.b16 %v1684, %v1680
        %v1981 = vpack.c.b16 %v1689, %v1685
        %v1982 = vpack.c.b16 %v1690, %v1686
        %v1983 = vpack.c.b16 %v1691, %v1687
        %v1984 = vpack.c.b16 %v1692, %v1688
        %v1985 = vpack.c.b16 %v1697, %v1693
        %v1986 = vpack.c.b16 %v1698, %v1694
        %v1987 = vpack.c.b16 %v1699, %v1695
        %v1988 = vpack.c.b16 %v1700, %v1696
        %v1989 = vpack.c.b16 %v1705, %v1701
        %v1990 = vpack.c.b16 %v1706, %v1702
        %v1991 = vpack.c.b16 %v1707, %v1703
        %v1992 = vpack.c.b16 %v1708, %v1704
        %v1993 = vpack.c.b16 %v1713, %v1709
        %v1994 = vpack.c.b16 %v1714, %v1710
        %v1995 = vpack.c.b16 %v1715, %v1711
        %v1996 = vpack.c.b16 %v1716, %v1712
        %v1997 = vpack.c.b16 %v1721, %v1717
        %v1998 = vpack.c.b16 %v1722, %v1718
        %v1999 = vpack.c.b16 %v1723, %v1719
        %v2000 = vpack.c.b16 %v1724, %v1720
        %v2001 = vpack.c.b16 %v1729, %v1725
        %v2002 = vpack.c.b16 %v1730, %v1726
        %v2003 = vpack.c.b16 %v1731, %v1727
        %v2004 = vpack.c.b16 %v1732, %v1728
        %v2005 = vpack.c.b16 %v1737, %v1733
        %v2006 = vpack.c.b16 %v1738, %v1734
        %v2007 = vpack.c.b16 %v1739, %v1735
        %v2008 = vpack.c.b16 %v1740, %v1736
        %v2009 = vpack.c.b16 %v1745, %v1741
        %v2010 = vpack.c.b16 %v1746, %v1742
        %v2011 = vpack.c.b16 %v1747, %v1743
        %v2012 = vpack.c.b16 %v1748, %v1744
        %v2013 = vpack.c.b16 %v1753, %v1749
        %v2014 = vpack.c.b16 %v1754, %v1750
        %v2015 = vpack.c.b16 %v1755, %v1751
        %v2016 = vpack.c.b16 %v1756, %v1752
        %v2017 = vpack.c.b16 %v1761, %v1757
        %v2018 = vpack.c.b16 %v1762, %v1758
        %v2019 = vpack.c.b16 %v1763, %v1759
        %v2020 = vpack.c.b16 %v1764, %v1760
        %2277 = vmatpush.bf16.msra.mxu0 %v1793
        %2278 = vmatpush.bf16.msra.mxu0 %v1789
        %2279 = vmatpush.bf16.msra.mxu0 %v1785
        %2280 = vmatpush.bf16.msra.mxu0 %v1781
        %2281 = vmatpush.bf16.msra.mxu0 %v1777
        %2282 = vmatpush.bf16.msra.mxu0 %v1773
        %2283 = vmatpush.bf16.msra.mxu0 %v1769
        %2284 = vmatpush.bf16.msra.mxu0 %v1765
        %2285 = vmatmul.bf16.gmra.mxu0 %v981
        %v2286 = vpop.f32.mrf.mxu0
        %v2287 = vadd.f32 %v967, %v2286
        %v2288 = vpop.f32.mrf.mxu0
        %2289 = vdwg.mxu0
        %2290 = vmatpush.bf16.msra.mxu0 %v1825
        %2291 = vmatpush.bf16.msra.mxu0 %v1821
        %2292 = vmatpush.bf16.msra.mxu0 %v1817
        %2293 = vmatpush.bf16.msra.mxu0 %v1813
        %2294 = vmatpush.bf16.msra.mxu0 %v1809
        %2295 = vmatpush.bf16.msra.mxu0 %v1805
        %2296 = vmatpush.bf16.msra.mxu0 %v1801
        %2297 = vmatpush.bf16.msra.mxu0 %v1797
        %2298 = vmatmul.bf16.gmra.mxu0 %v982
        %v2299 = vpop.f32.mrf.mxu0
        %v2300 = vadd.f32 %v2287, %v2299
        %v2301 = vpop.f32.mrf.mxu0
        %2302 = vdwg.mxu0
        %2303 = vmatpush.bf16.msra.mxu0 %v1857
        %2304 = vmatpush.bf16.msra.mxu0 %v1853
        %2305 = vmatpush.bf16.msra.mxu0 %v1849
        %2306 = vmatpush.bf16.msra.mxu0 %v1845
        %2307 = vmatpush.bf16.msra.mxu0 %v1841
        %2308 = vmatpush.bf16.msra.mxu0 %v1837
        %2309 = vmatpush.bf16.msra.mxu0 %v1833
        %2310 = vmatpush.bf16.msra.mxu0 %v1829
        %2311 = vmatmul.bf16.gmra.mxu0 %v983
        %v2312 = vpop.f32.mrf.mxu0
        %v2313 = vadd.f32 %v2300, %v2312
        %v2314 = vpop.f32.mrf.mxu0
        %2315 = vdwg.mxu0
        %2316 = vmatpush.bf16.msra.mxu0 %v1889
        %2317 = vmatpush.bf16.msra.mxu0 %v1885
        %2318 = vmatpush.bf16.msra.mxu0 %v1881
        %2319 = vmatpush.bf16.msra.mxu0 %v1877
        %2320 = vmatpush.bf16.msra.mxu0 %v1873
        %2321 = vmatpush.bf16.msra.mxu0 %v1869
        %2322 = vmatpush.bf16.msra.mxu0 %v1865
        %2323 = vmatpush.bf16.msra.mxu0 %v1861
        %2324 = vmatmul.bf16.gmra.mxu0 %v984
        %v2325 = vpop.f32.mrf.mxu0
        %v2326 = vadd.f32 %v2313, %v2325
        %v2327 = vpop.f32.mrf.mxu0
        %2328 = vdwg.mxu0
        %2329 = vmatpush.bf16.msra.mxu0 %v1921
        %2330 = vmatpush.bf16.msra.mxu0 %v1917
        %2331 = vmatpush.bf16.msra.mxu0 %v1913
        %2332 = vmatpush.bf16.msra.mxu0 %v1909
        %2333 = vmatpush.bf16.msra.mxu0 %v1905
        %2334 = vmatpush.bf16.msra.mxu0 %v1901
        %2335 = vmatpush.bf16.msra.mxu0 %v1897
        %2336 = vmatpush.bf16.msra.mxu0 %v1893
        %2337 = vmatmul.bf16.gmra.mxu0 %v985
        %v2338 = vpop.f32.mrf.mxu0
        %v2339 = vadd.f32 %v2326, %v2338
        %v2340 = vpop.f32.mrf.mxu0
        %2341 = vdwg.mxu0
        %2342 = vmatpush.bf16.msra.mxu0 %v1953
        %2343 = vmatpush.bf16.msra.mxu0 %v1949
        %2344 = vmatpush.bf16.msra.mxu0 %v1945
        %2345 = vmatpush.bf16.msra.mxu0 %v1941
        %2346 = vmatpush.bf16.msra.mxu0 %v1937
        %2347 = vmatpush.bf16.msra.mxu0 %v1933
        %2348 = vmatpush.bf16.msra.mxu0 %v1929
        %2349 = vmatpush.bf16.msra.mxu0 %v1925
        %2350 = vmatmul.bf16.gmra.mxu0 %v986
        %v2351 = vpop.f32.mrf.mxu0
        %v2352 = vadd.f32 %v2339, %v2351
        %v2353 = vpop.f32.mrf.mxu0
        %2354 = vdwg.mxu0
        %2355 = vmatpush.bf16.msra.mxu0 %v1985
        %2356 = vmatpush.bf16.msra.mxu0 %v1981
        %2357 = vmatpush.bf16.msra.mxu0 %v1977
        %2358 = vmatpush.bf16.msra.mxu0 %v1973
        %2359 = vmatpush.bf16.msra.mxu0 %v1969
        %2360 = vmatpush.bf16.msra.mxu0 %v1965
        %2361 = vmatpush.bf16.msra.mxu0 %v1961
        %2362 = vmatpush.bf16.msra.mxu0 %v1957
        %2363 = vmatmul.bf16.gmra.mxu0 %v987
        %v2364 = vpop.f32.mrf.mxu0
        %v2365 = vadd.f32 %v2352, %v2364
        %v2366 = vpop.f32.mrf.mxu0
        %2367 = vdwg.mxu0
        %2368 = vmatpush.bf16.msra.mxu0 %v2017
        %2369 = vmatpush.bf16.msra.mxu0 %v2013
        %2370 = vmatpush.bf16.msra.mxu0 %v2009
        %2371 = vmatpush.bf16.msra.mxu0 %v2005
        %2372 = vmatpush.bf16.msra.mxu0 %v2001
        %2373 = vmatpush.bf16.msra.mxu0 %v1997
        %2374 = vmatpush.bf16.msra.mxu0 %v1993
        %2375 = vmatpush.bf16.msra.mxu0 %v1989
        %2376 = vmatmul.bf16.gmra.mxu0 %v988
        %v2377 = vpop.f32.mrf.mxu0
        %v2378 = vadd.f32 %v2365, %v2377
        %v2379 = vpop.f32.mrf.mxu0
        %2380 = vdwg.mxu0
        %2381 = vmatpush.bf16.msra.mxu0 %v1794
        %2382 = vmatpush.bf16.msra.mxu0 %v1790
        %2383 = vmatpush.bf16.msra.mxu0 %v1786
        %2384 = vmatpush.bf16.msra.mxu0 %v1782
        %2385 = vmatpush.bf16.msra.mxu0 %v1778
        %2386 = vmatpush.bf16.msra.mxu0 %v1774
        %2387 = vmatpush.bf16.msra.mxu0 %v1770
        %2388 = vmatpush.bf16.msra.mxu0 %v1766
        %2389 = vmatmul.bf16.gmra.mxu0 %v981
        %v2390 = vpop.f32.mrf.mxu0
        %v2391 = vadd.f32 %v967, %v2390
        %v2392 = vpop.f32.mrf.mxu0
        %2393 = vdwg.mxu0
        %2394 = vmatpush.bf16.msra.mxu0 %v1826
        %2395 = vmatpush.bf16.msra.mxu0 %v1822
        %2396 = vmatpush.bf16.msra.mxu0 %v1818
        %2397 = vmatpush.bf16.msra.mxu0 %v1814
        %2398 = vmatpush.bf16.msra.mxu0 %v1810
        %2399 = vmatpush.bf16.msra.mxu0 %v1806
        %2400 = vmatpush.bf16.msra.mxu0 %v1802
        %2401 = vmatpush.bf16.msra.mxu0 %v1798
        %2402 = vmatmul.bf16.gmra.mxu0 %v982
        %v2403 = vpop.f32.mrf.mxu0
        %v2404 = vadd.f32 %v2391, %v2403
        %v2405 = vpop.f32.mrf.mxu0
        %2406 = vdwg.mxu0
        %2407 = vmatpush.bf16.msra.mxu0 %v1858
        %2408 = vmatpush.bf16.msra.mxu0 %v1854
        %2409 = vmatpush.bf16.msra.mxu0 %v1850
        %2410 = vmatpush.bf16.msra.mxu0 %v1846
        %2411 = vmatpush.bf16.msra.mxu0 %v1842
        %2412 = vmatpush.bf16.msra.mxu0 %v1838
        %2413 = vmatpush.bf16.msra.mxu0 %v1834
        %2414 = vmatpush.bf16.msra.mxu0 %v1830
        %2415 = vmatmul.bf16.gmra.mxu0 %v983
        %v2416 = vpop.f32.mrf.mxu0
        %v2417 = vadd.f32 %v2404, %v2416
        %v2418 = vpop.f32.mrf.mxu0
        %2419 = vdwg.mxu0
        %2420 = vmatpush.bf16.msra.mxu0 %v1890
        %2421 = vmatpush.bf16.msra.mxu0 %v1886
        %2422 = vmatpush.bf16.msra.mxu0 %v1882
        %2423 = vmatpush.bf16.msra.mxu0 %v1878
        %2424 = vmatpush.bf16.msra.mxu0 %v1874
        %2425 = vmatpush.bf16.msra.mxu0 %v1870
        %2426 = vmatpush.bf16.msra.mxu0 %v1866
        %2427 = vmatpush.bf16.msra.mxu0 %v1862
        %2428 = vmatmul.bf16.gmra.mxu0 %v984
        %v2429 = vpop.f32.mrf.mxu0
        %v2430 = vadd.f32 %v2417, %v2429
        %v2431 = vpop.f32.mrf.mxu0
        %2432 = vdwg.mxu0
        %2433 = vmatpush.bf16.msra.mxu0 %v1922
        %2434 = vmatpush.bf16.msra.mxu0 %v1918
        %2435 = vmatpush.bf16.msra.mxu0 %v1914
        %2436 = vmatpush.bf16.msra.mxu0 %v1910
        %2437 = vmatpush.bf16.msra.mxu0 %v1906
        %2438 = vmatpush.bf16.msra.mxu0 %v1902
        %2439 = vmatpush.bf16.msra.mxu0 %v1898
        %2440 = vmatpush.bf16.msra.mxu0 %v1894
        %2441 = vmatmul.bf16.gmra.mxu0 %v985
        %v2442 = vpop.f32.mrf.mxu0
        %v2443 = vadd.f32 %v2430, %v2442
        %v2444 = vpop.f32.mrf.mxu0
        %2445 = vdwg.mxu0
        %2446 = vmatpush.bf16.msra.mxu0 %v1954
        %2447 = vmatpush.bf16.msra.mxu0 %v1950
        %2448 = vmatpush.bf16.msra.mxu0 %v1946
        %2449 = vmatpush.bf16.msra.mxu0 %v1942
        %2450 = vmatpush.bf16.msra.mxu0 %v1938
        %2451 = vmatpush.bf16.msra.mxu0 %v1934
        %2452 = vmatpush.bf16.msra.mxu0 %v1930
        %2453 = vmatpush.bf16.msra.mxu0 %v1926
        %2454 = vmatmul.bf16.gmra.mxu0 %v986
        %v2455 = vpop.f32.mrf.mxu0
        %v2456 = vadd.f32 %v2443, %v2455
        %v2457 = vpop.f32.mrf.mxu0
        %2458 = vdwg.mxu0
        %2459 = vmatpush.bf16.msra.mxu0 %v1986
        %2460 = vmatpush.bf16.msra.mxu0 %v1982
        %2461 = vmatpush.bf16.msra.mxu0 %v1978
        %2462 = vmatpush.bf16.msra.mxu0 %v1974
        %2463 = vmatpush.bf16.msra.mxu0 %v1970
        %2464 = vmatpush.bf16.msra.mxu0 %v1966
        %2465 = vmatpush.bf16.msra.mxu0 %v1962
        %2466 = vmatpush.bf16.msra.mxu0 %v1958
        %2467 = vmatmul.bf16.gmra.mxu0 %v987
        %v2468 = vpop.f32.mrf.mxu0
        %v2469 = vadd.f32 %v2456, %v2468
        %v2470 = vpop.f32.mrf.mxu0
        %2471 = vdwg.mxu0
        %2472 = vmatpush.bf16.msra.mxu0 %v2018
        %2473 = vmatpush.bf16.msra.mxu0 %v2014
        %2474 = vmatpush.bf16.msra.mxu0 %v2010
        %2475 = vmatpush.bf16.msra.mxu0 %v2006
        %2476 = vmatpush.bf16.msra.mxu0 %v2002
        %2477 = vmatpush.bf16.msra.mxu0 %v1998
        %2478 = vmatpush.bf16.msra.mxu0 %v1994
        %2479 = vmatpush.bf16.msra.mxu0 %v1990
        %2480 = vmatmul.bf16.gmra.mxu0 %v988
        %v2481 = vpop.f32.mrf.mxu0
        %v2482 = vadd.f32 %v2469, %v2481
        %v2483 = vpop.f32.mrf.mxu0
        %2484 = vdwg.mxu0
        %2485 = vmatpush.bf16.msra.mxu0 %v1795
        %2486 = vmatpush.bf16.msra.mxu0 %v1791
        %2487 = vmatpush.bf16.msra.mxu0 %v1787
        %2488 = vmatpush.bf16.msra.mxu0 %v1783
        %2489 = vmatpush.bf16.msra.mxu0 %v1779
        %2490 = vmatpush.bf16.msra.mxu0 %v1775
        %2491 = vmatpush.bf16.msra.mxu0 %v1771
        %2492 = vmatpush.bf16.msra.mxu0 %v1767
        %2493 = vmatmul.bf16.gmra.mxu0 %v981
        %v2494 = vpop.f32.mrf.mxu0
        %v2495 = vadd.f32 %v967, %v2494
        %v2496 = vpop.f32.mrf.mxu0
        %2497 = vdwg.mxu0
        %2498 = vmatpush.bf16.msra.mxu0 %v1827
        %2499 = vmatpush.bf16.msra.mxu0 %v1823
        %2500 = vmatpush.bf16.msra.mxu0 %v1819
        %2501 = vmatpush.bf16.msra.mxu0 %v1815
        %2502 = vmatpush.bf16.msra.mxu0 %v1811
        %2503 = vmatpush.bf16.msra.mxu0 %v1807
        %2504 = vmatpush.bf16.msra.mxu0 %v1803
        %2505 = vmatpush.bf16.msra.mxu0 %v1799
        %2506 = vmatmul.bf16.gmra.mxu0 %v982
        %v2507 = vpop.f32.mrf.mxu0
        %v2508 = vadd.f32 %v2495, %v2507
        %v2509 = vpop.f32.mrf.mxu0
        %2510 = vdwg.mxu0
        %2511 = vmatpush.bf16.msra.mxu0 %v1859
        %2512 = vmatpush.bf16.msra.mxu0 %v1855
        %2513 = vmatpush.bf16.msra.mxu0 %v1851
        %2514 = vmatpush.bf16.msra.mxu0 %v1847
        %2515 = vmatpush.bf16.msra.mxu0 %v1843
        %2516 = vmatpush.bf16.msra.mxu0 %v1839
        %2517 = vmatpush.bf16.msra.mxu0 %v1835
        %2518 = vmatpush.bf16.msra.mxu0 %v1831
        %2519 = vmatmul.bf16.gmra.mxu0 %v983
        %v2520 = vpop.f32.mrf.mxu0
        %v2521 = vadd.f32 %v2508, %v2520
        %v2522 = vpop.f32.mrf.mxu0
        %2523 = vdwg.mxu0
        %2524 = vmatpush.bf16.msra.mxu0 %v1891
        %2525 = vmatpush.bf16.msra.mxu0 %v1887
        %2526 = vmatpush.bf16.msra.mxu0 %v1883
        %2527 = vmatpush.bf16.msra.mxu0 %v1879
        %2528 = vmatpush.bf16.msra.mxu0 %v1875
        %2529 = vmatpush.bf16.msra.mxu0 %v1871
        %2530 = vmatpush.bf16.msra.mxu0 %v1867
        %2531 = vmatpush.bf16.msra.mxu0 %v1863
        %2532 = vmatmul.bf16.gmra.mxu0 %v984
        %v2533 = vpop.f32.mrf.mxu0
        %v2534 = vadd.f32 %v2521, %v2533
        %v2535 = vpop.f32.mrf.mxu0
        %2536 = vdwg.mxu0
        %2537 = vmatpush.bf16.msra.mxu0 %v1923
        %2538 = vmatpush.bf16.msra.mxu0 %v1919
        %2539 = vmatpush.bf16.msra.mxu0 %v1915
        %2540 = vmatpush.bf16.msra.mxu0 %v1911
        %2541 = vmatpush.bf16.msra.mxu0 %v1907
        %2542 = vmatpush.bf16.msra.mxu0 %v1903
        %2543 = vmatpush.bf16.msra.mxu0 %v1899
        %2544 = vmatpush.bf16.msra.mxu0 %v1895
        %2545 = vmatmul.bf16.gmra.mxu0 %v985
        %v2546 = vpop.f32.mrf.mxu0
        %v2547 = vadd.f32 %v2534, %v2546
        %v2548 = vpop.f32.mrf.mxu0
        %2549 = vdwg.mxu0
        %2550 = vmatpush.bf16.msra.mxu0 %v1955
        %2551 = vmatpush.bf16.msra.mxu0 %v1951
        %2552 = vmatpush.bf16.msra.mxu0 %v1947
        %2553 = vmatpush.bf16.msra.mxu0 %v1943
        %2554 = vmatpush.bf16.msra.mxu0 %v1939
        %2555 = vmatpush.bf16.msra.mxu0 %v1935
        %2556 = vmatpush.bf16.msra.mxu0 %v1931
        %2557 = vmatpush.bf16.msra.mxu0 %v1927
        %2558 = vmatmul.bf16.gmra.mxu0 %v986
        %v2559 = vpop.f32.mrf.mxu0
        %v2560 = vadd.f32 %v2547, %v2559
        %v2561 = vpop.f32.mrf.mxu0
        %2562 = vdwg.mxu0
        %2563 = vmatpush.bf16.msra.mxu0 %v1987
        %2564 = vmatpush.bf16.msra.mxu0 %v1983
        %2565 = vmatpush.bf16.msra.mxu0 %v1979
        %2566 = vmatpush.bf16.msra.mxu0 %v1975
        %2567 = vmatpush.bf16.msra.mxu0 %v1971
        %2568 = vmatpush.bf16.msra.mxu0 %v1967
        %2569 = vmatpush.bf16.msra.mxu0 %v1963
        %2570 = vmatpush.bf16.msra.mxu0 %v1959
        %2571 = vmatmul.bf16.gmra.mxu0 %v987
        %v2572 = vpop.f32.mrf.mxu0
        %v2573 = vadd.f32 %v2560, %v2572
        %v2574 = vpop.f32.mrf.mxu0
        %2575 = vdwg.mxu0
        %2576 = vmatpush.bf16.msra.mxu0 %v2019
        %2577 = vmatpush.bf16.msra.mxu0 %v2015
        %2578 = vmatpush.bf16.msra.mxu0 %v2011
        %2579 = vmatpush.bf16.msra.mxu0 %v2007
        %2580 = vmatpush.bf16.msra.mxu0 %v2003
        %2581 = vmatpush.bf16.msra.mxu0 %v1999
        %2582 = vmatpush.bf16.msra.mxu0 %v1995
        %2583 = vmatpush.bf16.msra.mxu0 %v1991
        %2584 = vmatmul.bf16.gmra.mxu0 %v988
        %v2585 = vpop.f32.mrf.mxu0
        %v2586 = vadd.f32 %v2573, %v2585
        %v2587 = vpop.f32.mrf.mxu0
        %2588 = vdwg.mxu0
        %2589 = vmatpush.bf16.msra.mxu0 %v1796
        %2590 = vmatpush.bf16.msra.mxu0 %v1792
        %2591 = vmatpush.bf16.msra.mxu0 %v1788
        %2592 = vmatpush.bf16.msra.mxu0 %v1784
        %2593 = vmatpush.bf16.msra.mxu0 %v1780
        %2594 = vmatpush.bf16.msra.mxu0 %v1776
        %2595 = vmatpush.bf16.msra.mxu0 %v1772
        %2596 = vmatpush.bf16.msra.mxu0 %v1768
        %2597 = vmatmul.bf16.gmra.mxu0 %v981
        %v2598 = vpop.f32.mrf.mxu0
        %v2599 = vadd.f32 %v967, %v2598
        %v2600 = vpop.f32.mrf.mxu0
        %2601 = vdwg.mxu0
        %2602 = vmatpush.bf16.msra.mxu0 %v1828
        %2603 = vmatpush.bf16.msra.mxu0 %v1824
        %2604 = vmatpush.bf16.msra.mxu0 %v1820
        %2605 = vmatpush.bf16.msra.mxu0 %v1816
        %2606 = vmatpush.bf16.msra.mxu0 %v1812
        %2607 = vmatpush.bf16.msra.mxu0 %v1808
        %2608 = vmatpush.bf16.msra.mxu0 %v1804
        %2609 = vmatpush.bf16.msra.mxu0 %v1800
        %2610 = vmatmul.bf16.gmra.mxu0 %v982
        %v2611 = vpop.f32.mrf.mxu0
        %v2612 = vadd.f32 %v2599, %v2611
        %v2613 = vpop.f32.mrf.mxu0
        %2614 = vdwg.mxu0
        %2615 = vmatpush.bf16.msra.mxu0 %v1860
        %2616 = vmatpush.bf16.msra.mxu0 %v1856
        %2617 = vmatpush.bf16.msra.mxu0 %v1852
        %2618 = vmatpush.bf16.msra.mxu0 %v1848
        %2619 = vmatpush.bf16.msra.mxu0 %v1844
        %2620 = vmatpush.bf16.msra.mxu0 %v1840
        %2621 = vmatpush.bf16.msra.mxu0 %v1836
        %2622 = vmatpush.bf16.msra.mxu0 %v1832
        %2623 = vmatmul.bf16.gmra.mxu0 %v983
        %v2624 = vpop.f32.mrf.mxu0
        %v2625 = vadd.f32 %v2612, %v2624
        %v2626 = vpop.f32.mrf.mxu0
        %2627 = vdwg.mxu0
        %2628 = vmatpush.bf16.msra.mxu0 %v1892
        %2629 = vmatpush.bf16.msra.mxu0 %v1888
        %2630 = vmatpush.bf16.msra.mxu0 %v1884
        %2631 = vmatpush.bf16.msra.mxu0 %v1880
        %2632 = vmatpush.bf16.msra.mxu0 %v1876
        %2633 = vmatpush.bf16.msra.mxu0 %v1872
        %2634 = vmatpush.bf16.msra.mxu0 %v1868
        %2635 = vmatpush.bf16.msra.mxu0 %v1864
        %2636 = vmatmul.bf16.gmra.mxu0 %v984
        %v2637 = vpop.f32.mrf.mxu0
        %v2638 = vadd.f32 %v2625, %v2637
        %v2639 = vpop.f32.mrf.mxu0
        %2640 = vdwg.mxu0
        %2641 = vmatpush.bf16.msra.mxu0 %v1924
        %2642 = vmatpush.bf16.msra.mxu0 %v1920
        %2643 = vmatpush.bf16.msra.mxu0 %v1916
        %2644 = vmatpush.bf16.msra.mxu0 %v1912
        %2645 = vmatpush.bf16.msra.mxu0 %v1908
        %2646 = vmatpush.bf16.msra.mxu0 %v1904
        %2647 = vmatpush.bf16.msra.mxu0 %v1900
        %2648 = vmatpush.bf16.msra.mxu0 %v1896
        %2649 = vmatmul.bf16.gmra.mxu0 %v985
        %v2650 = vpop.f32.mrf.mxu0
        %v2651 = vadd.f32 %v2638, %v2650
        %v2652 = vpop.f32.mrf.mxu0
        %2653 = vdwg.mxu0
        %2654 = vmatpush.bf16.msra.mxu0 %v1956
        %2655 = vmatpush.bf16.msra.mxu0 %v1952
        %2656 = vmatpush.bf16.msra.mxu0 %v1948
        %2657 = vmatpush.bf16.msra.mxu0 %v1944
        %2658 = vmatpush.bf16.msra.mxu0 %v1940
        %2659 = vmatpush.bf16.msra.mxu0 %v1936
        %2660 = vmatpush.bf16.msra.mxu0 %v1932
        %2661 = vmatpush.bf16.msra.mxu0 %v1928
        %2662 = vmatmul.bf16.gmra.mxu0 %v986
        %v2663 = vpop.f32.mrf.mxu0
        %v2664 = vadd.f32 %v2651, %v2663
        %v2665 = vpop.f32.mrf.mxu0
        %2666 = vdwg.mxu0
        %2667 = vmatpush.bf16.msra.mxu0 %v1988
        %2668 = vmatpush.bf16.msra.mxu0 %v1984
        %2669 = vmatpush.bf16.msra.mxu0 %v1980
        %2670 = vmatpush.bf16.msra.mxu0 %v1976
        %2671 = vmatpush.bf16.msra.mxu0 %v1972
        %2672 = vmatpush.bf16.msra.mxu0 %v1968
        %2673 = vmatpush.bf16.msra.mxu0 %v1964
        %2674 = vmatpush.bf16.msra.mxu0 %v1960
        %2675 = vmatmul.bf16.gmra.mxu0 %v987
        %v2676 = vpop.f32.mrf.mxu0
        %v2677 = vadd.f32 %v2664, %v2676
        %v2678 = vpop.f32.mrf.mxu0
        %2679 = vdwg.mxu0
        %2680 = vmatpush.bf16.msra.mxu0 %v2020
        %2681 = vmatpush.bf16.msra.mxu0 %v2016
        %2682 = vmatpush.bf16.msra.mxu0 %v2012
        %2683 = vmatpush.bf16.msra.mxu0 %v2008
        %2684 = vmatpush.bf16.msra.mxu0 %v2004
        %2685 = vmatpush.bf16.msra.mxu0 %v2000
        %2686 = vmatpush.bf16.msra.mxu0 %v1996
        %2687 = vmatpush.bf16.msra.mxu0 %v1992
        %2688 = vmatmul.bf16.gmra.mxu0 %v988
        %v2689 = vpop.f32.mrf.mxu0
        %v2690 = vadd.f32 %v2677, %v2689
        %v2691 = vpop.f32.mrf.mxu0
        %2692 = vdwg.mxu0
        %vm2693 = vcmp.gt.f32.partialorder %v2378, 0.0
        %vm2694 = vcmp.gt.f32.partialorder %v2482, 0.0
        %vm2695 = vcmp.gt.f32.partialorder %v2586, 0.0
        %vm2696 = vcmp.gt.f32.partialorder %v2690, 0.0
        %v2697 = vmul.f32 %v2378, 0.01
        %v2698 = vmul.f32 %v2482, 0.01
        %v2699 = vmul.f32 %v2586, 0.01
        %v2700 = vmul.f32 %v2690, 0.01
        %v2701 = vsel %vm2693, %v2378, %v2697
        %v2702 = vsel %vm2694, %v2482, %v2698
        %v2703 = vsel %vm2695, %v2586, %v2699
        %v2704 = vsel %vm2696, %v2690, %v2700
        %2705 = vst [vmem:[%s701] sm:$0xff] %v2701
        %2706 = vst [vmem:[%s701 + $0x8] sm:$0xff] %v2702
        %2707 = vst [vmem:[%s701 + $0x10] sm:$0xff] %v2703
        %2708 = vst [vmem:[%s701 + $0x18] sm:$0xff] %v2704
        %s2709 = smul.u32 4, %s14
        %p2710 = scmp.lt.s32.totalorder %s2709, 7
        %s2711 = scalar_select %p2710, %s2709, 7
        %s2712 = smul.addr %s2711, 8
        %s2713 = scalar_lea.vmem %s3, %s2712
        // Predicated region
        $region56: #{discriminator_forward.3} parent=50 // pred_check
          %p2714 = pneg %p100
        $region57: #{discriminator_forward.3} parent=50 // pred_check_branch
          %2716 = sbr.rel (%p2714) target = $region59
        $region58: #{discriminator_forward.3} parent=50 // pred_region
          %s2717 = smul.u32 4, %s14
        $region59: #{discriminator_forward.3} parent=50 // pred_fallthru
          _
      $region51: #{discriminator_forward.3} parent=5 // pred_fallthru
        _
      %p2718 = scmp.le.s32.totalorder 2, %s9
      // Predicated region
      $region60: #{discriminator_forward.3} parent=5 // pred_check
        %p2719 = pneg %p2718
      $region61: #{discriminator_forward.3} parent=5 // pred_check_branch
        %2721 = sbr.rel (%p2719) target = $region63
      $region62: #{discriminator_forward.3} parent=5 // pred_region
        %s2722 = ssub.s32 %s9, 2
        // Predicated region
        $region64: #{discriminator_forward.3} parent=62 // pred_check
          %p2723 = pneg %p106
        $region65: #{discriminator_forward.3} parent=62 // pred_check_branch
          %2725 = sbr.rel (%p2723) target = $region67
        $region66: #{discriminator_forward.3} parent=62 // pred_region
          %s2726 = smul.u32 4, %s15
          %p2727 = scmp.lt.s32.totalorder %s2726, 7
          %s2728 = scalar_select %p2727, %s2726, 7
          %s2729 = smul.addr %s2728, 8
          %s2730 = scalar_lea.vmem %s3, %s2729
        $region67: #{discriminator_forward.3} parent=62 // pred_fallthru
          _
      $region63: #{discriminator_forward.3} parent=5 // pred_fallthru
        _
    $region6: #{discriminator_forward.3} parent=1 // loop_footer
      %s13 = sadd.s32 1, %s9
    $region7: #{discriminator_forward.3} parent=1 // loop_footer_branch
      %8 = sbr.rel target = $region3
    $region8: #{discriminator_forward.3} parent=1 // loop_exit
      _

// kernel: discriminator_forward.4
$region0: #{discriminator_forward.4}
  #allocation0 [shape = 'u32[]', space=smem, size = 0x4, offset = 0x4, fixed_abs, tag = 'smem constant byte address 0x4 - core index']
  #allocation1 [shape = 'u32[72,128]{1,0:T(1,128)}', space=vmem, size = 0x9000, scoped, tag = 'internal scratch']
  %s0 = inlined_call_operand.vmem [shape: bf16[16,512], index: 0, kind: input, shape index: {}]
  %s1 = inlined_call_operand.vmem [shape: bf16[512,128], index: 1, kind: input, shape index: {}]
  %s2 = inlined_call_operand.vmem [shape: f32[16,1], index: 2, kind: input, shape index: {}]
  %s3 = inlined_call_operand.vmem [shape: f32[16,128], index: 3, kind: output, shape index: {}]
  %s4 = sld [smem:[#allocation0]]
  $region22: #{discriminator_forward.4} parent=0
    _
  %s6 = ssub.s32 1, %s4
  %s7 = scalar_select 0, %s6, %s4
  // Predicated region
  $region2: #{discriminator_forward.4} parent=0 // pred_check
    _
  $region3: #{discriminator_forward.4} parent=0 // pred_check_branch
    %9 = sbr.rel (0) target = $region5
  $region4: #{discriminator_forward.4} parent=0 // pred_region
    _
  $region5: #{discriminator_forward.4} parent=0 // pred_fallthru
    _
  // Predicated region
  $region6: #{discriminator_forward.4} parent=0 // pred_check
    _
  $region7: #{discriminator_forward.4} parent=0 // pred_check_branch
    %11 = sbr.rel (0) target = $region9
  $region8: #{discriminator_forward.4} parent=0 // pred_region
    _
  $region9: #{discriminator_forward.4} parent=0 // pred_fallthru
    _
  // Predicated region
  $region10: #{discriminator_forward.4} parent=0 // pred_check
    _
  $region11: #{discriminator_forward.4} parent=0 // pred_check_branch
    %13 = sbr.rel (0) target = $region13
  $region12: #{discriminator_forward.4} parent=0 // pred_region
    _
  $region13: #{discriminator_forward.4} parent=0 // pred_fallthru
    _
  %v14 = vld [vmem:[%s0] sm:$0xff]
  %v15 = vld [vmem:[%s0 + $0x8] sm:$0xff]
  %v16 = vld [vmem:[%s0 + $0x10] sm:$0xff]
  %v17 = vld [vmem:[%s0 + $0x18] sm:$0xff]
  %v18 = vld [vmem:[%s1] sm:$0xf]
  %v19 = vld [vmem:[%s1 + $0x4] sm:$0xf]
  %v20 = vld [vmem:[%s1 + $0x8] sm:$0xf]
  %v21 = vld [vmem:[%s1 + $0xc] sm:$0xf]
  %v22 = vld [vmem:[%s1 + $0x10] sm:$0xf]
  %v23 = vld [vmem:[%s1 + $0x14] sm:$0xf]
  %v24 = vld [vmem:[%s1 + $0x18] sm:$0xf]
  %v25 = vld [vmem:[%s1 + $0x1c] sm:$0xf]
  %v26 = vld [vmem:[%s1 + $0x20] sm:$0xf]
  %v27 = vld [vmem:[%s1 + $0x24] sm:$0xf]
  %v28 = vld [vmem:[%s1 + $0x28] sm:$0xf]
  %v29 = vld [vmem:[%s1 + $0x2c] sm:$0xf]
  %v30 = vld [vmem:[%s1 + $0x30] sm:$0xf]
  %v31 = vld [vmem:[%s1 + $0x34] sm:$0xf]
  %v32 = vld [vmem:[%s1 + $0x38] sm:$0xf]
  %v33 = vld [vmem:[%s1 + $0x3c] sm:$0xf]
  %v34 = vld [vmem:[%s1 + $0x40] sm:$0xf]
  %v35 = vld [vmem:[%s1 + $0x44] sm:$0xf]
  %v36 = vld [vmem:[%s1 + $0x48] sm:$0xf]
  %v37 = vld [vmem:[%s1 + $0x4c] sm:$0xf]
  %v38 = vld [vmem:[%s1 + $0x50] sm:$0xf]
  %v39 = vld [vmem:[%s1 + $0x54] sm:$0xf]
  %v40 = vld [vmem:[%s1 + $0x58] sm:$0xf]
  %v41 = vld [vmem:[%s1 + $0x5c] sm:$0xf]
  %v42 = vld [vmem:[%s1 + $0x60] sm:$0xf]
  %v43 = vld [vmem:[%s1 + $0x64] sm:$0xf]
  %v44 = vld [vmem:[%s1 + $0x68] sm:$0xf]
  %v45 = vld [vmem:[%s1 + $0x6c] sm:$0xf]
  %v46 = vld [vmem:[%s1 + $0x70] sm:$0xf]
  %v47 = vld [vmem:[%s1 + $0x74] sm:$0xf]
  %v48 = vld [vmem:[%s1 + $0x78] sm:$0xf]
  %v49 = vld [vmem:[%s1 + $0x7c] sm:$0xf]
  %v50 = vld [vmem:[%s1 + $0x80] sm:$0xf]
  %v51 = vld [vmem:[%s1 + $0x84] sm:$0xf]
  %v52 = vld [vmem:[%s1 + $0x88] sm:$0xf]
  %v53 = vld [vmem:[%s1 + $0x8c] sm:$0xf]
  %v54 = vld [vmem:[%s1 + $0x90] sm:$0xf]
  %v55 = vld [vmem:[%s1 + $0x94] sm:$0xf]
  %v56 = vld [vmem:[%s1 + $0x98] sm:$0xf]
  %v57 = vld [vmem:[%s1 + $0x9c] sm:$0xf]
  %v58 = vld [vmem:[%s1 + $0xa0] sm:$0xf]
  %v59 = vld [vmem:[%s1 + $0xa4] sm:$0xf]
  %v60 = vld [vmem:[%s1 + $0xa8] sm:$0xf]
  %v61 = vld [vmem:[%s1 + $0xac] sm:$0xf]
  %v62 = vld [vmem:[%s1 + $0xb0] sm:$0xf]
  %v63 = vld [vmem:[%s1 + $0xb4] sm:$0xf]
  %v64 = vld [vmem:[%s1 + $0xb8] sm:$0xf]
  %v65 = vld [vmem:[%s1 + $0xbc] sm:$0xf]
  %v66 = vld [vmem:[%s1 + $0xc0] sm:$0xf]
  %v67 = vld [vmem:[%s1 + $0xc4] sm:$0xf]
  %v68 = vld [vmem:[%s1 + $0xc8] sm:$0xf]
  %v69 = vld [vmem:[%s1 + $0xcc] sm:$0xf]
  %v70 = vld [vmem:[%s1 + $0xd0] sm:$0xf]
  %v71 = vld [vmem:[%s1 + $0xd4] sm:$0xf]
  %v72 = vld [vmem:[%s1 + $0xd8] sm:$0xf]
  %v73 = vld [vmem:[%s1 + $0xdc] sm:$0xf]
  %v74 = vld [vmem:[%s1 + $0xe0] sm:$0xf]
  %v75 = vld [vmem:[%s1 + $0xe4] sm:$0xf]
  %v76 = vld [vmem:[%s1 + $0xe8] sm:$0xf]
  %v77 = vld [vmem:[%s1 + $0xec] sm:$0xf]
  %v78 = vld [vmem:[%s1 + $0xf0] sm:$0xf]
  %v79 = vld [vmem:[%s1 + $0xf4] sm:$0xf]
  %v80 = vld [vmem:[%s1 + $0xf8] sm:$0xf]
  %v81 = vld [vmem:[%s1 + $0xfc] sm:$0xf]
  %v82 = vld [vmem:[%s2] sm:$0xff]
  %v83 = vld [vmem:[%s2 + $0x8] sm:$0xff]
  %85 = vset.pattern.permute.xlu0 0
  %86 = vperm.xlu0 %85, %v82
  %v87 = vpop.permute.xlu0 %86
  %90 = vset.pattern.permute.xlu0 0
  %91 = vperm.xlu0 %90, %v83
  %v92 = vpop.permute.xlu0 %91
  %v98 = vunpack.c.l.b16 %v14
  %v99 = vunpack.c.h.b16 %v14
  %v100 = vunpack.c.l.b16 %v15
  %v101 = vunpack.c.h.b16 %v15
  %v102 = vunpack.c.l.b16 %v16
  %v103 = vunpack.c.h.b16 %v16
  %v104 = vunpack.c.l.b16 %v17
  %v105 = vunpack.c.h.b16 %v17
  %v106 = vpack.c.b16 %v102, %v98
  %v107 = vpack.c.b16 %v103, %v99
  %v108 = vpack.c.b16 %v104, %v100
  %v109 = vpack.c.b16 %v105, %v101
  %v178 = vunpack.c.l.b16 %v18
  %v179 = vunpack.c.l.b16 %v19
  %v180 = vunpack.c.l.b16 %v20
  %v181 = vunpack.c.l.b16 %v21
  %v182 = vunpack.c.l.b16 %v22
  %v183 = vunpack.c.l.b16 %v23
  %v184 = vunpack.c.l.b16 %v24
  %v185 = vunpack.c.l.b16 %v25
  %v186 = vunpack.c.l.b16 %v26
  %v187 = vunpack.c.l.b16 %v27
  %v188 = vunpack.c.l.b16 %v28
  %v189 = vunpack.c.l.b16 %v29
  %v190 = vunpack.c.l.b16 %v30
  %v191 = vunpack.c.l.b16 %v31
  %v192 = vunpack.c.l.b16 %v32
  %v193 = vunpack.c.l.b16 %v33
  %v194 = vunpack.c.l.b16 %v34
  %v195 = vunpack.c.l.b16 %v35
  %v196 = vunpack.c.l.b16 %v36
  %v197 = vunpack.c.l.b16 %v37
  %v198 = vunpack.c.l.b16 %v38
  %v199 = vunpack.c.l.b16 %v39
  %v200 = vunpack.c.l.b16 %v40
  %v201 = vunpack.c.l.b16 %v41
  %v202 = vunpack.c.l.b16 %v42
  %v203 = vunpack.c.l.b16 %v43
  %v204 = vunpack.c.l.b16 %v44
  %v205 = vunpack.c.l.b16 %v45
  %v206 = vunpack.c.l.b16 %v46
  %v207 = vunpack.c.l.b16 %v47
  %v208 = vunpack.c.l.b16 %v48
  %v209 = vunpack.c.l.b16 %v49
  %v210 = vunpack.c.l.b16 %v50
  %v211 = vunpack.c.l.b16 %v51
  %v212 = vunpack.c.l.b16 %v52
  %v213 = vunpack.c.l.b16 %v53
  %v214 = vunpack.c.l.b16 %v54
  %v215 = vunpack.c.l.b16 %v55
  %v216 = vunpack.c.l.b16 %v56
  %v217 = vunpack.c.l.b16 %v57
  %v218 = vunpack.c.l.b16 %v58
  %v219 = vunpack.c.l.b16 %v59
  %v220 = vunpack.c.l.b16 %v60
  %v221 = vunpack.c.l.b16 %v61
  %v222 = vunpack.c.l.b16 %v62
  %v223 = vunpack.c.l.b16 %v63
  %v224 = vunpack.c.l.b16 %v64
  %v225 = vunpack.c.l.b16 %v65
  %v226 = vunpack.c.l.b16 %v66
  %v227 = vunpack.c.l.b16 %v67
  %v228 = vunpack.c.l.b16 %v68
  %v229 = vunpack.c.l.b16 %v69
  %v230 = vunpack.c.l.b16 %v70
  %v231 = vunpack.c.l.b16 %v71
  %v232 = vunpack.c.l.b16 %v72
  %v233 = vunpack.c.l.b16 %v73
  %v234 = vunpack.c.l.b16 %v74
  %v235 = vunpack.c.l.b16 %v75
  %v236 = vunpack.c.l.b16 %v76
  %v237 = vunpack.c.l.b16 %v77
  %v238 = vunpack.c.l.b16 %v78
  %v239 = vunpack.c.l.b16 %v79
  %v240 = vunpack.c.l.b16 %v80
  %v241 = vunpack.c.l.b16 %v81
  %v242 = vpack.c.b16 %v179, %v178
  %v243 = vpack.c.b16 %v181, %v180
  %v244 = vpack.c.b16 %v183, %v182
  %v245 = vpack.c.b16 %v185, %v184
  %v246 = vpack.c.b16 %v187, %v186
  %v247 = vpack.c.b16 %v189, %v188
  %v248 = vpack.c.b16 %v191, %v190
  %v249 = vpack.c.b16 %v193, %v192
  %v250 = vpack.c.b16 %v195, %v194
  %v251 = vpack.c.b16 %v197, %v196
  %v252 = vpack.c.b16 %v199, %v198
  %v253 = vpack.c.b16 %v201, %v200
  %v254 = vpack.c.b16 %v203, %v202
  %v255 = vpack.c.b16 %v205, %v204
  %v256 = vpack.c.b16 %v207, %v206
  %v257 = vpack.c.b16 %v209, %v208
  %v258 = vpack.c.b16 %v211, %v210
  %v259 = vpack.c.b16 %v213, %v212
  %v260 = vpack.c.b16 %v215, %v214
  %v261 = vpack.c.b16 %v217, %v216
  %v262 = vpack.c.b16 %v219, %v218
  %v263 = vpack.c.b16 %v221, %v220
  %v264 = vpack.c.b16 %v223, %v222
  %v265 = vpack.c.b16 %v225, %v224
  %v266 = vpack.c.b16 %v227, %v226
  %v267 = vpack.c.b16 %v229, %v228
  %v268 = vpack.c.b16 %v231, %v230
  %v269 = vpack.c.b16 %v233, %v232
  %v270 = vpack.c.b16 %v235, %v234
  %v271 = vpack.c.b16 %v237, %v236
  %v272 = vpack.c.b16 %v239, %v238
  %v273 = vpack.c.b16 %v241, %v240
  %306 = vmatpush.bf16.msra.mxu0 %v249
  %307 = vmatpush.bf16.msra.mxu0 %v248
  %308 = vmatpush.bf16.msra.mxu0 %v247
  %309 = vmatpush.bf16.msra.mxu0 %v246
  %310 = vmatpush.bf16.msra.mxu0 %v245
  %311 = vmatpush.bf16.msra.mxu0 %v244
  %312 = vmatpush.bf16.msra.mxu0 %v243
  %313 = vmatpush.bf16.msra.mxu0 %v242
  %314 = vmatmul.bf16.gmra.mxu0 %v106
  %v315 = vpop.f32.mrf.mxu0
  %v316 = vadd.f32 %v87, %v315
  %v317 = vpop.f32.mrf.mxu0
  %v318 = vadd.f32 %v92, %v317
  %319 = vdwg.mxu0
  %320 = vmatpush.bf16.msra.mxu0 %v257
  %321 = vmatpush.bf16.msra.mxu0 %v256
  %322 = vmatpush.bf16.msra.mxu0 %v255
  %323 = vmatpush.bf16.msra.mxu0 %v254
  %324 = vmatpush.bf16.msra.mxu0 %v253
  %325 = vmatpush.bf16.msra.mxu0 %v252
  %326 = vmatpush.bf16.msra.mxu0 %v251
  %327 = vmatpush.bf16.msra.mxu0 %v250
  %328 = vmatmul.bf16.gmra.mxu0 %v107
  %v329 = vpop.f32.mrf.mxu0
  %v330 = vadd.f32 %v316, %v329
  %v331 = vpop.f32.mrf.mxu0
  %v332 = vadd.f32 %v318, %v331
  %333 = vdwg.mxu0
  %334 = vmatpush.bf16.msra.mxu0 %v265
  %335 = vmatpush.bf16.msra.mxu0 %v264
  %336 = vmatpush.bf16.msra.mxu0 %v263
  %337 = vmatpush.bf16.msra.mxu0 %v262
  %338 = vmatpush.bf16.msra.mxu0 %v261
  %339 = vmatpush.bf16.msra.mxu0 %v260
  %340 = vmatpush.bf16.msra.mxu0 %v259
  %341 = vmatpush.bf16.msra.mxu0 %v258
  %342 = vmatmul.bf16.gmra.mxu0 %v108
  %v343 = vpop.f32.mrf.mxu0
  %v344 = vadd.f32 %v330, %v343
  %v345 = vpop.f32.mrf.mxu0
  %v346 = vadd.f32 %v332, %v345
  %347 = vdwg.mxu0
  %348 = vmatpush.bf16.msra.mxu0 %v273
  %349 = vmatpush.bf16.msra.mxu0 %v272
  %350 = vmatpush.bf16.msra.mxu0 %v271
  %351 = vmatpush.bf16.msra.mxu0 %v270
  %352 = vmatpush.bf16.msra.mxu0 %v269
  %353 = vmatpush.bf16.msra.mxu0 %v268
  %354 = vmatpush.bf16.msra.mxu0 %v267
  %355 = vmatpush.bf16.msra.mxu0 %v266
  %356 = vmatmul.bf16.gmra.mxu0 %v109
  %v357 = vpop.f32.mrf.mxu0
  %v358 = vadd.f32 %v344, %v357
  %v359 = vpop.f32.mrf.mxu0
  %v360 = vadd.f32 %v346, %v359
  %361 = vdwg.mxu0
  %vm362 = vcmp.gt.f32.partialorder %v358, 0.0
  %vm363 = vcmp.gt.f32.partialorder %v360, 0.0
  %v364 = vmul.f32 %v358, 0.01
  %v365 = vmul.f32 %v360, 0.01
  %v366 = vsel %vm362, %v358, %v364
  %v367 = vsel %vm363, %v360, %v365
  %368 = vst [vmem:[%s3] sm:$0xff] %v366
  %369 = vst [vmem:[%s3 + $0x8] sm:$0xff] %v367
  // Predicated region
  $region14: #{discriminator_forward.4} parent=0 // pred_check
    _
  $region15: #{discriminator_forward.4} parent=0 // pred_check_branch
    %371 = sbr.rel (0) target = $region17
  $region16: #{discriminator_forward.4} parent=0 // pred_region
    _
  $region17: #{discriminator_forward.4} parent=0 // pred_fallthru
    _
  // Predicated region
  $region18: #{discriminator_forward.4} parent=0 // pred_check
    _
  $region19: #{discriminator_forward.4} parent=0 // pred_check_branch
    %373 = sbr.rel (0) target = $region21
  $region20: #{discriminator_forward.4} parent=0 // pred_region
    _
  $region21: #{discriminator_forward.4} parent=0 // pred_fallthru
    _

// kernel: discriminator_forward.5
$region0: #{discriminator_forward.5}
  #allocation0 [shape = 'u32[]', space=smem, size = 0x4, offset = 0x4, fixed_abs, tag = 'smem constant byte address 0x4 - core index']
  #allocation1 [shape = 'u32[72,128]{1,0:T(1,128)}', space=vmem, size = 0x9000, scoped, tag = 'internal scratch']
  %s0 = inlined_call_operand.vmem [shape: bf16[8,512], index: 0, kind: input, shape index: {}]
  %s1 = inlined_call_operand.vmem [shape: bf16[512,128], index: 1, kind: input, shape index: {}]
  %s2 = inlined_call_operand.vmem [shape: bf16[8,1024], index: 2, kind: input, shape index: {}]
  %s3 = inlined_call_operand.vmem [shape: bf16[1024,128], index: 3, kind: input, shape index: {}]
  %s4 = inlined_call_operand.vmem [shape: f32[8,128], index: 4, kind: output, shape index: {0}]
  %s5 = inlined_call_operand.vmem [shape: f32[8,128], index: 5, kind: output, shape index: {1}]
  %6 = xla_tuple %s4, %s5
  %s7 = sld [smem:[#allocation0]]
  $region34: #{discriminator_forward.5} parent=0
    _
  %s9 = ssub.s32 1, %s7
  %s10 = scalar_select 0, %s9, %s7
  // Predicated region
  $region2: #{discriminator_forward.5} parent=0 // pred_check
    _
  $region3: #{discriminator_forward.5} parent=0 // pred_check_branch
    %12 = sbr.rel (0) target = $region5
  $region4: #{discriminator_forward.5} parent=0 // pred_region
    _
  $region5: #{discriminator_forward.5} parent=0 // pred_fallthru
    _
  // Predicated region
  $region6: #{discriminator_forward.5} parent=0 // pred_check
    _
  $region7: #{discriminator_forward.5} parent=0 // pred_check_branch
    %14 = sbr.rel (0) target = $region9
  $region8: #{discriminator_forward.5} parent=0 // pred_region
    _
  $region9: #{discriminator_forward.5} parent=0 // pred_fallthru
    _
  // Predicated region
  $region10: #{discriminator_forward.5} parent=0 // pred_check
    _
  $region11: #{discriminator_forward.5} parent=0 // pred_check_branch
    %16 = sbr.rel (0) target = $region13
  $region12: #{discriminator_forward.5} parent=0 // pred_region
    _
  $region13: #{discriminator_forward.5} parent=0 // pred_fallthru
    _
  // Predicated region
  $region14: #{discriminator_forward.5} parent=0 // pred_check
    _
  $region15: #{discriminator_forward.5} parent=0 // pred_check_branch
    %18 = sbr.rel (0) target = $region17
  $region16: #{discriminator_forward.5} parent=0 // pred_region
    _
  $region17: #{discriminator_forward.5} parent=0 // pred_fallthru
    _
  %v19 = vld [vmem:[%s0] sm:$0xff]
  %v20 = vld [vmem:[%s0 + $0x8] sm:$0xff]
  %v21 = vld [vmem:[%s1] sm:$0xf]
  %v22 = vld [vmem:[%s1 + $0x4] sm:$0xf]
  %v23 = vld [vmem:[%s1 + $0x8] sm:$0xf]
  %v24 = vld [vmem:[%s1 + $0xc] sm:$0xf]
  %v25 = vld [vmem:[%s1 + $0x10] sm:$0xf]
  %v26 = vld [vmem:[%s1 + $0x14] sm:$0xf]
  %v27 = vld [vmem:[%s1 + $0x18] sm:$0xf]
  %v28 = vld [vmem:[%s1 + $0x1c] sm:$0xf]
  %v29 = vld [vmem:[%s1 + $0x20] sm:$0xf]
  %v30 = vld [vmem:[%s1 + $0x24] sm:$0xf]
  %v31 = vld [vmem:[%s1 + $0x28] sm:$0xf]
  %v32 = vld [vmem:[%s1 + $0x2c] sm:$0xf]
  %v33 = vld [vmem:[%s1 + $0x30] sm:$0xf]
  %v34 = vld [vmem:[%s1 + $0x34] sm:$0xf]
  %v35 = vld [vmem:[%s1 + $0x38] sm:$0xf]
  %v36 = vld [vmem:[%s1 + $0x3c] sm:$0xf]
  %v37 = vld [vmem:[%s1 + $0x40] sm:$0xf]
  %v38 = vld [vmem:[%s1 + $0x44] sm:$0xf]
  %v39 = vld [vmem:[%s1 + $0x48] sm:$0xf]
  %v40 = vld [vmem:[%s1 + $0x4c] sm:$0xf]
  %v41 = vld [vmem:[%s1 + $0x50] sm:$0xf]
  %v42 = vld [vmem:[%s1 + $0x54] sm:$0xf]
  %v43 = vld [vmem:[%s1 + $0x58] sm:$0xf]
  %v44 = vld [vmem:[%s1 + $0x5c] sm:$0xf]
  %v45 = vld [vmem:[%s1 + $0x60] sm:$0xf]
  %v46 = vld [vmem:[%s1 + $0x64] sm:$0xf]
  %v47 = vld [vmem:[%s1 + $0x68] sm:$0xf]
  %v48 = vld [vmem:[%s1 + $0x6c] sm:$0xf]
  %v49 = vld [vmem:[%s1 + $0x70] sm:$0xf]
  %v50 = vld [vmem:[%s1 + $0x74] sm:$0xf]
  %v51 = vld [vmem:[%s1 + $0x78] sm:$0xf]
  %v52 = vld [vmem:[%s1 + $0x7c] sm:$0xf]
  %v53 = vld [vmem:[%s1 + $0x80] sm:$0xf]
  %v54 = vld [vmem:[%s1 + $0x84] sm:$0xf]
  %v55 = vld [vmem:[%s1 + $0x88] sm:$0xf]
  %v56 = vld [vmem:[%s1 + $0x8c] sm:$0xf]
  %v57 = vld [vmem:[%s1 + $0x90] sm:$0xf]
  %v58 = vld [vmem:[%s1 + $0x94] sm:$0xf]
  %v59 = vld [vmem:[%s1 + $0x98] sm:$0xf]
  %v60 = vld [vmem:[%s1 + $0x9c] sm:$0xf]
  %v61 = vld [vmem:[%s1 + $0xa0] sm:$0xf]
  %v62 = vld [vmem:[%s1 + $0xa4] sm:$0xf]
  %v63 = vld [vmem:[%s1 + $0xa8] sm:$0xf]
  %v64 = vld [vmem:[%s1 + $0xac] sm:$0xf]
  %v65 = vld [vmem:[%s1 + $0xb0] sm:$0xf]
  %v66 = vld [vmem:[%s1 + $0xb4] sm:$0xf]
  %v67 = vld [vmem:[%s1 + $0xb8] sm:$0xf]
  %v68 = vld [vmem:[%s1 + $0xbc] sm:$0xf]
  %v69 = vld [vmem:[%s1 + $0xc0] sm:$0xf]
  %v70 = vld [vmem:[%s1 + $0xc4] sm:$0xf]
  %v71 = vld [vmem:[%s1 + $0xc8] sm:$0xf]
  %v72 = vld [vmem:[%s1 + $0xcc] sm:$0xf]
  %v73 = vld [vmem:[%s1 + $0xd0] sm:$0xf]
  %v74 = vld [vmem:[%s1 + $0xd4] sm:$0xf]
  %v75 = vld [vmem:[%s1 + $0xd8] sm:$0xf]
  %v76 = vld [vmem:[%s1 + $0xdc] sm:$0xf]
  %v77 = vld [vmem:[%s1 + $0xe0] sm:$0xf]
  %v78 = vld [vmem:[%s1 + $0xe4] sm:$0xf]
  %v79 = vld [vmem:[%s1 + $0xe8] sm:$0xf]
  %v80 = vld [vmem:[%s1 + $0xec] sm:$0xf]
  %v81 = vld [vmem:[%s1 + $0xf0] sm:$0xf]
  %v82 = vld [vmem:[%s1 + $0xf4] sm:$0xf]
  %v83 = vld [vmem:[%s1 + $0xf8] sm:$0xf]
  %v84 = vld [vmem:[%s1 + $0xfc] sm:$0xf]
  %v87 = vunpack.c.l.b16 %v19
  %v88 = vunpack.c.h.b16 %v19
  %v89 = vunpack.c.l.b16 %v20
  %v90 = vunpack.c.h.b16 %v20
  %v91 = vpack.c.b16 %v87, %v87
  %v92 = vpack.c.b16 %v88, %v88
  %v93 = vpack.c.b16 %v89, %v89
  %v94 = vpack.c.b16 %v90, %v90
  %v163 = vunpack.c.l.b16 %v21
  %v164 = vunpack.c.l.b16 %v22
  %v165 = vunpack.c.l.b16 %v23
  %v166 = vunpack.c.l.b16 %v24
  %v167 = vunpack.c.l.b16 %v25
  %v168 = vunpack.c.l.b16 %v26
  %v169 = vunpack.c.l.b16 %v27
  %v170 = vunpack.c.l.b16 %v28
  %v171 = vunpack.c.l.b16 %v29
  %v172 = vunpack.c.l.b16 %v30
  %v173 = vunpack.c.l.b16 %v31
  %v174 = vunpack.c.l.b16 %v32
  %v175 = vunpack.c.l.b16 %v33
  %v176 = vunpack.c.l.b16 %v34
  %v177 = vunpack.c.l.b16 %v35
  %v178 = vunpack.c.l.b16 %v36
  %v179 = vunpack.c.l.b16 %v37
  %v180 = vunpack.c.l.b16 %v38
  %v181 = vunpack.c.l.b16 %v39
  %v182 = vunpack.c.l.b16 %v40
  %v183 = vunpack.c.l.b16 %v41
  %v184 = vunpack.c.l.b16 %v42
  %v185 = vunpack.c.l.b16 %v43
  %v186 = vunpack.c.l.b16 %v44
  %v187 = vunpack.c.l.b16 %v45
  %v188 = vunpack.c.l.b16 %v46
  %v189 = vunpack.c.l.b16 %v47
  %v190 = vunpack.c.l.b16 %v48
  %v191 = vunpack.c.l.b16 %v49
  %v192 = vunpack.c.l.b16 %v50
  %v193 = vunpack.c.l.b16 %v51
  %v194 = vunpack.c.l.b16 %v52
  %v195 = vunpack.c.l.b16 %v53
  %v196 = vunpack.c.l.b16 %v54
  %v197 = vunpack.c.l.b16 %v55
  %v198 = vunpack.c.l.b16 %v56
  %v199 = vunpack.c.l.b16 %v57
  %v200 = vunpack.c.l.b16 %v58
  %v201 = vunpack.c.l.b16 %v59
  %v202 = vunpack.c.l.b16 %v60
  %v203 = vunpack.c.l.b16 %v61
  %v204 = vunpack.c.l.b16 %v62
  %v205 = vunpack.c.l.b16 %v63
  %v206 = vunpack.c.l.b16 %v64
  %v207 = vunpack.c.l.b16 %v65
  %v208 = vunpack.c.l.b16 %v66
  %v209 = vunpack.c.l.b16 %v67
  %v210 = vunpack.c.l.b16 %v68
  %v211 = vunpack.c.l.b16 %v69
  %v212 = vunpack.c.l.b16 %v70
  %v213 = vunpack.c.l.b16 %v71
  %v214 = vunpack.c.l.b16 %v72
  %v215 = vunpack.c.l.b16 %v73
  %v216 = vunpack.c.l.b16 %v74
  %v217 = vunpack.c.l.b16 %v75
  %v218 = vunpack.c.l.b16 %v76
  %v219 = vunpack.c.l.b16 %v77
  %v220 = vunpack.c.l.b16 %v78
  %v221 = vunpack.c.l.b16 %v79
  %v222 = vunpack.c.l.b16 %v80
  %v223 = vunpack.c.l.b16 %v81
  %v224 = vunpack.c.l.b16 %v82
  %v225 = vunpack.c.l.b16 %v83
  %v226 = vunpack.c.l.b16 %v84
  %v227 = vpack.c.b16 %v164, %v163
  %v228 = vpack.c.b16 %v166, %v165
  %v229 = vpack.c.b16 %v168, %v167
  %v230 = vpack.c.b16 %v170, %v169
  %v231 = vpack.c.b16 %v172, %v171
  %v232 = vpack.c.b16 %v174, %v173
  %v233 = vpack.c.b16 %v176, %v175
  %v234 = vpack.c.b16 %v178, %v177
  %v235 = vpack.c.b16 %v180, %v179
  %v236 = vpack.c.b16 %v182, %v181
  %v237 = vpack.c.b16 %v184, %v183
  %v238 = vpack.c.b16 %v186, %v185
  %v239 = vpack.c.b16 %v188, %v187
  %v240 = vpack.c.b16 %v190, %v189
  %v241 = vpack.c.b16 %v192, %v191
  %v242 = vpack.c.b16 %v194, %v193
  %v243 = vpack.c.b16 %v196, %v195
  %v244 = vpack.c.b16 %v198, %v197
  %v245 = vpack.c.b16 %v200, %v199
  %v246 = vpack.c.b16 %v202, %v201
  %v247 = vpack.c.b16 %v204, %v203
  %v248 = vpack.c.b16 %v206, %v205
  %v249 = vpack.c.b16 %v208, %v207
  %v250 = vpack.c.b16 %v210, %v209
  %v251 = vpack.c.b16 %v212, %v211
  %v252 = vpack.c.b16 %v214, %v213
  %v253 = vpack.c.b16 %v216, %v215
  %v254 = vpack.c.b16 %v218, %v217
  %v255 = vpack.c.b16 %v220, %v219
  %v256 = vpack.c.b16 %v222, %v221
  %v257 = vpack.c.b16 %v224, %v223
  %v258 = vpack.c.b16 %v226, %v225
  %291 = vmatpush.bf16.msra.mxu0 %v234
  %292 = vmatpush.bf16.msra.mxu0 %v233
  %293 = vmatpush.bf16.msra.mxu0 %v232
  %294 = vmatpush.bf16.msra.mxu0 %v231
  %295 = vmatpush.bf16.msra.mxu0 %v230
  %296 = vmatpush.bf16.msra.mxu0 %v229
  %297 = vmatpush.bf16.msra.mxu0 %v228
  %298 = vmatpush.bf16.msra.mxu0 %v227
  %299 = vmatmul.bf16.gmra.mxu0 %v91
  %v300 = vpop.f32.mrf.mxu0
  %v301 = vadd.f32 0.0, %v300
  %v302 = vpop.f32.mrf.mxu0
  %303 = vdwg.mxu0
  %304 = vmatpush.bf16.msra.mxu0 %v242
  %305 = vmatpush.bf16.msra.mxu0 %v241
  %306 = vmatpush.bf16.msra.mxu0 %v240
  %307 = vmatpush.bf16.msra.mxu0 %v239
  %308 = vmatpush.bf16.msra.mxu0 %v238
  %309 = vmatpush.bf16.msra.mxu0 %v237
  %310 = vmatpush.bf16.msra.mxu0 %v236
  %311 = vmatpush.bf16.msra.mxu0 %v235
  %312 = vmatmul.bf16.gmra.mxu0 %v92
  %v313 = vpop.f32.mrf.mxu0
  %v314 = vadd.f32 %v301, %v313
  %v315 = vpop.f32.mrf.mxu0
  %316 = vdwg.mxu0
  %317 = vmatpush.bf16.msra.mxu0 %v250
  %318 = vmatpush.bf16.msra.mxu0 %v249
  %319 = vmatpush.bf16.msra.mxu0 %v248
  %320 = vmatpush.bf16.msra.mxu0 %v247
  %321 = vmatpush.bf16.msra.mxu0 %v246
  %322 = vmatpush.bf16.msra.mxu0 %v245
  %323 = vmatpush.bf16.msra.mxu0 %v244
  %324 = vmatpush.bf16.msra.mxu0 %v243
  %325 = vmatmul.bf16.gmra.mxu0 %v93
  %v326 = vpop.f32.mrf.mxu0
  %v327 = vadd.f32 %v314, %v326
  %v328 = vpop.f32.mrf.mxu0
  %329 = vdwg.mxu0
  %330 = vmatpush.bf16.msra.mxu0 %v258
  %331 = vmatpush.bf16.msra.mxu0 %v257
  %332 = vmatpush.bf16.msra.mxu0 %v256
  %333 = vmatpush.bf16.msra.mxu0 %v255
  %334 = vmatpush.bf16.msra.mxu0 %v254
  %335 = vmatpush.bf16.msra.mxu0 %v253
  %336 = vmatpush.bf16.msra.mxu0 %v252
  %337 = vmatpush.bf16.msra.mxu0 %v251
  %338 = vmatmul.bf16.gmra.mxu0 %v94
  %v339 = vpop.f32.mrf.mxu0
  %v340 = vadd.f32 %v327, %v339
  %v341 = vpop.f32.mrf.mxu0
  %342 = vdwg.mxu0
  %343 = vst [vmem:[%s4] sm:$0xff] %v340
  %v344 = vld [vmem:[%s2] sm:$0xff]
  %v345 = vld [vmem:[%s2 + $0x8] sm:$0xff]
  %v346 = vld [vmem:[%s2 + $0x10] sm:$0xff]
  %v347 = vld [vmem:[%s2 + $0x18] sm:$0xff]
  %v348 = vld [vmem:[%s3] sm:$0xf]
  %v349 = vld [vmem:[%s3 + $0x4] sm:$0xf]
  %v350 = vld [vmem:[%s3 + $0x8] sm:$0xf]
  %v351 = vld [vmem:[%s3 + $0xc] sm:$0xf]
  %v352 = vld [vmem:[%s3 + $0x10] sm:$0xf]
  %v353 = vld [vmem:[%s3 + $0x14] sm:$0xf]
  %v354 = vld [vmem:[%s3 + $0x18] sm:$0xf]
  %v355 = vld [vmem:[%s3 + $0x1c] sm:$0xf]
  %v356 = vld [vmem:[%s3 + $0x20] sm:$0xf]
  %v357 = vld [vmem:[%s3 + $0x24] sm:$0xf]
  %v358 = vld [vmem:[%s3 + $0x28] sm:$0xf]
  %v359 = vld [vmem:[%s3 + $0x2c] sm:$0xf]
  %v360 = vld [vmem:[%s3 + $0x30] sm:$0xf]
  %v361 = vld [vmem:[%s3 + $0x34] sm:$0xf]
  %v362 = vld [vmem:[%s3 + $0x38] sm:$0xf]
  %v363 = vld [vmem:[%s3 + $0x3c] sm:$0xf]
  %v364 = vld [vmem:[%s3 + $0x40] sm:$0xf]
  %v365 = vld [vmem:[%s3 + $0x44] sm:$0xf]
  %v366 = vld [vmem:[%s3 + $0x48] sm:$0xf]
  %v367 = vld [vmem:[%s3 + $0x4c] sm:$0xf]
  %v368 = vld [vmem:[%s3 + $0x50] sm:$0xf]
  %v369 = vld [vmem:[%s3 + $0x54] sm:$0xf]
  %v370 = vld [vmem:[%s3 + $0x58] sm:$0xf]
  %v371 = vld [vmem:[%s3 + $0x5c] sm:$0xf]
  %v372 = vld [vmem:[%s3 + $0x60] sm:$0xf]
  %v373 = vld [vmem:[%s3 + $0x64] sm:$0xf]
  %v374 = vld [vmem:[%s3 + $0x68] sm:$0xf]
  %v375 = vld [vmem:[%s3 + $0x6c] sm:$0xf]
  %v376 = vld [vmem:[%s3 + $0x70] sm:$0xf]
  %v377 = vld [vmem:[%s3 + $0x74] sm:$0xf]
  %v378 = vld [vmem:[%s3 + $0x78] sm:$0xf]
  %v379 = vld [vmem:[%s3 + $0x7c] sm:$0xf]
  %v380 = vld [vmem:[%s3 + $0x80] sm:$0xf]
  %v381 = vld [vmem:[%s3 + $0x84] sm:$0xf]
  %v382 = vld [vmem:[%s3 + $0x88] sm:$0xf]
  %v383 = vld [vmem:[%s3 + $0x8c] sm:$0xf]
  %v384 = vld [vmem:[%s3 + $0x90] sm:$0xf]
  %v385 = vld [vmem:[%s3 + $0x94] sm:$0xf]
  %v386 = vld [vmem:[%s3 + $0x98] sm:$0xf]
  %v387 = vld [vmem:[%s3 + $0x9c] sm:$0xf]
  %v388 = vld [vmem:[%s3 + $0xa0] sm:$0xf]
  %v389 = vld [vmem:[%s3 + $0xa4] sm:$0xf]
  %v390 = vld [vmem:[%s3 + $0xa8] sm:$0xf]
  %v391 = vld [vmem:[%s3 + $0xac] sm:$0xf]
  %v392 = vld [vmem:[%s3 + $0xb0] sm:$0xf]
  %v393 = vld [vmem:[%s3 + $0xb4] sm:$0xf]
  %v394 = vld [vmem:[%s3 + $0xb8] sm:$0xf]
  %v395 = vld [vmem:[%s3 + $0xbc] sm:$0xf]
  %v396 = vld [vmem:[%s3 + $0xc0] sm:$0xf]
  %v397 = vld [vmem:[%s3 + $0xc4] sm:$0xf]
  %v398 = vld [vmem:[%s3 + $0xc8] sm:$0xf]
  %v399 = vld [vmem:[%s3 + $0xcc] sm:$0xf]
  %v400 = vld [vmem:[%s3 + $0xd0] sm:$0xf]
  %v401 = vld [vmem:[%s3 + $0xd4] sm:$0xf]
  %v402 = vld [vmem:[%s3 + $0xd8] sm:$0xf]
  %v403 = vld [vmem:[%s3 + $0xdc] sm:$0xf]
  %v404 = vld [vmem:[%s3 + $0xe0] sm:$0xf]
  %v405 = vld [vmem:[%s3 + $0xe4] sm:$0xf]
  %v406 = vld [vmem:[%s3 + $0xe8] sm:$0xf]
  %v407 = vld [vmem:[%s3 + $0xec] sm:$0xf]
  %v408 = vld [vmem:[%s3 + $0xf0] sm:$0xf]
  %v409 = vld [vmem:[%s3 + $0xf4] sm:$0xf]
  %v410 = vld [vmem:[%s3 + $0xf8] sm:$0xf]
  %v411 = vld [vmem:[%s3 + $0xfc] sm:$0xf]
  %v412 = vld [vmem:[%s3 + $0x100] sm:$0xf]
  %v413 = vld [vmem:[%s3 + $0x104] sm:$0xf]
  %v414 = vld [vmem:[%s3 + $0x108] sm:$0xf]
  %v415 = vld [vmem:[%s3 + $0x10c] sm:$0xf]
  %v416 = vld [vmem:[%s3 + $0x110] sm:$0xf]
  %v417 = vld [vmem:[%s3 + $0x114] sm:$0xf]
  %v418 = vld [vmem:[%s3 + $0x118] sm:$0xf]
  %v419 = vld [vmem:[%s3 + $0x11c] sm:$0xf]
  %v420 = vld [vmem:[%s3 + $0x120] sm:$0xf]
  %v421 = vld [vmem:[%s3 + $0x124] sm:$0xf]
  %v422 = vld [vmem:[%s3 + $0x128] sm:$0xf]
  %v423 = vld [vmem:[%s3 + $0x12c] sm:$0xf]
  %v424 = vld [vmem:[%s3 + $0x130] sm:$0xf]
  %v425 = vld [vmem:[%s3 + $0x134] sm:$0xf]
  %v426 = vld [vmem:[%s3 + $0x138] sm:$0xf]
  %v427 = vld [vmem:[%s3 + $0x13c] sm:$0xf]
  %v428 = vld [vmem:[%s3 + $0x140] sm:$0xf]
  %v429 = vld [vmem:[%s3 + $0x144] sm:$0xf]
  %v430 = vld [vmem:[%s3 + $0x148] sm:$0xf]
  %v431 = vld [vmem:[%s3 + $0x14c] sm:$0xf]
  %v432 = vld [vmem:[%s3 + $0x150] sm:$0xf]
  %v433 = vld [vmem:[%s3 + $0x154] sm:$0xf]
  %v434 = vld [vmem:[%s3 + $0x158] sm:$0xf]
  %v435 = vld [vmem:[%s3 + $0x15c] sm:$0xf]
  %v436 = vld [vmem:[%s3 + $0x160] sm:$0xf]
  %v437 = vld [vmem:[%s3 + $0x164] sm:$0xf]
  %v438 = vld [vmem:[%s3 + $0x168] sm:$0xf]
  %v439 = vld [vmem:[%s3 + $0x16c] sm:$0xf]
  %v440 = vld [vmem:[%s3 + $0x170] sm:$0xf]
  %v441 = vld [vmem:[%s3 + $0x174] sm:$0xf]
  %v442 = vld [vmem:[%s3 + $0x178] sm:$0xf]
  %v443 = vld [vmem:[%s3 + $0x17c] sm:$0xf]
  %v444 = vld [vmem:[%s3 + $0x180] sm:$0xf]
  %v445 = vld [vmem:[%s3 + $0x184] sm:$0xf]
  %v446 = vld [vmem:[%s3 + $0x188] sm:$0xf]
  %v447 = vld [vmem:[%s3 + $0x18c] sm:$0xf]
  %v448 = vld [vmem:[%s3 + $0x190] sm:$0xf]
  %v449 = vld [vmem:[%s3 + $0x194] sm:$0xf]
  %v450 = vld [vmem:[%s3 + $0x198] sm:$0xf]
  %v451 = vld [vmem:[%s3 + $0x19c] sm:$0xf]
  %v452 = vld [vmem:[%s3 + $0x1a0] sm:$0xf]
  %v453 = vld [vmem:[%s3 + $0x1a4] sm:$0xf]
  %v454 = vld [vmem:[%s3 + $0x1a8] sm:$0xf]
  %v455 = vld [vmem:[%s3 + $0x1ac] sm:$0xf]
  %v456 = vld [vmem:[%s3 + $0x1b0] sm:$0xf]
  %v457 = vld [vmem:[%s3 + $0x1b4] sm:$0xf]
  %v458 = vld [vmem:[%s3 + $0x1b8] sm:$0xf]
  %v459 = vld [vmem:[%s3 + $0x1bc] sm:$0xf]
  %v460 = vld [vmem:[%s3 + $0x1c0] sm:$0xf]
  %v461 = vld [vmem:[%s3 + $0x1c4] sm:$0xf]
  %v462 = vld [vmem:[%s3 + $0x1c8] sm:$0xf]
  %v463 = vld [vmem:[%s3 + $0x1cc] sm:$0xf]
  %v464 = vld [vmem:[%s3 + $0x1d0] sm:$0xf]
  %v465 = vld [vmem:[%s3 + $0x1d4] sm:$0xf]
  %v466 = vld [vmem:[%s3 + $0x1d8] sm:$0xf]
  %v467 = vld [vmem:[%s3 + $0x1dc] sm:$0xf]
  %v468 = vld [vmem:[%s3 + $0x1e0] sm:$0xf]
  %v469 = vld [vmem:[%s3 + $0x1e4] sm:$0xf]
  %v470 = vld [vmem:[%s3 + $0x1e8] sm:$0xf]
  %v471 = vld [vmem:[%s3 + $0x1ec] sm:$0xf]
  %v472 = vld [vmem:[%s3 + $0x1f0] sm:$0xf]
  %v473 = vld [vmem:[%s3 + $0x1f4] sm:$0xf]
  %v474 = vld [vmem:[%s3 + $0x1f8] sm:$0xf]
  %v475 = vld [vmem:[%s3 + $0x1fc] sm:$0xf]
  %v480 = vunpack.c.l.b16 %v344
  %v481 = vunpack.c.h.b16 %v344
  %v482 = vunpack.c.l.b16 %v345
  %v483 = vunpack.c.h.b16 %v345
  %v484 = vunpack.c.l.b16 %v346
  %v485 = vunpack.c.h.b16 %v346
  %v486 = vunpack.c.l.b16 %v347
  %v487 = vunpack.c.h.b16 %v347
  %v488 = vpack.c.b16 %v480, %v480
  %v489 = vpack.c.b16 %v481, %v481
  %v490 = vpack.c.b16 %v482, %v482
  %v491 = vpack.c.b16 %v483, %v483
  %v492 = vpack.c.b16 %v484, %v484
  %v493 = vpack.c.b16 %v485, %v485
  %v494 = vpack.c.b16 %v486, %v486
  %v495 = vpack.c.b16 %v487, %v487
  %v632 = vunpack.c.l.b16 %v348
  %v633 = vunpack.c.l.b16 %v349
  %v634 = vunpack.c.l.b16 %v350
  %v635 = vunpack.c.l.b16 %v351
  %v636 = vunpack.c.l.b16 %v352
  %v637 = vunpack.c.l.b16 %v353
  %v638 = vunpack.c.l.b16 %v354
  %v639 = vunpack.c.l.b16 %v355
  %v640 = vunpack.c.l.b16 %v356
  %v641 = vunpack.c.l.b16 %v357
  %v642 = vunpack.c.l.b16 %v358
  %v643 = vunpack.c.l.b16 %v359
  %v644 = vunpack.c.l.b16 %v360
  %v645 = vunpack.c.l.b16 %v361
  %v646 = vunpack.c.l.b16 %v362
  %v647 = vunpack.c.l.b16 %v363
  %v648 = vunpack.c.l.b16 %v364
  %v649 = vunpack.c.l.b16 %v365
  %v650 = vunpack.c.l.b16 %v366
  %v651 = vunpack.c.l.b16 %v367
  %v652 = vunpack.c.l.b16 %v368
  %v653 = vunpack.c.l.b16 %v369
  %v654 = vunpack.c.l.b16 %v370
  %v655 = vunpack.c.l.b16 %v371
  %v656 = vunpack.c.l.b16 %v372
  %v657 = vunpack.c.l.b16 %v373
  %v658 = vunpack.c.l.b16 %v374
  %v659 = vunpack.c.l.b16 %v375
  %v660 = vunpack.c.l.b16 %v376
  %v661 = vunpack.c.l.b16 %v377
  %v662 = vunpack.c.l.b16 %v378
  %v663 = vunpack.c.l.b16 %v379
  %v664 = vunpack.c.l.b16 %v380
  %v665 = vunpack.c.l.b16 %v381
  %v666 = vunpack.c.l.b16 %v382
  %v667 = vunpack.c.l.b16 %v383
  %v668 = vunpack.c.l.b16 %v384
  %v669 = vunpack.c.l.b16 %v385
  %v670 = vunpack.c.l.b16 %v386
  %v671 = vunpack.c.l.b16 %v387
  %v672 = vunpack.c.l.b16 %v388
  %v673 = vunpack.c.l.b16 %v389
  %v674 = vunpack.c.l.b16 %v390
  %v675 = vunpack.c.l.b16 %v391
  %v676 = vunpack.c.l.b16 %v392
  %v677 = vunpack.c.l.b16 %v393
  %v678 = vunpack.c.l.b16 %v394
  %v679 = vunpack.c.l.b16 %v395
  %v680 = vunpack.c.l.b16 %v396
  %v681 = vunpack.c.l.b16 %v397
  %v682 = vunpack.c.l.b16 %v398
  %v683 = vunpack.c.l.b16 %v399
  %v684 = vunpack.c.l.b16 %v400
  %v685 = vunpack.c.l.b16 %v401
  %v686 = vunpack.c.l.b16 %v402
  %v687 = vunpack.c.l.b16 %v403
  %v688 = vunpack.c.l.b16 %v404
  %v689 = vunpack.c.l.b16 %v405
  %v690 = vunpack.c.l.b16 %v406
  %v691 = vunpack.c.l.b16 %v407
  %v692 = vunpack.c.l.b16 %v408
  %v693 = vunpack.c.l.b16 %v409
  %v694 = vunpack.c.l.b16 %v410
  %v695 = vunpack.c.l.b16 %v411
  %v696 = vunpack.c.l.b16 %v412
  %v697 = vunpack.c.l.b16 %v413
  %v698 = vunpack.c.l.b16 %v414
  %v699 = vunpack.c.l.b16 %v415
  %v700 = vunpack.c.l.b16 %v416
  %v701 = vunpack.c.l.b16 %v417
  %v702 = vunpack.c.l.b16 %v418
  %v703 = vunpack.c.l.b16 %v419
  %v704 = vunpack.c.l.b16 %v420
  %v705 = vunpack.c.l.b16 %v421
  %v706 = vunpack.c.l.b16 %v422
  %v707 = vunpack.c.l.b16 %v423
  %v708 = vunpack.c.l.b16 %v424
  %v709 = vunpack.c.l.b16 %v425
  %v710 = vunpack.c.l.b16 %v426
  %v711 = vunpack.c.l.b16 %v427
  %v712 = vunpack.c.l.b16 %v428
  %v713 = vunpack.c.l.b16 %v429
  %v714 = vunpack.c.l.b16 %v430
  %v715 = vunpack.c.l.b16 %v431
  %v716 = vunpack.c.l.b16 %v432
  %v717 = vunpack.c.l.b16 %v433
  %v718 = vunpack.c.l.b16 %v434
  %v719 = vunpack.c.l.b16 %v435
  %v720 = vunpack.c.l.b16 %v436
  %v721 = vunpack.c.l.b16 %v437
  %v722 = vunpack.c.l.b16 %v438
  %v723 = vunpack.c.l.b16 %v439
  %v724 = vunpack.c.l.b16 %v440
  %v725 = vunpack.c.l.b16 %v441
  %v726 = vunpack.c.l.b16 %v442
  %v727 = vunpack.c.l.b16 %v443
  %v728 = vunpack.c.l.b16 %v444
  %v729 = vunpack.c.l.b16 %v445
  %v730 = vunpack.c.l.b16 %v446
  %v731 = vunpack.c.l.b16 %v447
  %v732 = vunpack.c.l.b16 %v448
  %v733 = vunpack.c.l.b16 %v449
  %v734 = vunpack.c.l.b16 %v450
  %v735 = vunpack.c.l.b16 %v451
  %v736 = vunpack.c.l.b16 %v452
  %v737 = vunpack.c.l.b16 %v453
  %v738 = vunpack.c.l.b16 %v454
  %v739 = vunpack.c.l.b16 %v455
  %v740 = vunpack.c.l.b16 %v456
  %v741 = vunpack.c.l.b16 %v457
  %v742 = vunpack.c.l.b16 %v458
  %v743 = vunpack.c.l.b16 %v459
  %v744 = vunpack.c.l.b16 %v460
  %v745 = vunpack.c.l.b16 %v461
  %v746 = vunpack.c.l.b16 %v462
  %v747 = vunpack.c.l.b16 %v463
  %v748 = vunpack.c.l.b16 %v464
  %v749 = vunpack.c.l.b16 %v465
  %v750 = vunpack.c.l.b16 %v466
  %v751 = vunpack.c.l.b16 %v467
  %v752 = vunpack.c.l.b16 %v468
  %v753 = vunpack.c.l.b16 %v469
  %v754 = vunpack.c.l.b16 %v470
  %v755 = vunpack.c.l.b16 %v471
  %v756 = vunpack.c.l.b16 %v472
  %v757 = vunpack.c.l.b16 %v473
  %v758 = vunpack.c.l.b16 %v474
  %v759 = vunpack.c.l.b16 %v475
  %v760 = vpack.c.b16 %v633, %v632
  %v761 = vpack.c.b16 %v635, %v634
  %v762 = vpack.c.b16 %v637, %v636
  %v763 = vpack.c.b16 %v639, %v638
  %v764 = vpack.c.b16 %v641, %v640
  %v765 = vpack.c.b16 %v643, %v642
  %v766 = vpack.c.b16 %v645, %v644
  %v767 = vpack.c.b16 %v647, %v646
  %v768 = vpack.c.b16 %v649, %v648
  %v769 = vpack.c.b16 %v651, %v650
  %v770 = vpack.c.b16 %v653, %v652
  %v771 = vpack.c.b16 %v655, %v654
  %v772 = vpack.c.b16 %v657, %v656
  %v773 = vpack.c.b16 %v659, %v658
  %v774 = vpack.c.b16 %v661, %v660
  %v775 = vpack.c.b16 %v663, %v662
  %v776 = vpack.c.b16 %v665, %v664
  %v777 = vpack.c.b16 %v667, %v666
  %v778 = vpack.c.b16 %v669, %v668
  %v779 = vpack.c.b16 %v671, %v670
  %v780 = vpack.c.b16 %v673, %v672
  %v781 = vpack.c.b16 %v675, %v674
  %v782 = vpack.c.b16 %v677, %v676
  %v783 = vpack.c.b16 %v679, %v678
  %v784 = vpack.c.b16 %v681, %v680
  %v785 = vpack.c.b16 %v683, %v682
  %v786 = vpack.c.b16 %v685, %v684
  %v787 = vpack.c.b16 %v687, %v686
  %v788 = vpack.c.b16 %v689, %v688
  %v789 = vpack.c.b16 %v691, %v690
  %v790 = vpack.c.b16 %v693, %v692
  %v791 = vpack.c.b16 %v695, %v694
  %v792 = vpack.c.b16 %v697, %v696
  %v793 = vpack.c.b16 %v699, %v698
  %v794 = vpack.c.b16 %v701, %v700
  %v795 = vpack.c.b16 %v703, %v702
  %v796 = vpack.c.b16 %v705, %v704
  %v797 = vpack.c.b16 %v707, %v706
  %v798 = vpack.c.b16 %v709, %v708
  %v799 = vpack.c.b16 %v711, %v710
  %v800 = vpack.c.b16 %v713, %v712
  %v801 = vpack.c.b16 %v715, %v714
  %v802 = vpack.c.b16 %v717, %v716
  %v803 = vpack.c.b16 %v719, %v718
  %v804 = vpack.c.b16 %v721, %v720
  %v805 = vpack.c.b16 %v723, %v722
  %v806 = vpack.c.b16 %v725, %v724
  %v807 = vpack.c.b16 %v727, %v726
  %v808 = vpack.c.b16 %v729, %v728
  %v809 = vpack.c.b16 %v731, %v730
  %v810 = vpack.c.b16 %v733, %v732
  %v811 = vpack.c.b16 %v735, %v734
  %v812 = vpack.c.b16 %v737, %v736
  %v813 = vpack.c.b16 %v739, %v738
  %v814 = vpack.c.b16 %v741, %v740
  %v815 = vpack.c.b16 %v743, %v742
  %v816 = vpack.c.b16 %v745, %v744
  %v817 = vpack.c.b16 %v747, %v746
  %v818 = vpack.c.b16 %v749, %v748
  %v819 = vpack.c.b16 %v751, %v750
  %v820 = vpack.c.b16 %v753, %v752
  %v821 = vpack.c.b16 %v755, %v754
  %v822 = vpack.c.b16 %v757, %v756
  %v823 = vpack.c.b16 %v759, %v758
  %888 = vmatpush.bf16.msra.mxu0 %v767
  %889 = vmatpush.bf16.msra.mxu0 %v766
  %890 = vmatpush.bf16.msra.mxu0 %v765
  %891 = vmatpush.bf16.msra.mxu0 %v764
  %892 = vmatpush.bf16.msra.mxu0 %v763
  %893 = vmatpush.bf16.msra.mxu0 %v762
  %894 = vmatpush.bf16.msra.mxu0 %v761
  %895 = vmatpush.bf16.msra.mxu0 %v760
  %896 = vmatmul.bf16.gmra.mxu0 %v488
  %v897 = vpop.f32.mrf.mxu0
  %v898 = vadd.f32 0.0, %v897
  %v899 = vpop.f32.mrf.mxu0
  %900 = vdwg.mxu0
  %901 = vmatpush.bf16.msra.mxu0 %v775
  %902 = vmatpush.bf16.msra.mxu0 %v774
  %903 = vmatpush.bf16.msra.mxu0 %v773
  %904 = vmatpush.bf16.msra.mxu0 %v772
  %905 = vmatpush.bf16.msra.mxu0 %v771
  %906 = vmatpush.bf16.msra.mxu0 %v770
  %907 = vmatpush.bf16.msra.mxu0 %v769
  %908 = vmatpush.bf16.msra.mxu0 %v768
  %909 = vmatmul.bf16.gmra.mxu0 %v489
  %v910 = vpop.f32.mrf.mxu0
  %v911 = vadd.f32 %v898, %v910
  %v912 = vpop.f32.mrf.mxu0
  %913 = vdwg.mxu0
  %914 = vmatpush.bf16.msra.mxu0 %v783
  %915 = vmatpush.bf16.msra.mxu0 %v782
  %916 = vmatpush.bf16.msra.mxu0 %v781
  %917 = vmatpush.bf16.msra.mxu0 %v780
  %918 = vmatpush.bf16.msra.mxu0 %v779
  %919 = vmatpush.bf16.msra.mxu0 %v778
  %920 = vmatpush.bf16.msra.mxu0 %v777
  %921 = vmatpush.bf16.msra.mxu0 %v776
  %922 = vmatmul.bf16.gmra.mxu0 %v490
  %v923 = vpop.f32.mrf.mxu0
  %v924 = vadd.f32 %v911, %v923
  %v925 = vpop.f32.mrf.mxu0
  %926 = vdwg.mxu0
  %927 = vmatpush.bf16.msra.mxu0 %v791
  %928 = vmatpush.bf16.msra.mxu0 %v790
  %929 = vmatpush.bf16.msra.mxu0 %v789
  %930 = vmatpush.bf16.msra.mxu0 %v788
  %931 = vmatpush.bf16.msra.mxu0 %v787
  %932 = vmatpush.bf16.msra.mxu0 %v786
  %933 = vmatpush.bf16.msra.mxu0 %v785
  %934 = vmatpush.bf16.msra.mxu0 %v784
  %935 = vmatmul.bf16.gmra.mxu0 %v491
  %v936 = vpop.f32.mrf.mxu0
  %v937 = vadd.f32 %v924, %v936
  %v938 = vpop.f32.mrf.mxu0
  %939 = vdwg.mxu0
  %940 = vmatpush.bf16.msra.mxu0 %v799
  %941 = vmatpush.bf16.msra.mxu0 %v798
  %942 = vmatpush.bf16.msra.mxu0 %v797
  %943 = vmatpush.bf16.msra.mxu0 %v796
  %944 = vmatpush.bf16.msra.mxu0 %v795
  %945 = vmatpush.bf16.msra.mxu0 %v794
  %946 = vmatpush.bf16.msra.mxu0 %v793
  %947 = vmatpush.bf16.msra.mxu0 %v792
  %948 = vmatmul.bf16.gmra.mxu0 %v492
  %v949 = vpop.f32.mrf.mxu0
  %v950 = vadd.f32 %v937, %v949
  %v951 = vpop.f32.mrf.mxu0
  %952 = vdwg.mxu0
  %953 = vmatpush.bf16.msra.mxu0 %v807
  %954 = vmatpush.bf16.msra.mxu0 %v806
  %955 = vmatpush.bf16.msra.mxu0 %v805
  %956 = vmatpush.bf16.msra.mxu0 %v804
  %957 = vmatpush.bf16.msra.mxu0 %v803
  %958 = vmatpush.bf16.msra.mxu0 %v802
  %959 = vmatpush.bf16.msra.mxu0 %v801
  %960 = vmatpush.bf16.msra.mxu0 %v800
  %961 = vmatmul.bf16.gmra.mxu0 %v493
  %v962 = vpop.f32.mrf.mxu0
  %v963 = vadd.f32 %v950, %v962
  %v964 = vpop.f32.mrf.mxu0
  %965 = vdwg.mxu0
  %966 = vmatpush.bf16.msra.mxu0 %v815
  %967 = vmatpush.bf16.msra.mxu0 %v814
  %968 = vmatpush.bf16.msra.mxu0 %v813
  %969 = vmatpush.bf16.msra.mxu0 %v812
  %970 = vmatpush.bf16.msra.mxu0 %v811
  %971 = vmatpush.bf16.msra.mxu0 %v810
  %972 = vmatpush.bf16.msra.mxu0 %v809
  %973 = vmatpush.bf16.msra.mxu0 %v808
  %974 = vmatmul.bf16.gmra.mxu0 %v494
  %v975 = vpop.f32.mrf.mxu0
  %v976 = vadd.f32 %v963, %v975
  %v977 = vpop.f32.mrf.mxu0
  %978 = vdwg.mxu0
  %979 = vmatpush.bf16.msra.mxu0 %v823
  %980 = vmatpush.bf16.msra.mxu0 %v822
  %981 = vmatpush.bf16.msra.mxu0 %v821
  %982 = vmatpush.bf16.msra.mxu0 %v820
  %983 = vmatpush.bf16.msra.mxu0 %v819
  %984 = vmatpush.bf16.msra.mxu0 %v818
  %985 = vmatpush.bf16.msra.mxu0 %v817
  %986 = vmatpush.bf16.msra.mxu0 %v816
  %987 = vmatmul.bf16.gmra.mxu0 %v495
  %v988 = vpop.f32.mrf.mxu0
  %v989 = vadd.f32 %v976, %v988
  %v990 = vpop.f32.mrf.mxu0
  %991 = vdwg.mxu0
  %992 = vst [vmem:[%s5] sm:$0xff] %v989
  // Predicated region
  $region18: #{discriminator_forward.5} parent=0 // pred_check
    _
  $region19: #{discriminator_forward.5} parent=0 // pred_check_branch
    %994 = sbr.rel (0) target = $region21
  $region20: #{discriminator_forward.5} parent=0 // pred_region
    _
  $region21: #{discriminator_forward.5} parent=0 // pred_fallthru
    _
  // Predicated region
  $region22: #{discriminator_forward.5} parent=0 // pred_check
    _
  $region23: #{discriminator_forward.5} parent=0 // pred_check_branch
    %996 = sbr.rel (0) target = $region25
  $region24: #{discriminator_forward.5} parent=0 // pred_region
    _
  $region25: #{discriminator_forward.5} parent=0 // pred_fallthru
    _
  // Predicated region
  $region26: #{discriminator_forward.5} parent=0 // pred_check
    _
  $region27: #{discriminator_forward.5} parent=0 // pred_check_branch
    %998 = sbr.rel (0) target = $region29
  $region28: #{discriminator_forward.5} parent=0 // pred_region
    _
  $region29: #{discriminator_forward.5} parent=0 // pred_fallthru
    _
  // Predicated region
  $region30: #{discriminator_forward.5} parent=0 // pred_check
    _
  $region31: #{discriminator_forward.5} parent=0 // pred_check_branch
    %1000 = sbr.rel (0) target = $region33
  $region32: #{discriminator_forward.5} parent=0 // pred_region
    _
  $region33: #{discriminator_forward.5} parent=0 // pred_fallthru
    _

</llo_original>
